<compile_context>
chip_gen: v6e
topology: v6e:2x2x1
jax: 0.10.0
libtpu: 0.0.40
codegen_flags: <defaults>
</compile_context>

<pallas_src>
import functools
import math

import jax
import jax.numpy as jnp
from jax.experimental import pallas as pl
from jax.experimental.pallas import tpu as pltpu

LANE = 128  # TPU lane width; output channels / head widths are padded to this.


def _round_up(v, m):
    return (v + m - 1) // m * m


# ----------------------------------------------------------------------------
# Pallas kernel: fused  out = act(x @ w + b), bf16 operands, f32 accumulate
# ----------------------------------------------------------------------------
def _fused_matmul_kernel(x_ref, w_ref, b_ref, o_ref, *, act):
    acc = jnp.dot(x_ref[...], w_ref[...], preferred_element_type=jnp.float32)
    acc = acc + b_ref[...]  # (1, N) f32 bias broadcasts over rows
    if act == "leaky_relu":
        acc = jnp.maximum(acc, 0.01 * acc)  # PyTorch default slope 0.01
    elif act == "relu":
        acc = jnp.maximum(acc, 0.0)
    o_ref[...] = acc.astype(o_ref.dtype)


def fused_linear(x, w, b, act="none", out_dtype=jnp.bfloat16, tm=512):
    """act(x @ w + b). x:(M,K) bf16, w:(K,N) bf16, b:(N,) f32. K,N % 128 == 0."""
    M, K = x.shape
    Kw, N = w.shape
    assert K == Kw
    assert K % LANE == 0 and N % LANE == 0, (K, N)

    tm = min(tm, M)  # tm == M (full dim) for small M; 512-row tiles otherwise
    grid = (pl.cdiv(M, tm),)
    kernel = functools.partial(_fused_matmul_kernel, act=act)

    flops = 2 * M * K * N
    bytes_accessed = int(M * K * x.dtype.itemsize + K * N * w.dtype.itemsize
                         + M * N * jnp.dtype(out_dtype).itemsize + N * 4)

    return pl.pallas_call(
        kernel,
        out_shape=jax.ShapeDtypeStruct((M, N), out_dtype),
        grid=grid,
        in_specs=[
            pl.BlockSpec((tm, K), lambda i: (i, 0)),   # stream row tiles
            pl.BlockSpec((K, N), lambda i: (0, 0)),    # weight resident
            pl.BlockSpec((1, N), lambda i: (0, 0)),    # bias resident
        ],
        out_specs=pl.BlockSpec((tm, N), lambda i: (i, 0)),
        compiler_params=pltpu.CompilerParams(
            dimension_semantics=("parallel",)),        # megacore on v7x
        cost_estimate=pl.CostEstimate(
            flops=flops, transcendentals=0, bytes_accessed=bytes_accessed),
    )(x, w, b.reshape(1, N))


# ----------------------------------------------------------------------------
# Conv layer: NHWC im2col glue (plain JAX) + fused Pallas matmul
#   patches K-axis ordering is (KH, KW, C), matching the prepared weight mats.
# ----------------------------------------------------------------------------
def conv2d_pallas(x_nhwc, w_mat, b, kh, kw, stride, act):
    n, h, w, c = x_nhwc.shape
    oh = (h - kh) // stride + 1
    ow = (w - kw) // stride + 1
    cols = []
    for i in range(kh):
        for j in range(kw):
            cols.append(x_nhwc[:, i:i + stride * oh:stride,
                               j:j + stride * ow:stride, :])
    patches = jnp.stack(cols, axis=3)                  # (N, OH, OW, KH*KW, C)
    patches = patches.reshape(n * oh * ow, kh * kw * c)
    y = fused_linear(patches, w_mat, b, act=act, out_dtype=jnp.bfloat16)
    return y.reshape(n, oh, ow, w_mat.shape[1])        # NHWC, channels padded


# ----------------------------------------------------------------------------
# Parameter init (deterministic, mirrors the PyTorch init recipe)
# ----------------------------------------------------------------------------
def _xavier_uniform(key, shape):
    fan_in = shape[1] * shape[2] * shape[3]
    fan_out = shape[0] * shape[2] * shape[3]
    bound = math.sqrt(6.0 / (fan_in + fan_out))
    return jax.random.uniform(key, shape, jnp.float32, -bound, bound)


def _kaiming_uniform_a1(key, shape):
    # kaiming_uniform_(w, a=1.0): gain = sqrt(2/(1+1)) = 1 -> bound = sqrt(3/fan_in)
    fan_in = shape[1]
    bound = math.sqrt(3.0 / fan_in)
    return jax.random.uniform(key, shape, jnp.float32, -bound, bound)


def conv_output_hw(input_shape):
    h, w = input_shape
    h1, w1 = (h - 8) // 4 + 1, (w - 8) // 4 + 1
    h2, w2 = (h1 - 4) // 2 + 1, (w1 - 4) // 2 + 1
    return h2 - 2, w2 - 2


def init_a2c_params(key, input_shape, n_action, n_history=4):
    ks = jax.random.split(key, 7)
    h3, w3 = conv_output_hw(input_shape)
    conv_out = 64 * h3 * w3
    return {
        "conv1_w": _xavier_uniform(ks[0], (32, n_history, 8, 8)),
        "conv1_b": jnp.zeros((32,), jnp.float32),
        "conv2_w": _xavier_uniform(ks[1], (64, 32, 4, 4)),
        "conv2_b": jnp.zeros((64,), jnp.float32),
        "conv3_w": _xavier_uniform(ks[2], (64, 64, 3, 3)),
        "conv3_b": jnp.zeros((64,), jnp.float32),
        "policy1_w": _kaiming_uniform_a1(ks[3], (512, conv_out)),
        "policy1_b": jnp.zeros((512,), jnp.float32),
        "policy2_w": _kaiming_uniform_a1(ks[4], (n_action, 512)),
        "policy2_b": jnp.zeros((n_action,), jnp.float32),
        "critic1_w": _kaiming_uniform_a1(ks[5], (512, conv_out)),
        "critic1_b": jnp.zeros((512,), jnp.float32),
        "critic2_w": _kaiming_uniform_a1(ks[6], (1, 512)),
        "critic2_b": jnp.zeros((1,), jnp.float32),
    }


# ----------------------------------------------------------------------------
# One-time conversion of PyTorch-layout params into kernel-friendly layouts:
# pre-transposed, channel-padded, head-fused, bf16.
# ----------------------------------------------------------------------------
def _conv_weight_mat(w, b, in_pad):
    out_ch, in_ch, kh, kw = w.shape
    wt = jnp.transpose(w, (2, 3, 1, 0))                # (kh, kw, in, out)
    if in_pad > in_ch:
        wt = jnp.pad(wt, ((0, 0), (0, 0), (0, in_pad - in_ch), (0, 0)))
    out_pad = _round_up(out_ch, LANE)
    if out_pad > out_ch:
        wt = jnp.pad(wt, ((0, 0), (0, 0), (0, 0), (0, out_pad - out_ch)))
        b = jnp.pad(b, (0, out_pad - out_ch))
    w_mat = wt.reshape(kh * kw * in_pad, out_pad).astype(jnp.bfloat16)
    return w_mat, b.astype(jnp.float32)


def prepare_kernel_params(params, input_shape, n_action, n_history=4):
    h3, w3 = conv_output_hw(input_shape)

    c1w, c1b = _conv_weight_mat(params["conv1_w"], params["conv1_b"], n_history)
    c2w, c2b = _conv_weight_mat(params["conv2_w"], params["conv2_b"], LANE)
    c3w, c3b = _conv_weight_mat(params["conv3_w"], params["conv3_b"], LANE)

    # Head 1: permute rows from the PyTorch NCHW flatten order (c, h, w) to our
    # NHWC channel-padded flatten order (h, w, c_pad); fuse policy & critic
    # branches along N -> one (K, 1024) matmul on the shared features.
    def head1_mat(wmat):
        w4 = wmat.reshape(512, 64, h3, w3)
        w4 = jnp.transpose(w4, (2, 3, 1, 0))           # (h3, w3, 64, 512)
        w4 = jnp.pad(w4, ((0, 0), (0, 0), (0, LANE - 64), (0, 0)))
        return w4.reshape(h3 * w3 * LANE, 512)

    head1_w = jnp.concatenate(
        [head1_mat(params["policy1_w"]), head1_mat(params["critic1_w"])],
        axis=1).astype(jnp.bfloat16)                   # (h3*w3*128, 1024)
    head1_b = jnp.concatenate(
        [params["policy1_b"], params["critic1_b"]]).astype(jnp.float32)

    # Head 2: block-diagonal so a single matmul on the fused hidden yields
    # [policy | value]; N padded to a full 128-lane slab (zero columns).
    n2 = n_action + 1
    n2_pad = _round_up(n2, LANE)
    head2_w = jnp.zeros((1024, n2_pad), jnp.float32)
    head2_w = head2_w.at[:512, :n_action].set(params["policy2_w"].T)
    head2_w = head2_w.at[512:, n_action:n2].set(params["critic2_w"].T)
    head2_b = jnp.zeros((n2_pad,), jnp.float32)
    head2_b = head2_b.at[:n_action].set(params["policy2_b"])
    head2_b = head2_b.at[n_action:n2].set(params["critic2_b"])

    return {
        "conv1_w": c1w, "conv1_b": c1b,
        "conv2_w": c2w, "conv2_b": c2b,
        "conv3_w": c3w, "conv3_b": c3b,
        "head1_w": head1_w, "head1_b": head1_b,
        "head2_w": head2_w.astype(jnp.bfloat16), "head2_b": head2_b,
    }


# ----------------------------------------------------------------------------
# Forward pass (matches A2CModel.forward)
# ----------------------------------------------------------------------------
def a2c_forward(kparams, states, n_action):
    n = states.shape[0]
    # One-time layout change to NHWC bf16; all conv activations stay NHWC.
    x = jnp.transpose(states, (0, 2, 3, 1)).astype(jnp.bfloat16)
    x = conv2d_pallas(x, kparams["conv1_w"], kparams["conv1_b"], 8, 8, 4, "leaky_relu")
    x = conv2d_pallas(x, kparams["conv2_w"], kparams["conv2_b"], 4, 4, 2, "leaky_relu")
    x = conv2d_pallas(x, kparams["conv3_w"], kparams["conv3_b"], 3, 3, 1, "leaky_relu")
    # NHWC channel-padded flatten; the NCHW-flatten semantics live in head1_w's
    # row permutation, so this matches the PyTorch Flatten + Linear exactly.
    h = x.reshape(n, -1)                               # (N, h3*w3*128) bf16
    hid = fused_linear(h, kparams["head1_w"], kparams["head1_b"],
                       act="relu", out_dtype=jnp.bfloat16)        # (N, 1024)
    out = fused_linear(hid, kparams["head2_w"], kparams["head2_b"],
                       act="none", out_dtype=jnp.float32)         # (N, 128)
    policy = out[:, :n_action]
    value = out[:, n_action:n_action + 1]
    return policy, value


if __name__ == "__main__":
    # Small shapes consistent with the module: batch=2, n_history=4 frames,
    # 40x40 frames -> conv output 64*1*1 = 64 features, n_action=4.
    key = jax.random.PRNGKey(0)
    k_params, k_states = jax.random.split(key)

    input_shape = (40, 40)
    n_action = 4
    n_history = 4
    batch = 2

    params = init_a2c_params(k_params, input_shape, n_action, n_history)
    kparams = prepare_kernel_params(params, input_shape, n_action, n_history)
    states = jax.random.normal(k_states, (batch, n_history, *input_shape), jnp.float32)

    fwd = jax.jit(functools.partial(a2c_forward, n_action=n_action))
    policy, value = fwd(kparams, states)
    jax.block_until_ready(policy)
    jax.block_until_ready(value)

    assert policy.shape == (batch, n_action), policy.shape
    assert value.shape == (batch, 1), value.shape
    assert bool(jnp.all(jnp.isfinite(policy))) and bool(jnp.all(jnp.isfinite(value)))
    print("KERNEL_OK")
</pallas_src>

<mosaic_0001>
module attributes {stable_mosaic.version = 11 : i64} {
  func.func @_fused_matmul_kernel(%arg0: i32, %arg1: memref<162x256xbf16, #tpu.memory_space<vmem>>, %arg2: memref<256x128xbf16, #tpu.memory_space<vmem>>, %arg3: memref<1x128xf32, #tpu.memory_space<vmem>>, %arg4: memref<162x128xbf16, #tpu.memory_space<vmem>>) attributes {dimension_semantics = [#tpu.dimension_semantics<parallel>], iteration_bounds = array<i64: 1>, scalar_prefetch = 0 : i64, scratch_operands = 0 : i64, tpu.core_type = #tpu.core_type<tc>, window_params = [{transform_indices = @transform_0, window_bounds = array<i64: 162, 256>}, {pipeline_mode = #tpu.pipeline_mode<synchronous>, transform_indices = @transform_1, window_bounds = array<i64: 256, 128>}, {pipeline_mode = #tpu.pipeline_mode<synchronous>, transform_indices = @transform_2, window_bounds = array<i64: 1, 128>}, {transform_indices = @transform_3, window_bounds = array<i64: 162, 128>}]} {
    %c0 = arith.constant 0 : index
    %c0_0 = arith.constant 0 : index
    %0 = vector.load %arg1[%c0, %c0_0] : memref<162x256xbf16, #tpu.memory_space<vmem>>, vector<162x256xbf16>
    %c0_1 = arith.constant 0 : index
    %c0_2 = arith.constant 0 : index
    %1 = vector.load %arg2[%c0_1, %c0_2] : memref<256x128xbf16, #tpu.memory_space<vmem>>, vector<256x128xbf16>
    %cst = arith.constant dense<0.000000e+00> : vector<162x128xf32>
    %2 = tpu.matmul %0, %1, %cst {dimension_numbers = #tpu.dot_dimension_numbers<[1], [0], [0], [1], [0, 0, 1, 1], [], []>} : vector<162x256xbf16>, vector<256x128xbf16>, vector<162x128xf32> -> vector<162x128xf32>
    %c0_3 = arith.constant 0 : index
    %c0_4 = arith.constant 0 : index
    %3 = vector.load %arg3[%c0_3, %c0_4] : memref<1x128xf32, #tpu.memory_space<vmem>>, vector<1x128xf32>
    %4 = vector.broadcast %3 : vector<1x128xf32> to vector<162x128xf32>
    %5 = arith.addf %2, %4 : vector<162x128xf32>
    %cst_5 = arith.constant 0.00999999977 : f32
    %6 = vector.broadcast %cst_5 : f32 to vector<162x128xf32>
    %7 = arith.mulf %6, %5 : vector<162x128xf32>
    %8 = arith.maximumf %5, %7 : vector<162x128xf32>
    %9 = arith.truncf %8 : vector<162x128xf32> to vector<162x128xbf16>
    %c0_6 = arith.constant 0 : index
    %c0_7 = arith.constant 0 : index
    %10 = vector.load %arg4[%c0_6, %c0_7] : memref<162x128xbf16, #tpu.memory_space<vmem>>, vector<162x128xbf16>
    tpu.vector_store %arg4[%c0_6, %c0_7], %9 {strides = array<i32>} : memref<162x128xbf16, #tpu.memory_space<vmem>>, vector<162x128xbf16>,
    return
  }
  func.func @transform_0(%arg0: i32) -> (i32, i32) {
    %c0_i32 = arith.constant 0 : i32
    %c0_i32_0 = arith.constant 0 : i32
    return %arg0, %c0_i32 : i32, i32
  }
  func.func @transform_1(%arg0: i32) -> (i32, i32) {
    %c0_i32 = arith.constant 0 : i32
    %c0_i32_0 = arith.constant 0 : i32
    %c0_i32_1 = arith.constant 0 : i32
    return %c0_i32, %c0_i32_0 : i32, i32
  }
  func.func @transform_2(%arg0: i32) -> (i32, i32) {
    %c0_i32 = arith.constant 0 : i32
    %c0_i32_0 = arith.constant 0 : i32
    %c0_i32_1 = arith.constant 0 : i32
    return %c0_i32, %c0_i32_0 : i32, i32
  }
  func.func @transform_3(%arg0: i32) -> (i32, i32) {
    %c0_i32 = arith.constant 0 : i32
    %c0_i32_0 = arith.constant 0 : i32
    return %arg0, %c0_i32 : i32, i32
  }
}

module attributes {stable_mosaic.version = 11 : i64} {
  func.func @_fused_matmul_kernel(%arg0: i32, %arg1: memref<18x2048xbf16, #tpu.memory_space<vmem>>, %arg2: memref<2048x128xbf16, #tpu.memory_space<vmem>>, %arg3: memref<1x128xf32, #tpu.memory_space<vmem>>, %arg4: memref<18x128xbf16, #tpu.memory_space<vmem>>) attributes {dimension_semantics = [#tpu.dimension_semantics<parallel>], iteration_bounds = array<i64: 1>, scalar_prefetch = 0 : i64, scratch_operands = 0 : i64, tpu.core_type = #tpu.core_type<tc>, window_params = [{transform_indices = @transform_0, window_bounds = array<i64: 18, 2048>}, {pipeline_mode = #tpu.pipeline_mode<synchronous>, transform_indices = @transform_1, window_bounds = array<i64: 2048, 128>}, {pipeline_mode = #tpu.pipeline_mode<synchronous>, transform_indices = @transform_2, window_bounds = array<i64: 1, 128>}, {transform_indices = @transform_3, window_bounds = array<i64: 18, 128>}]} {
    %c0 = arith.constant 0 : index
    %c0_0 = arith.constant 0 : index
    %0 = vector.load %arg1[%c0, %c0_0] : memref<18x2048xbf16, #tpu.memory_space<vmem>>, vector<18x2048xbf16>
    %c0_1 = arith.constant 0 : index
    %c0_2 = arith.constant 0 : index
    %1 = vector.load %arg2[%c0_1, %c0_2] : memref<2048x128xbf16, #tpu.memory_space<vmem>>, vector<2048x128xbf16>
    %cst = arith.constant dense<0.000000e+00> : vector<18x128xf32>
    %2 = tpu.matmul %0, %1, %cst {dimension_numbers = #tpu.dot_dimension_numbers<[1], [0], [0], [1], [0, 0, 1, 1], [], []>} : vector<18x2048xbf16>, vector<2048x128xbf16>, vector<18x128xf32> -> vector<18x128xf32>
    %c0_3 = arith.constant 0 : index
    %c0_4 = arith.constant 0 : index
    %3 = vector.load %arg3[%c0_3, %c0_4] : memref<1x128xf32, #tpu.memory_space<vmem>>, vector<1x128xf32>
    %4 = vector.broadcast %3 : vector<1x128xf32> to vector<18x128xf32>
    %5 = arith.addf %2, %4 : vector<18x128xf32>
    %cst_5 = arith.constant 0.00999999977 : f32
    %6 = vector.broadcast %cst_5 : f32 to vector<18x128xf32>
    %7 = arith.mulf %6, %5 : vector<18x128xf32>
    %8 = arith.maximumf %5, %7 : vector<18x128xf32>
    %9 = arith.truncf %8 : vector<18x128xf32> to vector<18x128xbf16>
    %c0_6 = arith.constant 0 : index
    %c0_7 = arith.constant 0 : index
    %10 = vector.load %arg4[%c0_6, %c0_7] : memref<18x128xbf16, #tpu.memory_space<vmem>>, vector<18x128xbf16>
    tpu.vector_store %arg4[%c0_6, %c0_7], %9 {strides = array<i32>} : memref<18x128xbf16, #tpu.memory_space<vmem>>, vector<18x128xbf16>,
    return
  }
  func.func @transform_0(%arg0: i32) -> (i32, i32) {
    %c0_i32 = arith.constant 0 : i32
    %c0_i32_0 = arith.constant 0 : i32
    return %arg0, %c0_i32 : i32, i32
  }
  func.func @transform_1(%arg0: i32) -> (i32, i32) {
    %c0_i32 = arith.constant 0 : i32
    %c0_i32_0 = arith.constant 0 : i32
    %c0_i32_1 = arith.constant 0 : i32
    return %c0_i32, %c0_i32_0 : i32, i32
  }
  func.func @transform_2(%arg0: i32) -> (i32, i32) {
    %c0_i32 = arith.constant 0 : i32
    %c0_i32_0 = arith.constant 0 : i32
    %c0_i32_1 = arith.constant 0 : i32
    return %c0_i32, %c0_i32_0 : i32, i32
  }
  func.func @transform_3(%arg0: i32) -> (i32, i32) {
    %c0_i32 = arith.constant 0 : i32
    %c0_i32_0 = arith.constant 0 : i32
    return %arg0, %c0_i32 : i32, i32
  }
}

module attributes {stable_mosaic.version = 11 : i64} {
  func.func @_fused_matmul_kernel(%arg0: i32, %arg1: memref<2x128xbf16, #tpu.memory_space<vmem>>, %arg2: memref<128x1024xbf16, #tpu.memory_space<vmem>>, %arg3: memref<1x1024xf32, #tpu.memory_space<vmem>>, %arg4: memref<2x1024xbf16, #tpu.memory_space<vmem>>) attributes {dimension_semantics = [#tpu.dimension_semantics<parallel>], iteration_bounds = array<i64: 1>, scalar_prefetch = 0 : i64, scratch_operands = 0 : i64, tpu.core_type = #tpu.core_type<tc>, window_params = [{transform_indices = @transform_0, window_bounds = array<i64: 2, 128>}, {pipeline_mode = #tpu.pipeline_mode<synchronous>, transform_indices = @transform_1, window_bounds = array<i64: 128, 1024>}, {pipeline_mode = #tpu.pipeline_mode<synchronous>, transform_indices = @transform_2, window_bounds = array<i64: 1, 1024>}, {transform_indices = @transform_3, window_bounds = array<i64: 2, 1024>}]} {
    %c0 = arith.constant 0 : index
    %c0_0 = arith.constant 0 : index
    %0 = vector.load %arg1[%c0, %c0_0] : memref<2x128xbf16, #tpu.memory_space<vmem>>, vector<2x128xbf16>
    %c0_1 = arith.constant 0 : index
    %c0_2 = arith.constant 0 : index
    %1 = vector.load %arg2[%c0_1, %c0_2] : memref<128x1024xbf16, #tpu.memory_space<vmem>>, vector<128x1024xbf16>
    %cst = arith.constant dense<0.000000e+00> : vector<2x1024xf32>
    %2 = tpu.matmul %0, %1, %cst {dimension_numbers = #tpu.dot_dimension_numbers<[1], [0], [0], [1], [0, 0, 1, 1], [], []>} : vector<2x128xbf16>, vector<128x1024xbf16>, vector<2x1024xf32> -> vector<2x1024xf32>
    %c0_3 = arith.constant 0 : index
    %c0_4 = arith.constant 0 : index
    %3 = vector.load %arg3[%c0_3, %c0_4] : memref<1x1024xf32, #tpu.memory_space<vmem>>, vector<1x1024xf32>
    %4 = vector.broadcast %3 : vector<1x1024xf32> to vector<2x1024xf32>
    %5 = arith.addf %2, %4 : vector<2x1024xf32>
    %cst_5 = arith.constant 0.000000e+00 : f32
    %6 = vector.broadcast %cst_5 : f32 to vector<2x1024xf32>
    %7 = arith.maximumf %5, %6 : vector<2x1024xf32>
    %8 = arith.truncf %7 : vector<2x1024xf32> to vector<2x1024xbf16>
    %c0_6 = arith.constant 0 : index
    %c0_7 = arith.constant 0 : index
    %9 = vector.load %arg4[%c0_6, %c0_7] : memref<2x1024xbf16, #tpu.memory_space<vmem>>, vector<2x1024xbf16>
    tpu.vector_store %arg4[%c0_6, %c0_7], %8 {strides = array<i32>} : memref<2x1024xbf16, #tpu.memory_space<vmem>>, vector<2x1024xbf16>,
    return
  }
  func.func @transform_0(%arg0: i32) -> (i32, i32) {
    %c0_i32 = arith.constant 0 : i32
    %c0_i32_0 = arith.constant 0 : i32
    return %arg0, %c0_i32 : i32, i32
  }
  func.func @transform_1(%arg0: i32) -> (i32, i32) {
    %c0_i32 = arith.constant 0 : i32
    %c0_i32_0 = arith.constant 0 : i32
    %c0_i32_1 = arith.constant 0 : i32
    return %c0_i32, %c0_i32_0 : i32, i32
  }
  func.func @transform_2(%arg0: i32) -> (i32, i32) {
    %c0_i32 = arith.constant 0 : i32
    %c0_i32_0 = arith.constant 0 : i32
    %c0_i32_1 = arith.constant 0 : i32
    return %c0_i32, %c0_i32_0 : i32, i32
  }
  func.func @transform_3(%arg0: i32) -> (i32, i32) {
    %c0_i32 = arith.constant 0 : i32
    %c0_i32_0 = arith.constant 0 : i32
    return %arg0, %c0_i32 : i32, i32
  }
}

module attributes {stable_mosaic.version = 11 : i64} {
  func.func @_fused_matmul_kernel(%arg0: i32, %arg1: memref<2x1152xbf16, #tpu.memory_space<vmem>>, %arg2: memref<1152x128xbf16, #tpu.memory_space<vmem>>, %arg3: memref<1x128xf32, #tpu.memory_space<vmem>>, %arg4: memref<2x128xbf16, #tpu.memory_space<vmem>>) attributes {dimension_semantics = [#tpu.dimension_semantics<parallel>], iteration_bounds = array<i64: 1>, scalar_prefetch = 0 : i64, scratch_operands = 0 : i64, tpu.core_type = #tpu.core_type<tc>, window_params = [{transform_indices = @transform_0, window_bounds = array<i64: 2, 1152>}, {pipeline_mode = #tpu.pipeline_mode<synchronous>, transform_indices = @transform_1, window_bounds = array<i64: 1152, 128>}, {pipeline_mode = #tpu.pipeline_mode<synchronous>, transform_indices = @transform_2, window_bounds = array<i64: 1, 128>}, {transform_indices = @transform_3, window_bounds = array<i64: 2, 128>}]} {
    %c0 = arith.constant 0 : index
    %c0_0 = arith.constant 0 : index
    %0 = vector.load %arg1[%c0, %c0_0] : memref<2x1152xbf16, #tpu.memory_space<vmem>>, vector<2x1152xbf16>
    %c0_1 = arith.constant 0 : index
    %c0_2 = arith.constant 0 : index
    %1 = vector.load %arg2[%c0_1, %c0_2] : memref<1152x128xbf16, #tpu.memory_space<vmem>>, vector<1152x128xbf16>
    %cst = arith.constant dense<0.000000e+00> : vector<2x128xf32>
    %2 = tpu.matmul %0, %1, %cst {dimension_numbers = #tpu.dot_dimension_numbers<[1], [0], [0], [1], [0, 0, 1, 1], [], []>} : vector<2x1152xbf16>, vector<1152x128xbf16>, vector<2x128xf32> -> vector<2x128xf32>
    %c0_3 = arith.constant 0 : index
    %c0_4 = arith.constant 0 : index
    %3 = vector.load %arg3[%c0_3, %c0_4] : memref<1x128xf32, #tpu.memory_space<vmem>>, vector<1x128xf32>
    %4 = vector.broadcast %3 : vector<1x128xf32> to vector<2x128xf32>
    %5 = arith.addf %2, %4 : vector<2x128xf32>
    %cst_5 = arith.constant 0.00999999977 : f32
    %6 = vector.broadcast %cst_5 : f32 to vector<2x128xf32>
    %7 = arith.mulf %6, %5 : vector<2x128xf32>
    %8 = arith.maximumf %5, %7 : vector<2x128xf32>
    %9 = arith.truncf %8 : vector<2x128xf32> to vector<2x128xbf16>
    %c0_6 = arith.constant 0 : index
    %c0_7 = arith.constant 0 : index
    %10 = vector.load %arg4[%c0_6, %c0_7] : memref<2x128xbf16, #tpu.memory_space<vmem>>, vector<2x128xbf16>
    tpu.vector_store %arg4[%c0_6, %c0_7], %9 {strides = array<i32>} : memref<2x128xbf16, #tpu.memory_space<vmem>>, vector<2x128xbf16>,
    return
  }
  func.func @transform_0(%arg0: i32) -> (i32, i32) {
    %c0_i32 = arith.constant 0 : i32
    %c0_i32_0 = arith.constant 0 : i32
    return %arg0, %c0_i32 : i32, i32
  }
  func.func @transform_1(%arg0: i32) -> (i32, i32) {
    %c0_i32 = arith.constant 0 : i32
    %c0_i32_0 = arith.constant 0 : i32
    %c0_i32_1 = arith.constant 0 : i32
    return %c0_i32, %c0_i32_0 : i32, i32
  }
  func.func @transform_2(%arg0: i32) -> (i32, i32) {
    %c0_i32 = arith.constant 0 : i32
    %c0_i32_0 = arith.constant 0 : i32
    %c0_i32_1 = arith.constant 0 : i32
    return %c0_i32, %c0_i32_0 : i32, i32
  }
  func.func @transform_3(%arg0: i32) -> (i32, i32) {
    %c0_i32 = arith.constant 0 : i32
    %c0_i32_0 = arith.constant 0 : i32
    return %arg0, %c0_i32 : i32, i32
  }
}

module attributes {stable_mosaic.version = 11 : i64} {
  func.func @_fused_matmul_kernel(%arg0: i32, %arg1: memref<2x1024xbf16, #tpu.memory_space<vmem>>, %arg2: memref<1024x128xbf16, #tpu.memory_space<vmem>>, %arg3: memref<1x128xf32, #tpu.memory_space<vmem>>, %arg4: memref<2x128xf32, #tpu.memory_space<vmem>>) attributes {dimension_semantics = [#tpu.dimension_semantics<parallel>], iteration_bounds = array<i64: 1>, scalar_prefetch = 0 : i64, scratch_operands = 0 : i64, tpu.core_type = #tpu.core_type<tc>, window_params = [{transform_indices = @transform_0, window_bounds = array<i64: 2, 1024>}, {pipeline_mode = #tpu.pipeline_mode<synchronous>, transform_indices = @transform_1, window_bounds = array<i64: 1024, 128>}, {pipeline_mode = #tpu.pipeline_mode<synchronous>, transform_indices = @transform_2, window_bounds = array<i64: 1, 128>}, {transform_indices = @transform_3, window_bounds = array<i64: 2, 128>}]} {
    %c0 = arith.constant 0 : index
    %c0_0 = arith.constant 0 : index
    %0 = vector.load %arg1[%c0, %c0_0] : memref<2x1024xbf16, #tpu.memory_space<vmem>>, vector<2x1024xbf16>
    %c0_1 = arith.constant 0 : index
    %c0_2 = arith.constant 0 : index
    %1 = vector.load %arg2[%c0_1, %c0_2] : memref<1024x128xbf16, #tpu.memory_space<vmem>>, vector<1024x128xbf16>
    %cst = arith.constant dense<0.000000e+00> : vector<2x128xf32>
    %2 = tpu.matmul %0, %1, %cst {dimension_numbers = #tpu.dot_dimension_numbers<[1], [0], [0], [1], [0, 0, 1, 1], [], []>} : vector<2x1024xbf16>, vector<1024x128xbf16>, vector<2x128xf32> -> vector<2x128xf32>
    %c0_3 = arith.constant 0 : index
    %c0_4 = arith.constant 0 : index
    %3 = vector.load %arg3[%c0_3, %c0_4] : memref<1x128xf32, #tpu.memory_space<vmem>>, vector<1x128xf32>
    %4 = vector.broadcast %3 : vector<1x128xf32> to vector<2x128xf32>
    %5 = arith.addf %2, %4 : vector<2x128xf32>
    %c0_5 = arith.constant 0 : index
    %c0_6 = arith.constant 0 : index
    %6 = vector.load %arg4[%c0_5, %c0_6] : memref<2x128xf32, #tpu.memory_space<vmem>>, vector<2x128xf32>
    tpu.vector_store %arg4[%c0_5, %c0_6], %5 {strides = array<i32>} : memref<2x128xf32, #tpu.memory_space<vmem>>, vector<2x128xf32>,
    return
  }
  func.func @transform_0(%arg0: i32) -> (i32, i32) {
    %c0_i32 = arith.constant 0 : i32
    %c0_i32_0 = arith.constant 0 : i32
    return %arg0, %c0_i32 : i32, i32
  }
  func.func @transform_1(%arg0: i32) -> (i32, i32) {
    %c0_i32 = arith.constant 0 : i32
    %c0_i32_0 = arith.constant 0 : i32
    %c0_i32_1 = arith.constant 0 : i32
    return %c0_i32, %c0_i32_0 : i32, i32
  }
  func.func @transform_2(%arg0: i32) -> (i32, i32) {
    %c0_i32 = arith.constant 0 : i32
    %c0_i32_0 = arith.constant 0 : i32
    %c0_i32_1 = arith.constant 0 : i32
    return %c0_i32, %c0_i32_0 : i32, i32
  }
  func.func @transform_3(%arg0: i32) -> (i32, i32) {
    %c0_i32 = arith.constant 0 : i32
    %c0_i32_0 = arith.constant 0 : i32
    return %arg0, %c0_i32 : i32, i32
  }
}

</mosaic_0001>

<llo_original>
// kernel: a2c_forward.5
$region0: #{a2c_forward.5}
  #allocation0 [shape = 'u32[]', space=smem, size = 0x4, offset = 0x4, fixed_abs, tag = 'smem constant byte address 0x4 - core index']
  #allocation1 [shape = 'u32[144,128]{1,0:T(1,128)}', space=vmem, size = 0x12000, scoped, tag = 'internal scratch']
  %s0 = inlined_call_operand.vmem [shape: bf16[162,256], index: 0, kind: input, shape index: {}]
  %s1 = inlined_call_operand.vmem [shape: bf16[256,128], index: 1, kind: input, shape index: {}]
  %s2 = inlined_call_operand.vmem [shape: f32[1,128], index: 2, kind: input, shape index: {}]
  %s3 = inlined_call_operand.vmem [shape: bf16[162,128], index: 3, kind: output, shape index: {}]
  %s4 = sld [smem:[#allocation0]]
  $region22: #{a2c_forward.5} parent=0
    _
  %s6 = ssub.s32 1, %s4
  %s7 = scalar_select 0, %s6, %s4
  // Predicated region
  $region2: #{a2c_forward.5} parent=0 // pred_check
    _
  $region3: #{a2c_forward.5} parent=0 // pred_check_branch
    %9 = sbr.rel (0) target = $region5
  $region4: #{a2c_forward.5} parent=0 // pred_region
    _
  $region5: #{a2c_forward.5} parent=0 // pred_fallthru
    _
  // Predicated region
  $region6: #{a2c_forward.5} parent=0 // pred_check
    _
  $region7: #{a2c_forward.5} parent=0 // pred_check_branch
    %11 = sbr.rel (0) target = $region9
  $region8: #{a2c_forward.5} parent=0 // pred_region
    _
  $region9: #{a2c_forward.5} parent=0 // pred_fallthru
    _
  // Predicated region
  $region10: #{a2c_forward.5} parent=0 // pred_check
    _
  $region11: #{a2c_forward.5} parent=0 // pred_check_branch
    %13 = sbr.rel (0) target = $region13
  $region12: #{a2c_forward.5} parent=0 // pred_region
    _
  $region13: #{a2c_forward.5} parent=0 // pred_fallthru
    _
  %v15 = vld [vmem:[%s0] sm:$0xff]
  %v16 = vld [vmem:[%s0 + $0x8] sm:$0xff]
  %v17 = vld [vmem:[%s0 + $0x10] sm:$0xff]
  %v18 = vld [vmem:[%s0 + $0x18] sm:$0xff]
  %v19 = vld [vmem:[%s0 + $0x20] sm:$0xff]
  %v20 = vld [vmem:[%s0 + $0x28] sm:$0xff]
  %v21 = vld [vmem:[%s0 + $0x30] sm:$0xff]
  %v22 = vld [vmem:[%s0 + $0x38] sm:$0xff]
  %v23 = vld [vmem:[%s0 + $0x40] sm:$0xff]
  %v24 = vld [vmem:[%s0 + $0x48] sm:$0xff]
  %v25 = vld [vmem:[%s0 + $0x50] sm:$0xff]
  %v26 = vld [vmem:[%s0 + $0x58] sm:$0xff]
  %v27 = vld [vmem:[%s0 + $0x60] sm:$0xff]
  %v28 = vld [vmem:[%s0 + $0x68] sm:$0xff]
  %v29 = vld [vmem:[%s0 + $0x70] sm:$0xff]
  %v30 = vld [vmem:[%s0 + $0x78] sm:$0xff]
  %v31 = vld [vmem:[%s0 + $0x80] sm:$0xff]
  %v32 = vld [vmem:[%s0 + $0x88] sm:$0xff]
  %v33 = vld [vmem:[%s0 + $0x90] sm:$0xff]
  %v34 = vld [vmem:[%s0 + $0x98] sm:$0xff]
  %v35 = vld [vmem:[%s0 + $0xa0] sm:$0x11]
  %v36 = vld [vmem:[%s1] sm:$0xf]
  %v37 = vld [vmem:[%s1 + $0x4] sm:$0xf]
  %v38 = vld [vmem:[%s1 + $0x8] sm:$0xf]
  %v39 = vld [vmem:[%s1 + $0xc] sm:$0xf]
  %v40 = vld [vmem:[%s1 + $0x10] sm:$0xf]
  %v41 = vld [vmem:[%s1 + $0x14] sm:$0xf]
  %v42 = vld [vmem:[%s1 + $0x18] sm:$0xf]
  %v43 = vld [vmem:[%s1 + $0x1c] sm:$0xf]
  %v44 = vld [vmem:[%s1 + $0x20] sm:$0xf]
  %v45 = vld [vmem:[%s1 + $0x24] sm:$0xf]
  %v46 = vld [vmem:[%s1 + $0x28] sm:$0xf]
  %v47 = vld [vmem:[%s1 + $0x2c] sm:$0xf]
  %v48 = vld [vmem:[%s1 + $0x30] sm:$0xf]
  %v49 = vld [vmem:[%s1 + $0x34] sm:$0xf]
  %v50 = vld [vmem:[%s1 + $0x38] sm:$0xf]
  %v51 = vld [vmem:[%s1 + $0x3c] sm:$0xf]
  %v52 = vld [vmem:[%s1 + $0x40] sm:$0xf]
  %v53 = vld [vmem:[%s1 + $0x44] sm:$0xf]
  %v54 = vld [vmem:[%s1 + $0x48] sm:$0xf]
  %v55 = vld [vmem:[%s1 + $0x4c] sm:$0xf]
  %v56 = vld [vmem:[%s1 + $0x50] sm:$0xf]
  %v57 = vld [vmem:[%s1 + $0x54] sm:$0xf]
  %v58 = vld [vmem:[%s1 + $0x58] sm:$0xf]
  %v59 = vld [vmem:[%s1 + $0x5c] sm:$0xf]
  %v60 = vld [vmem:[%s1 + $0x60] sm:$0xf]
  %v61 = vld [vmem:[%s1 + $0x64] sm:$0xf]
  %v62 = vld [vmem:[%s1 + $0x68] sm:$0xf]
  %v63 = vld [vmem:[%s1 + $0x6c] sm:$0xf]
  %v64 = vld [vmem:[%s1 + $0x70] sm:$0xf]
  %v65 = vld [vmem:[%s1 + $0x74] sm:$0xf]
  %v66 = vld [vmem:[%s1 + $0x78] sm:$0xf]
  %v67 = vld [vmem:[%s1 + $0x7c] sm:$0xf]
  %v68 = vld [vmem:[%s2] sm:$0x1]
  %v70 = vlaneseq
  %v71 = vshrl.u32 %v70, 7
  %v72 = vsub.s32 0, %v71
  %v73 = vrot.slane %v68, %v72
  %v96 = vunpack.c.l.b16 %v15
  %v97 = vunpack.c.h.b16 %v15
  %v98 = vunpack.c.l.b16 %v16
  %v99 = vunpack.c.h.b16 %v16
  %v100 = vunpack.c.l.b16 %v17
  %v101 = vunpack.c.h.b16 %v17
  %v102 = vunpack.c.l.b16 %v18
  %v103 = vunpack.c.h.b16 %v18
  %v104 = vunpack.c.l.b16 %v19
  %v105 = vunpack.c.h.b16 %v19
  %v106 = vunpack.c.l.b16 %v20
  %v107 = vunpack.c.h.b16 %v20
  %v108 = vunpack.c.l.b16 %v21
  %v109 = vunpack.c.h.b16 %v21
  %v110 = vunpack.c.l.b16 %v22
  %v111 = vunpack.c.h.b16 %v22
  %v112 = vunpack.c.l.b16 %v23
  %v113 = vunpack.c.h.b16 %v23
  %v114 = vunpack.c.l.b16 %v24
  %v115 = vunpack.c.h.b16 %v24
  %v116 = vunpack.c.l.b16 %v25
  %v117 = vunpack.c.h.b16 %v25
  %v118 = vunpack.c.l.b16 %v26
  %v119 = vunpack.c.h.b16 %v26
  %v120 = vunpack.c.l.b16 %v27
  %v121 = vunpack.c.h.b16 %v27
  %v122 = vunpack.c.l.b16 %v28
  %v123 = vunpack.c.h.b16 %v28
  %v124 = vunpack.c.l.b16 %v29
  %v125 = vunpack.c.h.b16 %v29
  %v126 = vunpack.c.l.b16 %v30
  %v127 = vunpack.c.h.b16 %v30
  %v128 = vunpack.c.l.b16 %v31
  %v129 = vunpack.c.h.b16 %v31
  %v130 = vunpack.c.l.b16 %v32
  %v131 = vunpack.c.h.b16 %v32
  %v132 = vunpack.c.l.b16 %v33
  %v133 = vunpack.c.h.b16 %v33
  %v134 = vunpack.c.l.b16 %v34
  %v135 = vunpack.c.h.b16 %v34
  %v136 = vunpack.c.l.b16 %v35
  %v137 = vunpack.c.h.b16 %v35
  %v138 = vpack.c.b16 %v98, %v96
  %v139 = vpack.c.b16 %v99, %v97
  %v140 = vpack.c.b16 %v102, %v100
  %v141 = vpack.c.b16 %v103, %v101
  %v142 = vpack.c.b16 %v106, %v104
  %v143 = vpack.c.b16 %v107, %v105
  %v144 = vpack.c.b16 %v110, %v108
  %v145 = vpack.c.b16 %v111, %v109
  %v146 = vpack.c.b16 %v114, %v112
  %v147 = vpack.c.b16 %v115, %v113
  %v148 = vpack.c.b16 %v118, %v116
  %v149 = vpack.c.b16 %v119, %v117
  %v150 = vpack.c.b16 %v122, %v120
  %v151 = vpack.c.b16 %v123, %v121
  %v152 = vpack.c.b16 %v126, %v124
  %v153 = vpack.c.b16 %v127, %v125
  %v154 = vpack.c.b16 %v130, %v128
  %v155 = vpack.c.b16 %v131, %v129
  %v156 = vpack.c.b16 %v134, %v132
  %v157 = vpack.c.b16 %v135, %v133
  %v158 = vpack.c.b16 %v136, %v136
  %v159 = vpack.c.b16 %v137, %v137
  %v214 = vunpack.c.l.b16 %v36
  %v215 = vunpack.c.l.b16 %v37
  %v216 = vunpack.c.l.b16 %v38
  %v217 = vunpack.c.l.b16 %v39
  %v218 = vunpack.c.l.b16 %v40
  %v219 = vunpack.c.l.b16 %v41
  %v220 = vunpack.c.l.b16 %v42
  %v221 = vunpack.c.l.b16 %v43
  %v222 = vunpack.c.l.b16 %v44
  %v223 = vunpack.c.l.b16 %v45
  %v224 = vunpack.c.l.b16 %v46
  %v225 = vunpack.c.l.b16 %v47
  %v226 = vunpack.c.l.b16 %v48
  %v227 = vunpack.c.l.b16 %v49
  %v228 = vunpack.c.l.b16 %v50
  %v229 = vunpack.c.l.b16 %v51
  %v230 = vunpack.c.l.b16 %v52
  %v231 = vunpack.c.l.b16 %v53
  %v232 = vunpack.c.l.b16 %v54
  %v233 = vunpack.c.l.b16 %v55
  %v234 = vunpack.c.l.b16 %v56
  %v235 = vunpack.c.l.b16 %v57
  %v236 = vunpack.c.l.b16 %v58
  %v237 = vunpack.c.l.b16 %v59
  %v238 = vunpack.c.l.b16 %v60
  %v239 = vunpack.c.l.b16 %v61
  %v240 = vunpack.c.l.b16 %v62
  %v241 = vunpack.c.l.b16 %v63
  %v242 = vunpack.c.l.b16 %v64
  %v243 = vunpack.c.l.b16 %v65
  %v244 = vunpack.c.l.b16 %v66
  %v245 = vunpack.c.l.b16 %v67
  %v246 = vpack.c.b16 %v215, %v214
  %v247 = vpack.c.b16 %v217, %v216
  %v248 = vpack.c.b16 %v219, %v218
  %v249 = vpack.c.b16 %v221, %v220
  %v250 = vpack.c.b16 %v223, %v222
  %v251 = vpack.c.b16 %v225, %v224
  %v252 = vpack.c.b16 %v227, %v226
  %v253 = vpack.c.b16 %v229, %v228
  %v254 = vpack.c.b16 %v231, %v230
  %v255 = vpack.c.b16 %v233, %v232
  %v256 = vpack.c.b16 %v235, %v234
  %v257 = vpack.c.b16 %v237, %v236
  %v258 = vpack.c.b16 %v239, %v238
  %v259 = vpack.c.b16 %v241, %v240
  %v260 = vpack.c.b16 %v243, %v242
  %v261 = vpack.c.b16 %v245, %v244
  %278 = vmatprep.subr.bf16.mxu0 0
  %279 = vmatpush1.bf16.msra.mxu0 %v253
  %280 = vmatprep.subr.bf16.mxu0 0
  %281 = vmatpush1.bf16.msra.mxu0 %v252
  %282 = vmatprep.subr.bf16.mxu0 0
  %283 = vmatpush1.bf16.msra.mxu0 %v251
  %284 = vmatprep.subr.bf16.mxu0 0
  %285 = vmatpush1.bf16.msra.mxu0 %v250
  %286 = vmatprep.subr.bf16.mxu0 0
  %287 = vmatpush1.bf16.msra.mxu0 %v249
  %288 = vmatprep.subr.bf16.mxu0 0
  %289 = vmatpush1.bf16.msra.mxu0 %v248
  %290 = vmatprep.subr.bf16.mxu0 0
  %291 = vmatpush1.bf16.msra.mxu0 %v247
  %292 = vmatprep.subr.bf16.mxu0 0
  %293 = vmatpush1.bf16.msra.mxu0 %v246
  %294 = vmatprep.subr.bf16.mxu0 0
  %295 = vmatpush2.bf16.msra.mxu0 %v261
  %296 = vmatprep.subr.bf16.mxu0 0
  %297 = vmatpush2.bf16.msra.mxu0 %v260
  %298 = vmatprep.subr.bf16.mxu0 0
  %299 = vmatpush2.bf16.msra.mxu0 %v259
  %300 = vmatprep.subr.bf16.mxu0 0
  %301 = vmatpush2.bf16.msra.mxu0 %v258
  %302 = vmatprep.subr.bf16.mxu0 0
  %303 = vmatpush2.bf16.msra.mxu0 %v257
  %304 = vmatprep.subr.bf16.mxu0 0
  %305 = vmatpush2.bf16.msra.mxu0 %v256
  %306 = vmatprep.subr.bf16.mxu0 0
  %307 = vmatpush2.bf16.msra.mxu0 %v255
  %308 = vmatprep.subr.bf16.mxu0 0
  %309 = vmatpush2.bf16.msra.mxu0 %v254
  %310 = vmatprep.mubr.bf16.mxu0 %v139
  %311 = vmatmul.mubr.bf16.gmra.mxu0 %v138
  %v312 = vpop.f32.mrf.mxu0
  %v313 = vadd.f32 %v73, %v312
  %v314 = vpop.f32.mrf.mxu0
  %v315 = vpop.f32.mrf.mxu0
  %v316 = vadd.f32 %v73, %v315
  %v317 = vpop.f32.mrf.mxu0
  %318 = vmatprep.mubr.bf16.mxu0 %v141
  %319 = vmatmul.mubr.bf16.gmra.mxu0 %v140
  %v320 = vpop.f32.mrf.mxu0
  %v321 = vadd.f32 %v73, %v320
  %v322 = vpop.f32.mrf.mxu0
  %v323 = vpop.f32.mrf.mxu0
  %v324 = vadd.f32 %v73, %v323
  %v325 = vpop.f32.mrf.mxu0
  %326 = vmatprep.mubr.bf16.mxu0 %v143
  %327 = vmatmul.mubr.bf16.gmra.mxu0 %v142
  %v328 = vpop.f32.mrf.mxu0
  %v329 = vadd.f32 %v73, %v328
  %v330 = vpop.f32.mrf.mxu0
  %v331 = vpop.f32.mrf.mxu0
  %v332 = vadd.f32 %v73, %v331
  %v333 = vpop.f32.mrf.mxu0
  %334 = vmatprep.mubr.bf16.mxu0 %v145
  %335 = vmatmul.mubr.bf16.gmra.mxu0 %v144
  %v336 = vpop.f32.mrf.mxu0
  %v337 = vadd.f32 %v73, %v336
  %v338 = vpop.f32.mrf.mxu0
  %v339 = vpop.f32.mrf.mxu0
  %v340 = vadd.f32 %v73, %v339
  %v341 = vpop.f32.mrf.mxu0
  %342 = vmatprep.mubr.bf16.mxu0 %v147
  %343 = vmatmul.mubr.bf16.gmra.mxu0 %v146
  %v344 = vpop.f32.mrf.mxu0
  %v345 = vadd.f32 %v73, %v344
  %v346 = vpop.f32.mrf.mxu0
  %v347 = vpop.f32.mrf.mxu0
  %v348 = vadd.f32 %v73, %v347
  %v349 = vpop.f32.mrf.mxu0
  %350 = vmatprep.mubr.bf16.mxu0 %v149
  %351 = vmatmul.mubr.bf16.gmra.mxu0 %v148
  %v352 = vpop.f32.mrf.mxu0
  %v353 = vadd.f32 %v73, %v352
  %v354 = vpop.f32.mrf.mxu0
  %v355 = vpop.f32.mrf.mxu0
  %v356 = vadd.f32 %v73, %v355
  %v357 = vpop.f32.mrf.mxu0
  %358 = vmatprep.mubr.bf16.mxu0 %v151
  %359 = vmatmul.mubr.bf16.gmra.mxu0 %v150
  %v360 = vpop.f32.mrf.mxu0
  %v361 = vadd.f32 %v73, %v360
  %v362 = vpop.f32.mrf.mxu0
  %v363 = vpop.f32.mrf.mxu0
  %v364 = vadd.f32 %v73, %v363
  %v365 = vpop.f32.mrf.mxu0
  %366 = vmatprep.mubr.bf16.mxu0 %v153
  %367 = vmatmul.mubr.bf16.gmra.mxu0 %v152
  %v368 = vpop.f32.mrf.mxu0
  %v369 = vadd.f32 %v73, %v368
  %v370 = vpop.f32.mrf.mxu0
  %v371 = vpop.f32.mrf.mxu0
  %v372 = vadd.f32 %v73, %v371
  %v373 = vpop.f32.mrf.mxu0
  %374 = vmatprep.mubr.bf16.mxu0 %v155
  %375 = vmatmul.mubr.bf16.gmra.mxu0 %v154
  %v376 = vpop.f32.mrf.mxu0
  %v377 = vadd.f32 %v73, %v376
  %v378 = vpop.f32.mrf.mxu0
  %v379 = vpop.f32.mrf.mxu0
  %v380 = vadd.f32 %v73, %v379
  %v381 = vpop.f32.mrf.mxu0
  %382 = vmatprep.mubr.bf16.mxu0 %v157
  %383 = vmatmul.mubr.bf16.gmra.mxu0 %v156
  %v384 = vpop.f32.mrf.mxu0
  %v385 = vadd.f32 %v73, %v384
  %v386 = vpop.f32.mrf.mxu0
  %v387 = vpop.f32.mrf.mxu0
  %v388 = vadd.f32 %v73, %v387
  %v389 = vpop.f32.mrf.mxu0
  %390 = vmatprep.mubr.bf16.mxu0 %v159
  %391 = vmatmul.mubr.bf16.gmra.mxu0 %v158
  %v392 = vpop.f32.mrf.mxu0
  %v393 = vadd.f32 %v73, %v392
  %v394 = vpop.f32.mrf.mxu0
  %v395 = vpop.f32.mrf.mxu0
  %v396 = vpop.f32.mrf.mxu0
  %397 = vdwg.mxu0
  %v398 = vmul.f32 %v313, 0.01
  %v399 = vmul.f32 %v316, 0.01
  %v400 = vmul.f32 %v321, 0.01
  %v401 = vmul.f32 %v324, 0.01
  %v402 = vmul.f32 %v329, 0.01
  %v403 = vmul.f32 %v332, 0.01
  %v404 = vmul.f32 %v337, 0.01
  %v405 = vmul.f32 %v340, 0.01
  %v406 = vmul.f32 %v345, 0.01
  %v407 = vmul.f32 %v348, 0.01
  %v408 = vmul.f32 %v353, 0.01
  %v409 = vmul.f32 %v356, 0.01
  %v410 = vmul.f32 %v361, 0.01
  %v411 = vmul.f32 %v364, 0.01
  %v412 = vmul.f32 %v369, 0.01
  %v413 = vmul.f32 %v372, 0.01
  %v414 = vmul.f32 %v377, 0.01
  %v415 = vmul.f32 %v380, 0.01
  %v416 = vmul.f32 %v385, 0.01
  %v417 = vmul.f32 %v388, 0.01
  %v418 = vmul.f32 %v393, 0.01
  %v419 = vmax.f32 %v313, %v398
  %v420 = vmax.f32 %v316, %v399
  %v421 = vmax.f32 %v321, %v400
  %v422 = vmax.f32 %v324, %v401
  %v423 = vmax.f32 %v329, %v402
  %v424 = vmax.f32 %v332, %v403
  %v425 = vmax.f32 %v337, %v404
  %v426 = vmax.f32 %v340, %v405
  %v427 = vmax.f32 %v345, %v406
  %v428 = vmax.f32 %v348, %v407
  %v429 = vmax.f32 %v353, %v408
  %v430 = vmax.f32 %v356, %v409
  %v431 = vmax.f32 %v361, %v410
  %v432 = vmax.f32 %v364, %v411
  %v433 = vmax.f32 %v369, %v412
  %v434 = vmax.f32 %v372, %v413
  %v435 = vmax.f32 %v377, %v414
  %v436 = vmax.f32 %v380, %v415
  %v437 = vmax.f32 %v385, %v416
  %v438 = vmax.f32 %v388, %v417
  %v439 = vmax.f32 %v393, %v418
  %v440 = vpack.c.bf16 %v420, %v419
  %v441 = vpack.c.bf16 %v422, %v421
  %v442 = vpack.c.bf16 %v424, %v423
  %v443 = vpack.c.bf16 %v426, %v425
  %v444 = vpack.c.bf16 %v428, %v427
  %v445 = vpack.c.bf16 %v430, %v429
  %v446 = vpack.c.bf16 %v432, %v431
  %v447 = vpack.c.bf16 %v434, %v433
  %v448 = vpack.c.bf16 %v436, %v435
  %v449 = vpack.c.bf16 %v438, %v437
  %v450 = vpack.c.bf16 %v439, %v439
  %v462 = vunpack.c.l.b16 %v440
  %v463 = vunpack.c.h.b16 %v440
  %v464 = vunpack.c.l.b16 %v441
  %v465 = vunpack.c.h.b16 %v441
  %v466 = vunpack.c.l.b16 %v442
  %v467 = vunpack.c.h.b16 %v442
  %v468 = vunpack.c.l.b16 %v443
  %v469 = vunpack.c.h.b16 %v443
  %v470 = vunpack.c.l.b16 %v444
  %v471 = vunpack.c.h.b16 %v444
  %v472 = vunpack.c.l.b16 %v445
  %v473 = vunpack.c.h.b16 %v445
  %v474 = vunpack.c.l.b16 %v446
  %v475 = vunpack.c.h.b16 %v446
  %v476 = vunpack.c.l.b16 %v447
  %v477 = vunpack.c.h.b16 %v447
  %v478 = vunpack.c.l.b16 %v448
  %v479 = vunpack.c.h.b16 %v448
  %v480 = vunpack.c.l.b16 %v449
  %v481 = vunpack.c.h.b16 %v449
  %v482 = vunpack.c.l.b16 %v450
  %v483 = vpack.c.b16 %v462, %v462
  %v484 = vpack.c.b16 %v463, %v463
  %v485 = vpack.c.b16 %v464, %v464
  %v486 = vpack.c.b16 %v465, %v465
  %v487 = vpack.c.b16 %v466, %v466
  %v488 = vpack.c.b16 %v467, %v467
  %v489 = vpack.c.b16 %v468, %v468
  %v490 = vpack.c.b16 %v469, %v469
  %v491 = vpack.c.b16 %v470, %v470
  %v492 = vpack.c.b16 %v471, %v471
  %v493 = vpack.c.b16 %v472, %v472
  %v494 = vpack.c.b16 %v473, %v473
  %v495 = vpack.c.b16 %v474, %v474
  %v496 = vpack.c.b16 %v475, %v475
  %v497 = vpack.c.b16 %v476, %v476
  %v498 = vpack.c.b16 %v477, %v477
  %v499 = vpack.c.b16 %v478, %v478
  %v500 = vpack.c.b16 %v479, %v479
  %v501 = vpack.c.b16 %v480, %v480
  %v502 = vpack.c.b16 %v481, %v481
  %v503 = vpack.c.b16 %v482, %v482
  %525 = vst [vmem:[%s3] sm:$0xf] %v483
  %526 = vst [vmem:[%s3 + $0x4] sm:$0xf] %v484
  %527 = vst [vmem:[%s3 + $0x8] sm:$0xf] %v485
  %528 = vst [vmem:[%s3 + $0xc] sm:$0xf] %v486
  %529 = vst [vmem:[%s3 + $0x10] sm:$0xf] %v487
  %530 = vst [vmem:[%s3 + $0x14] sm:$0xf] %v488
  %531 = vst [vmem:[%s3 + $0x18] sm:$0xf] %v489
  %532 = vst [vmem:[%s3 + $0x1c] sm:$0xf] %v490
  %533 = vst [vmem:[%s3 + $0x20] sm:$0xf] %v491
  %534 = vst [vmem:[%s3 + $0x24] sm:$0xf] %v492
  %535 = vst [vmem:[%s3 + $0x28] sm:$0xf] %v493
  %536 = vst [vmem:[%s3 + $0x2c] sm:$0xf] %v494
  %537 = vst [vmem:[%s3 + $0x30] sm:$0xf] %v495
  %538 = vst [vmem:[%s3 + $0x34] sm:$0xf] %v496
  %539 = vst [vmem:[%s3 + $0x38] sm:$0xf] %v497
  %540 = vst [vmem:[%s3 + $0x3c] sm:$0xf] %v498
  %541 = vst [vmem:[%s3 + $0x40] sm:$0xf] %v499
  %542 = vst [vmem:[%s3 + $0x44] sm:$0xf] %v500
  %543 = vst [vmem:[%s3 + $0x48] sm:$0xf] %v501
  %544 = vst [vmem:[%s3 + $0x4c] sm:$0xf] %v502
  %545 = vst [vmem:[%s3 + $0x50] sm:$0x1] %v503
  // Predicated region
  $region14: #{a2c_forward.5} parent=0 // pred_check
    _
  $region15: #{a2c_forward.5} parent=0 // pred_check_branch
    %547 = sbr.rel (0) target = $region17
  $region16: #{a2c_forward.5} parent=0 // pred_region
    _
  $region17: #{a2c_forward.5} parent=0 // pred_fallthru
    _
  // Predicated region
  $region18: #{a2c_forward.5} parent=0 // pred_check
    _
  $region19: #{a2c_forward.5} parent=0 // pred_check_branch
    %549 = sbr.rel (0) target = $region21
  $region20: #{a2c_forward.5} parent=0 // pred_region
    _
  $region21: #{a2c_forward.5} parent=0 // pred_fallthru
    _

// kernel: a2c_forward.8
$region0: #{a2c_forward.8}
  #allocation0 [shape = 'u32[]', space=smem, size = 0x4, offset = 0x4, fixed_abs, tag = 'smem constant byte address 0x4 - core index']
  #allocation1 [shape = 'u32[144,128]{1,0:T(1,128)}', space=vmem, size = 0x12000, scoped, tag = 'internal scratch']
  %s0 = inlined_call_operand.vmem [shape: bf16[2,128], index: 0, kind: input, shape index: {}]
  %s1 = inlined_call_operand.vmem [shape: bf16[128,1024], index: 1, kind: input, shape index: {}]
  %s2 = inlined_call_operand.vmem [shape: f32[1,1024], index: 2, kind: input, shape index: {}]
  %s3 = inlined_call_operand.vmem [shape: bf16[2,1024], index: 3, kind: output, shape index: {}]
  %s4 = sld [smem:[#allocation0]]
  $region22: #{a2c_forward.8} parent=0
    _
  %s6 = ssub.s32 1, %s4
  %s7 = scalar_select 0, %s6, %s4
  // Predicated region
  $region2: #{a2c_forward.8} parent=0 // pred_check
    _
  $region3: #{a2c_forward.8} parent=0 // pred_check_branch
    %9 = sbr.rel (0) target = $region5
  $region4: #{a2c_forward.8} parent=0 // pred_region
    _
  $region5: #{a2c_forward.8} parent=0 // pred_fallthru
    _
  // Predicated region
  $region6: #{a2c_forward.8} parent=0 // pred_check
    _
  $region7: #{a2c_forward.8} parent=0 // pred_check_branch
    %11 = sbr.rel (0) target = $region9
  $region8: #{a2c_forward.8} parent=0 // pred_region
    _
  $region9: #{a2c_forward.8} parent=0 // pred_fallthru
    _
  // Predicated region
  $region10: #{a2c_forward.8} parent=0 // pred_check
    _
  $region11: #{a2c_forward.8} parent=0 // pred_check_branch
    %13 = sbr.rel (0) target = $region13
  $region12: #{a2c_forward.8} parent=0 // pred_region
    _
  $region13: #{a2c_forward.8} parent=0 // pred_fallthru
    _
  %v15 = vld [vmem:[%s0] sm:$0x1]
  %v16 = vld [vmem:[%s1] sm:$0xff]
  %v17 = vld [vmem:[%s1 + $0x8] sm:$0xff]
  %v18 = vld [vmem:[%s1 + $0x10] sm:$0xff]
  %v19 = vld [vmem:[%s1 + $0x18] sm:$0xff]
  %v20 = vld [vmem:[%s1 + $0x20] sm:$0xff]
  %v21 = vld [vmem:[%s1 + $0x28] sm:$0xff]
  %v22 = vld [vmem:[%s1 + $0x30] sm:$0xff]
  %v23 = vld [vmem:[%s1 + $0x38] sm:$0xff]
  %v24 = vld [vmem:[%s1 + $0x40] sm:$0xff]
  %v25 = vld [vmem:[%s1 + $0x48] sm:$0xff]
  %v26 = vld [vmem:[%s1 + $0x50] sm:$0xff]
  %v27 = vld [vmem:[%s1 + $0x58] sm:$0xff]
  %v28 = vld [vmem:[%s1 + $0x60] sm:$0xff]
  %v29 = vld [vmem:[%s1 + $0x68] sm:$0xff]
  %v30 = vld [vmem:[%s1 + $0x70] sm:$0xff]
  %v31 = vld [vmem:[%s1 + $0x78] sm:$0xff]
  %v32 = vld [vmem:[%s1 + $0x80] sm:$0xff]
  %v33 = vld [vmem:[%s1 + $0x88] sm:$0xff]
  %v34 = vld [vmem:[%s1 + $0x90] sm:$0xff]
  %v35 = vld [vmem:[%s1 + $0x98] sm:$0xff]
  %v36 = vld [vmem:[%s1 + $0xa0] sm:$0xff]
  %v37 = vld [vmem:[%s1 + $0xa8] sm:$0xff]
  %v38 = vld [vmem:[%s1 + $0xb0] sm:$0xff]
  %v39 = vld [vmem:[%s1 + $0xb8] sm:$0xff]
  %v40 = vld [vmem:[%s1 + $0xc0] sm:$0xff]
  %v41 = vld [vmem:[%s1 + $0xc8] sm:$0xff]
  %v42 = vld [vmem:[%s1 + $0xd0] sm:$0xff]
  %v43 = vld [vmem:[%s1 + $0xd8] sm:$0xff]
  %v44 = vld [vmem:[%s1 + $0xe0] sm:$0xff]
  %v45 = vld [vmem:[%s1 + $0xe8] sm:$0xff]
  %v46 = vld [vmem:[%s1 + $0xf0] sm:$0xff]
  %v47 = vld [vmem:[%s1 + $0xf8] sm:$0xff]
  %v48 = vld [vmem:[%s1 + $0x100] sm:$0xff]
  %v49 = vld [vmem:[%s1 + $0x108] sm:$0xff]
  %v50 = vld [vmem:[%s1 + $0x110] sm:$0xff]
  %v51 = vld [vmem:[%s1 + $0x118] sm:$0xff]
  %v52 = vld [vmem:[%s1 + $0x120] sm:$0xff]
  %v53 = vld [vmem:[%s1 + $0x128] sm:$0xff]
  %v54 = vld [vmem:[%s1 + $0x130] sm:$0xff]
  %v55 = vld [vmem:[%s1 + $0x138] sm:$0xff]
  %v56 = vld [vmem:[%s1 + $0x140] sm:$0xff]
  %v57 = vld [vmem:[%s1 + $0x148] sm:$0xff]
  %v58 = vld [vmem:[%s1 + $0x150] sm:$0xff]
  %v59 = vld [vmem:[%s1 + $0x158] sm:$0xff]
  %v60 = vld [vmem:[%s1 + $0x160] sm:$0xff]
  %v61 = vld [vmem:[%s1 + $0x168] sm:$0xff]
  %v62 = vld [vmem:[%s1 + $0x170] sm:$0xff]
  %v63 = vld [vmem:[%s1 + $0x178] sm:$0xff]
  %v64 = vld [vmem:[%s1 + $0x180] sm:$0xff]
  %v65 = vld [vmem:[%s1 + $0x188] sm:$0xff]
  %v66 = vld [vmem:[%s1 + $0x190] sm:$0xff]
  %v67 = vld [vmem:[%s1 + $0x198] sm:$0xff]
  %v68 = vld [vmem:[%s1 + $0x1a0] sm:$0xff]
  %v69 = vld [vmem:[%s1 + $0x1a8] sm:$0xff]
  %v70 = vld [vmem:[%s1 + $0x1b0] sm:$0xff]
  %v71 = vld [vmem:[%s1 + $0x1b8] sm:$0xff]
  %v72 = vld [vmem:[%s1 + $0x1c0] sm:$0xff]
  %v73 = vld [vmem:[%s1 + $0x1c8] sm:$0xff]
  %v74 = vld [vmem:[%s1 + $0x1d0] sm:$0xff]
  %v75 = vld [vmem:[%s1 + $0x1d8] sm:$0xff]
  %v76 = vld [vmem:[%s1 + $0x1e0] sm:$0xff]
  %v77 = vld [vmem:[%s1 + $0x1e8] sm:$0xff]
  %v78 = vld [vmem:[%s1 + $0x1f0] sm:$0xff]
  %v79 = vld [vmem:[%s1 + $0x1f8] sm:$0xff]
  %v80 = vld [vmem:[%s2] sm:$0xff]
  %v82 = vlaneseq
  %v83 = vshrl.u32 %v82, 7
  %v84 = vsub.s32 0, %v83
  %v85 = vrot.slane %v80, %v84
  %v86 = vlaneseq
  %v87 = vshrl.u32 %v86, 7
  %v88 = vsub.s32 1, %v87
  %v89 = vrot.slane %v80, %v88
  %v90 = vlaneseq
  %v91 = vshrl.u32 %v90, 7
  %v92 = vsub.s32 2, %v91
  %v93 = vrot.slane %v80, %v92
  %v94 = vlaneseq
  %v95 = vshrl.u32 %v94, 7
  %v96 = vsub.s32 3, %v95
  %v97 = vrot.slane %v80, %v96
  %v98 = vlaneseq
  %v99 = vshrl.u32 %v98, 7
  %v100 = vsub.s32 4, %v99
  %v101 = vrot.slane %v80, %v100
  %v102 = vlaneseq
  %v103 = vshrl.u32 %v102, 7
  %v104 = vsub.s32 5, %v103
  %v105 = vrot.slane %v80, %v104
  %v106 = vlaneseq
  %v107 = vshrl.u32 %v106, 7
  %v108 = vsub.s32 6, %v107
  %v109 = vrot.slane %v80, %v108
  %v110 = vlaneseq
  %v111 = vshrl.u32 %v110, 7
  %v112 = vsub.s32 7, %v111
  %v113 = vrot.slane %v80, %v112
  %v186 = vunpack.c.l.b16 %v16
  %v187 = vunpack.c.h.b16 %v16
  %v188 = vunpack.c.l.b16 %v17
  %v189 = vunpack.c.h.b16 %v17
  %v190 = vunpack.c.l.b16 %v18
  %v191 = vunpack.c.h.b16 %v18
  %v192 = vunpack.c.l.b16 %v19
  %v193 = vunpack.c.h.b16 %v19
  %v194 = vunpack.c.l.b16 %v20
  %v195 = vunpack.c.h.b16 %v20
  %v196 = vunpack.c.l.b16 %v21
  %v197 = vunpack.c.h.b16 %v21
  %v198 = vunpack.c.l.b16 %v22
  %v199 = vunpack.c.h.b16 %v22
  %v200 = vunpack.c.l.b16 %v23
  %v201 = vunpack.c.h.b16 %v23
  %v202 = vunpack.c.l.b16 %v24
  %v203 = vunpack.c.h.b16 %v24
  %v204 = vunpack.c.l.b16 %v25
  %v205 = vunpack.c.h.b16 %v25
  %v206 = vunpack.c.l.b16 %v26
  %v207 = vunpack.c.h.b16 %v26
  %v208 = vunpack.c.l.b16 %v27
  %v209 = vunpack.c.h.b16 %v27
  %v210 = vunpack.c.l.b16 %v28
  %v211 = vunpack.c.h.b16 %v28
  %v212 = vunpack.c.l.b16 %v29
  %v213 = vunpack.c.h.b16 %v29
  %v214 = vunpack.c.l.b16 %v30
  %v215 = vunpack.c.h.b16 %v30
  %v216 = vunpack.c.l.b16 %v31
  %v217 = vunpack.c.h.b16 %v31
  %v218 = vunpack.c.l.b16 %v32
  %v219 = vunpack.c.h.b16 %v32
  %v220 = vunpack.c.l.b16 %v33
  %v221 = vunpack.c.h.b16 %v33
  %v222 = vunpack.c.l.b16 %v34
  %v223 = vunpack.c.h.b16 %v34
  %v224 = vunpack.c.l.b16 %v35
  %v225 = vunpack.c.h.b16 %v35
  %v226 = vunpack.c.l.b16 %v36
  %v227 = vunpack.c.h.b16 %v36
  %v228 = vunpack.c.l.b16 %v37
  %v229 = vunpack.c.h.b16 %v37
  %v230 = vunpack.c.l.b16 %v38
  %v231 = vunpack.c.h.b16 %v38
  %v232 = vunpack.c.l.b16 %v39
  %v233 = vunpack.c.h.b16 %v39
  %v234 = vunpack.c.l.b16 %v40
  %v235 = vunpack.c.h.b16 %v40
  %v236 = vunpack.c.l.b16 %v41
  %v237 = vunpack.c.h.b16 %v41
  %v238 = vunpack.c.l.b16 %v42
  %v239 = vunpack.c.h.b16 %v42
  %v240 = vunpack.c.l.b16 %v43
  %v241 = vunpack.c.h.b16 %v43
  %v242 = vunpack.c.l.b16 %v44
  %v243 = vunpack.c.h.b16 %v44
  %v244 = vunpack.c.l.b16 %v45
  %v245 = vunpack.c.h.b16 %v45
  %v246 = vunpack.c.l.b16 %v46
  %v247 = vunpack.c.h.b16 %v46
  %v248 = vunpack.c.l.b16 %v47
  %v249 = vunpack.c.h.b16 %v47
  %v250 = vunpack.c.l.b16 %v48
  %v251 = vunpack.c.h.b16 %v48
  %v252 = vunpack.c.l.b16 %v49
  %v253 = vunpack.c.h.b16 %v49
  %v254 = vunpack.c.l.b16 %v50
  %v255 = vunpack.c.h.b16 %v50
  %v256 = vunpack.c.l.b16 %v51
  %v257 = vunpack.c.h.b16 %v51
  %v258 = vunpack.c.l.b16 %v52
  %v259 = vunpack.c.h.b16 %v52
  %v260 = vunpack.c.l.b16 %v53
  %v261 = vunpack.c.h.b16 %v53
  %v262 = vunpack.c.l.b16 %v54
  %v263 = vunpack.c.h.b16 %v54
  %v264 = vunpack.c.l.b16 %v55
  %v265 = vunpack.c.h.b16 %v55
  %v266 = vunpack.c.l.b16 %v56
  %v267 = vunpack.c.h.b16 %v56
  %v268 = vunpack.c.l.b16 %v57
  %v269 = vunpack.c.h.b16 %v57
  %v270 = vunpack.c.l.b16 %v58
  %v271 = vunpack.c.h.b16 %v58
  %v272 = vunpack.c.l.b16 %v59
  %v273 = vunpack.c.h.b16 %v59
  %v274 = vunpack.c.l.b16 %v60
  %v275 = vunpack.c.h.b16 %v60
  %v276 = vunpack.c.l.b16 %v61
  %v277 = vunpack.c.h.b16 %v61
  %v278 = vunpack.c.l.b16 %v62
  %v279 = vunpack.c.h.b16 %v62
  %v280 = vunpack.c.l.b16 %v63
  %v281 = vunpack.c.h.b16 %v63
  %v282 = vunpack.c.l.b16 %v64
  %v283 = vunpack.c.h.b16 %v64
  %v284 = vunpack.c.l.b16 %v65
  %v285 = vunpack.c.h.b16 %v65
  %v286 = vunpack.c.l.b16 %v66
  %v287 = vunpack.c.h.b16 %v66
  %v288 = vunpack.c.l.b16 %v67
  %v289 = vunpack.c.h.b16 %v67
  %v290 = vunpack.c.l.b16 %v68
  %v291 = vunpack.c.h.b16 %v68
  %v292 = vunpack.c.l.b16 %v69
  %v293 = vunpack.c.h.b16 %v69
  %v294 = vunpack.c.l.b16 %v70
  %v295 = vunpack.c.h.b16 %v70
  %v296 = vunpack.c.l.b16 %v71
  %v297 = vunpack.c.h.b16 %v71
  %v298 = vunpack.c.l.b16 %v72
  %v299 = vunpack.c.h.b16 %v72
  %v300 = vunpack.c.l.b16 %v73
  %v301 = vunpack.c.h.b16 %v73
  %v302 = vunpack.c.l.b16 %v74
  %v303 = vunpack.c.h.b16 %v74
  %v304 = vunpack.c.l.b16 %v75
  %v305 = vunpack.c.h.b16 %v75
  %v306 = vunpack.c.l.b16 %v76
  %v307 = vunpack.c.h.b16 %v76
  %v308 = vunpack.c.l.b16 %v77
  %v309 = vunpack.c.h.b16 %v77
  %v310 = vunpack.c.l.b16 %v78
  %v311 = vunpack.c.h.b16 %v78
  %v312 = vunpack.c.l.b16 %v79
  %v313 = vunpack.c.h.b16 %v79
  %v314 = vpack.c.b16 %v194, %v186
  %v315 = vpack.c.b16 %v195, %v187
  %v316 = vpack.c.b16 %v196, %v188
  %v317 = vpack.c.b16 %v197, %v189
  %v318 = vpack.c.b16 %v198, %v190
  %v319 = vpack.c.b16 %v199, %v191
  %v320 = vpack.c.b16 %v200, %v192
  %v321 = vpack.c.b16 %v201, %v193
  %v322 = vpack.c.b16 %v210, %v202
  %v323 = vpack.c.b16 %v211, %v203
  %v324 = vpack.c.b16 %v212, %v204
  %v325 = vpack.c.b16 %v213, %v205
  %v326 = vpack.c.b16 %v214, %v206
  %v327 = vpack.c.b16 %v215, %v207
  %v328 = vpack.c.b16 %v216, %v208
  %v329 = vpack.c.b16 %v217, %v209
  %v330 = vpack.c.b16 %v226, %v218
  %v331 = vpack.c.b16 %v227, %v219
  %v332 = vpack.c.b16 %v228, %v220
  %v333 = vpack.c.b16 %v229, %v221
  %v334 = vpack.c.b16 %v230, %v222
  %v335 = vpack.c.b16 %v231, %v223
  %v336 = vpack.c.b16 %v232, %v224
  %v337 = vpack.c.b16 %v233, %v225
  %v338 = vpack.c.b16 %v242, %v234
  %v339 = vpack.c.b16 %v243, %v235
  %v340 = vpack.c.b16 %v244, %v236
  %v341 = vpack.c.b16 %v245, %v237
  %v342 = vpack.c.b16 %v246, %v238
  %v343 = vpack.c.b16 %v247, %v239
  %v344 = vpack.c.b16 %v248, %v240
  %v345 = vpack.c.b16 %v249, %v241
  %v346 = vpack.c.b16 %v258, %v250
  %v347 = vpack.c.b16 %v259, %v251
  %v348 = vpack.c.b16 %v260, %v252
  %v349 = vpack.c.b16 %v261, %v253
  %v350 = vpack.c.b16 %v262, %v254
  %v351 = vpack.c.b16 %v263, %v255
  %v352 = vpack.c.b16 %v264, %v256
  %v353 = vpack.c.b16 %v265, %v257
  %v354 = vpack.c.b16 %v274, %v266
  %v355 = vpack.c.b16 %v275, %v267
  %v356 = vpack.c.b16 %v276, %v268
  %v357 = vpack.c.b16 %v277, %v269
  %v358 = vpack.c.b16 %v278, %v270
  %v359 = vpack.c.b16 %v279, %v271
  %v360 = vpack.c.b16 %v280, %v272
  %v361 = vpack.c.b16 %v281, %v273
  %v362 = vpack.c.b16 %v290, %v282
  %v363 = vpack.c.b16 %v291, %v283
  %v364 = vpack.c.b16 %v292, %v284
  %v365 = vpack.c.b16 %v293, %v285
  %v366 = vpack.c.b16 %v294, %v286
  %v367 = vpack.c.b16 %v295, %v287
  %v368 = vpack.c.b16 %v296, %v288
  %v369 = vpack.c.b16 %v297, %v289
  %v370 = vpack.c.b16 %v306, %v298
  %v371 = vpack.c.b16 %v307, %v299
  %v372 = vpack.c.b16 %v308, %v300
  %v373 = vpack.c.b16 %v309, %v301
  %v374 = vpack.c.b16 %v310, %v302
  %v375 = vpack.c.b16 %v311, %v303
  %v376 = vpack.c.b16 %v312, %v304
  %v377 = vpack.c.b16 %v313, %v305
  %442 = vmatprep.subr.bf16.mxu0 %v371
  %443 = vmatpush1.bf16.msra.mxu0 %v370
  %444 = vmatprep.subr.bf16.mxu0 %v363
  %445 = vmatpush1.bf16.msra.mxu0 %v362
  %446 = vmatprep.subr.bf16.mxu0 %v355
  %447 = vmatpush1.bf16.msra.mxu0 %v354
  %448 = vmatprep.subr.bf16.mxu0 %v347
  %449 = vmatpush1.bf16.msra.mxu0 %v346
  %450 = vmatprep.subr.bf16.mxu0 %v339
  %451 = vmatpush1.bf16.msra.mxu0 %v338
  %452 = vmatprep.subr.bf16.mxu0 %v331
  %453 = vmatpush1.bf16.msra.mxu0 %v330
  %454 = vmatprep.subr.bf16.mxu0 %v323
  %455 = vmatpush1.bf16.msra.mxu0 %v322
  %456 = vmatprep.subr.bf16.mxu0 %v315
  %457 = vmatpush1.bf16.msra.mxu0 %v314
  %458 = vmatprep.subr.bf16.mxu0 0
  %459 = vmatpush2.bf16.msra.mxu0 0
  %460 = vmatprep.subr.bf16.mxu0 0
  %461 = vmatpush2.bf16.msra.mxu0 0
  %462 = vmatprep.subr.bf16.mxu0 0
  %463 = vmatpush2.bf16.msra.mxu0 0
  %464 = vmatprep.subr.bf16.mxu0 0
  %465 = vmatpush2.bf16.msra.mxu0 0
  %466 = vmatprep.subr.bf16.mxu0 0
  %467 = vmatpush2.bf16.msra.mxu0 0
  %468 = vmatprep.subr.bf16.mxu0 0
  %469 = vmatpush2.bf16.msra.mxu0 0
  %470 = vmatprep.subr.bf16.mxu0 0
  %471 = vmatpush2.bf16.msra.mxu0 0
  %472 = vmatprep.subr.bf16.mxu0 0
  %473 = vmatpush2.bf16.msra.mxu0 0
  %474 = vmatprep.mubr.bf16.mxu0 0
  %475 = vmatmul.mubr.bf16.gmra.mxu0 %v15
  %v476 = vpop.f32.mrf.mxu0
  %v477 = vadd.f32 %v85, %v476
  %v478 = vpop.f32.mrf.mxu0
  %v479 = vadd.f32 %v89, %v478
  %v480 = vpop.f32.mrf.mxu0
  %v481 = vpop.f32.mrf.mxu0
  %482 = vdwg.mxu0
  %483 = vmatprep.subr.bf16.mxu0 %v373
  %484 = vmatpush1.bf16.msra.mxu0 %v372
  %485 = vmatprep.subr.bf16.mxu0 %v365
  %486 = vmatpush1.bf16.msra.mxu0 %v364
  %487 = vmatprep.subr.bf16.mxu0 %v357
  %488 = vmatpush1.bf16.msra.mxu0 %v356
  %489 = vmatprep.subr.bf16.mxu0 %v349
  %490 = vmatpush1.bf16.msra.mxu0 %v348
  %491 = vmatprep.subr.bf16.mxu0 %v341
  %492 = vmatpush1.bf16.msra.mxu0 %v340
  %493 = vmatprep.subr.bf16.mxu0 %v333
  %494 = vmatpush1.bf16.msra.mxu0 %v332
  %495 = vmatprep.subr.bf16.mxu0 %v325
  %496 = vmatpush1.bf16.msra.mxu0 %v324
  %497 = vmatprep.subr.bf16.mxu0 %v317
  %498 = vmatpush1.bf16.msra.mxu0 %v316
  %499 = vmatprep.subr.bf16.mxu0 0
  %500 = vmatpush2.bf16.msra.mxu0 0
  %501 = vmatprep.subr.bf16.mxu0 0
  %502 = vmatpush2.bf16.msra.mxu0 0
  %503 = vmatprep.subr.bf16.mxu0 0
  %504 = vmatpush2.bf16.msra.mxu0 0
  %505 = vmatprep.subr.bf16.mxu0 0
  %506 = vmatpush2.bf16.msra.mxu0 0
  %507 = vmatprep.subr.bf16.mxu0 0
  %508 = vmatpush2.bf16.msra.mxu0 0
  %509 = vmatprep.subr.bf16.mxu0 0
  %510 = vmatpush2.bf16.msra.mxu0 0
  %511 = vmatprep.subr.bf16.mxu0 0
  %512 = vmatpush2.bf16.msra.mxu0 0
  %513 = vmatprep.subr.bf16.mxu0 0
  %514 = vmatpush2.bf16.msra.mxu0 0
  %515 = vmatprep.mubr.bf16.mxu0 0
  %516 = vmatmul.mubr.bf16.gmra.mxu0 %v15
  %v517 = vpop.f32.mrf.mxu0
  %v518 = vadd.f32 %v93, %v517
  %v519 = vpop.f32.mrf.mxu0
  %v520 = vadd.f32 %v97, %v519
  %v521 = vpop.f32.mrf.mxu0
  %v522 = vpop.f32.mrf.mxu0
  %523 = vdwg.mxu0
  %524 = vmatprep.subr.bf16.mxu0 %v375
  %525 = vmatpush1.bf16.msra.mxu0 %v374
  %526 = vmatprep.subr.bf16.mxu0 %v367
  %527 = vmatpush1.bf16.msra.mxu0 %v366
  %528 = vmatprep.subr.bf16.mxu0 %v359
  %529 = vmatpush1.bf16.msra.mxu0 %v358
  %530 = vmatprep.subr.bf16.mxu0 %v351
  %531 = vmatpush1.bf16.msra.mxu0 %v350
  %532 = vmatprep.subr.bf16.mxu0 %v343
  %533 = vmatpush1.bf16.msra.mxu0 %v342
  %534 = vmatprep.subr.bf16.mxu0 %v335
  %535 = vmatpush1.bf16.msra.mxu0 %v334
  %536 = vmatprep.subr.bf16.mxu0 %v327
  %537 = vmatpush1.bf16.msra.mxu0 %v326
  %538 = vmatprep.subr.bf16.mxu0 %v319
  %539 = vmatpush1.bf16.msra.mxu0 %v318
  %540 = vmatprep.subr.bf16.mxu0 0
  %541 = vmatpush2.bf16.msra.mxu0 0
  %542 = vmatprep.subr.bf16.mxu0 0
  %543 = vmatpush2.bf16.msra.mxu0 0
  %544 = vmatprep.subr.bf16.mxu0 0
  %545 = vmatpush2.bf16.msra.mxu0 0
  %546 = vmatprep.subr.bf16.mxu0 0
  %547 = vmatpush2.bf16.msra.mxu0 0
  %548 = vmatprep.subr.bf16.mxu0 0
  %549 = vmatpush2.bf16.msra.mxu0 0
  %550 = vmatprep.subr.bf16.mxu0 0
  %551 = vmatpush2.bf16.msra.mxu0 0
  %552 = vmatprep.subr.bf16.mxu0 0
  %553 = vmatpush2.bf16.msra.mxu0 0
  %554 = vmatprep.subr.bf16.mxu0 0
  %555 = vmatpush2.bf16.msra.mxu0 0
  %556 = vmatprep.mubr.bf16.mxu0 0
  %557 = vmatmul.mubr.bf16.gmra.mxu0 %v15
  %v558 = vpop.f32.mrf.mxu0
  %v559 = vadd.f32 %v101, %v558
  %v560 = vpop.f32.mrf.mxu0
  %v561 = vadd.f32 %v105, %v560
  %v562 = vpop.f32.mrf.mxu0
  %v563 = vpop.f32.mrf.mxu0
  %564 = vdwg.mxu0
  %565 = vmatprep.subr.bf16.mxu0 %v377
  %566 = vmatpush1.bf16.msra.mxu0 %v376
  %567 = vmatprep.subr.bf16.mxu0 %v369
  %568 = vmatpush1.bf16.msra.mxu0 %v368
  %569 = vmatprep.subr.bf16.mxu0 %v361
  %570 = vmatpush1.bf16.msra.mxu0 %v360
  %571 = vmatprep.subr.bf16.mxu0 %v353
  %572 = vmatpush1.bf16.msra.mxu0 %v352
  %573 = vmatprep.subr.bf16.mxu0 %v345
  %574 = vmatpush1.bf16.msra.mxu0 %v344
  %575 = vmatprep.subr.bf16.mxu0 %v337
  %576 = vmatpush1.bf16.msra.mxu0 %v336
  %577 = vmatprep.subr.bf16.mxu0 %v329
  %578 = vmatpush1.bf16.msra.mxu0 %v328
  %579 = vmatprep.subr.bf16.mxu0 %v321
  %580 = vmatpush1.bf16.msra.mxu0 %v320
  %581 = vmatprep.subr.bf16.mxu0 0
  %582 = vmatpush2.bf16.msra.mxu0 0
  %583 = vmatprep.subr.bf16.mxu0 0
  %584 = vmatpush2.bf16.msra.mxu0 0
  %585 = vmatprep.subr.bf16.mxu0 0
  %586 = vmatpush2.bf16.msra.mxu0 0
  %587 = vmatprep.subr.bf16.mxu0 0
  %588 = vmatpush2.bf16.msra.mxu0 0
  %589 = vmatprep.subr.bf16.mxu0 0
  %590 = vmatpush2.bf16.msra.mxu0 0
  %591 = vmatprep.subr.bf16.mxu0 0
  %592 = vmatpush2.bf16.msra.mxu0 0
  %593 = vmatprep.subr.bf16.mxu0 0
  %594 = vmatpush2.bf16.msra.mxu0 0
  %595 = vmatprep.subr.bf16.mxu0 0
  %596 = vmatpush2.bf16.msra.mxu0 0
  %597 = vmatprep.mubr.bf16.mxu0 0
  %598 = vmatmul.mubr.bf16.gmra.mxu0 %v15
  %v599 = vpop.f32.mrf.mxu0
  %v600 = vadd.f32 %v109, %v599
  %v601 = vpop.f32.mrf.mxu0
  %v602 = vadd.f32 %v113, %v601
  %v603 = vpop.f32.mrf.mxu0
  %v604 = vpop.f32.mrf.mxu0
  %605 = vdwg.mxu0
  %v606 = vmax.f32 %v477, 0.0
  %v607 = vmax.f32 %v479, 0.0
  %v608 = vmax.f32 %v518, 0.0
  %v609 = vmax.f32 %v520, 0.0
  %v610 = vmax.f32 %v559, 0.0
  %v611 = vmax.f32 %v561, 0.0
  %v612 = vmax.f32 %v600, 0.0
  %v613 = vmax.f32 %v602, 0.0
  %v614 = vpack.c.bf16 %v606, %v606
  %v615 = vpack.c.bf16 %v607, %v607
  %v616 = vpack.c.bf16 %v608, %v608
  %v617 = vpack.c.bf16 %v609, %v609
  %v618 = vpack.c.bf16 %v610, %v610
  %v619 = vpack.c.bf16 %v611, %v611
  %v620 = vpack.c.bf16 %v612, %v612
  %v621 = vpack.c.bf16 %v613, %v613
  %v630 = vcombine.low %v614, %v615
  %v631 = vcombine.low %v616, %v617
  %v632 = vcombine.low %v618, %v619
  %v633 = vcombine.low %v620, %v621
  %v635 = vunpack.c.l.s4 1966171168
  %v636 = vunpack.c.0.s8 %v635
  %v637 = vlaneseq
  %v638 = vshrl.u32 %v637, 7
  %v639 = vsub.s32 %v636, %v638
  %v640 = vrot.slane %v630, %v639
  %v642 = vunpack.c.l.s4 1966171168
  %v643 = vunpack.c.0.s8 %v642
  %v644 = vlaneseq
  %v645 = vshrl.u32 %v644, 7
  %v646 = vsub.s32 %v643, %v645
  %v647 = vrot.slane %v631, %v646
  %v649 = vunpack.c.l.s4 1966171168
  %v650 = vunpack.c.0.s8 %v649
  %v651 = vlaneseq
  %v652 = vshrl.u32 %v651, 7
  %v653 = vsub.s32 %v650, %v652
  %v654 = vrot.slane %v632, %v653
  %v656 = vunpack.c.l.s4 1966171168
  %v657 = vunpack.c.0.s8 %v656
  %v658 = vlaneseq
  %v659 = vshrl.u32 %v658, 7
  %v660 = vsub.s32 %v657, %v659
  %v661 = vrot.slane %v633, %v660
  %v662 = vcombine.low %v640, %v647
  %v663 = vcombine.low %v654, %v661
  %v665 = vunpack.c.l.s4 1966171168
  %v666 = vunpack.c.0.s8 %v665
  %v667 = vlaneseq
  %v668 = vshrl.u32 %v667, 7
  %v669 = vsub.s32 %v666, %v668
  %v670 = vrot.slane %v662, %v669
  %v672 = vunpack.c.l.s4 1966171168
  %v673 = vunpack.c.0.s8 %v672
  %v674 = vlaneseq
  %v675 = vshrl.u32 %v674, 7
  %v676 = vsub.s32 %v673, %v675
  %v677 = vrot.slane %v663, %v676
  %v678 = vcombine.low %v670, %v677
  %680 = vst [vmem:[%s3] sm:$0xff] %v678
  // Predicated region
  $region14: #{a2c_forward.8} parent=0 // pred_check
    _
  $region15: #{a2c_forward.8} parent=0 // pred_check_branch
    %682 = sbr.rel (0) target = $region17
  $region16: #{a2c_forward.8} parent=0 // pred_region
    _
  $region17: #{a2c_forward.8} parent=0 // pred_fallthru
    _
  // Predicated region
  $region18: #{a2c_forward.8} parent=0 // pred_check
    _
  $region19: #{a2c_forward.8} parent=0 // pred_check_branch
    %684 = sbr.rel (0) target = $region21
  $region20: #{a2c_forward.8} parent=0 // pred_region
    _
  $region21: #{a2c_forward.8} parent=0 // pred_fallthru
    _

// kernel: a2c_forward.6
$region0: #{a2c_forward.6}
  #allocation0 [shape = 'u32[]', space=smem, size = 0x4, offset = 0x4, fixed_abs, tag = 'smem constant byte address 0x4 - core index']
  #allocation1 [shape = 'u32[144,128]{1,0:T(1,128)}', space=vmem, size = 0x12000, scoped, tag = 'internal scratch']
  %s0 = inlined_call_operand.vmem [shape: bf16[18,2048], index: 0, kind: input, shape index: {}]
  %s1 = inlined_call_operand.vmem [shape: bf16[2048,128], index: 1, kind: input, shape index: {}]
  %s2 = inlined_call_operand.vmem [shape: f32[1,128], index: 2, kind: input, shape index: {}]
  %s3 = inlined_call_operand.vmem [shape: bf16[18,128], index: 3, kind: output, shape index: {}]
  %s4 = sld [smem:[#allocation0]]
  $region22: #{a2c_forward.6} parent=0
    _
  %s6 = ssub.s32 1, %s4
  %s7 = scalar_select 0, %s6, %s4
  // Predicated region
  $region2: #{a2c_forward.6} parent=0 // pred_check
    _
  $region3: #{a2c_forward.6} parent=0 // pred_check_branch
    %9 = sbr.rel (0) target = $region5
  $region4: #{a2c_forward.6} parent=0 // pred_region
    _
  $region5: #{a2c_forward.6} parent=0 // pred_fallthru
    _
  // Predicated region
  $region6: #{a2c_forward.6} parent=0 // pred_check
    _
  $region7: #{a2c_forward.6} parent=0 // pred_check_branch
    %11 = sbr.rel (0) target = $region9
  $region8: #{a2c_forward.6} parent=0 // pred_region
    _
  $region9: #{a2c_forward.6} parent=0 // pred_fallthru
    _
  // Predicated region
  $region10: #{a2c_forward.6} parent=0 // pred_check
    _
  $region11: #{a2c_forward.6} parent=0 // pred_check_branch
    %13 = sbr.rel (0) target = $region13
  $region12: #{a2c_forward.6} parent=0 // pred_region
    _
  $region13: #{a2c_forward.6} parent=0 // pred_fallthru
    _
  %v15 = vld [vmem:[%s0] sm:$0xff]
  %v16 = vld [vmem:[%s0 + $0x8] sm:$0xff]
  %v17 = vld [vmem:[%s0 + $0x10] sm:$0xff]
  %v18 = vld [vmem:[%s0 + $0x18] sm:$0xff]
  %v19 = vld [vmem:[%s0 + $0x20] sm:$0xff]
  %v20 = vld [vmem:[%s0 + $0x28] sm:$0xff]
  %v21 = vld [vmem:[%s0 + $0x30] sm:$0xff]
  %v22 = vld [vmem:[%s0 + $0x38] sm:$0xff]
  %v23 = vld [vmem:[%s0 + $0x40] sm:$0xff]
  %v24 = vld [vmem:[%s0 + $0x48] sm:$0xff]
  %v25 = vld [vmem:[%s0 + $0x50] sm:$0xff]
  %v26 = vld [vmem:[%s0 + $0x58] sm:$0xff]
  %v27 = vld [vmem:[%s0 + $0x60] sm:$0xff]
  %v28 = vld [vmem:[%s0 + $0x68] sm:$0xff]
  %v29 = vld [vmem:[%s0 + $0x70] sm:$0xff]
  %v30 = vld [vmem:[%s0 + $0x78] sm:$0xff]
  %v31 = vld [vmem:[%s0 + $0x80] sm:$0x11]
  %v32 = vld [vmem:[%s0 + $0x88] sm:$0x11]
  %v33 = vld [vmem:[%s0 + $0x90] sm:$0x11]
  %v34 = vld [vmem:[%s0 + $0x98] sm:$0x11]
  %v35 = vld [vmem:[%s0 + $0xa0] sm:$0x11]
  %v36 = vld [vmem:[%s0 + $0xa8] sm:$0x11]
  %v37 = vld [vmem:[%s0 + $0xb0] sm:$0x11]
  %v38 = vld [vmem:[%s0 + $0xb8] sm:$0x11]
  %v39 = vld [vmem:[%s1] sm:$0xf]
  %v40 = vld [vmem:[%s1 + $0x4] sm:$0xf]
  %v41 = vld [vmem:[%s1 + $0x8] sm:$0xf]
  %v42 = vld [vmem:[%s1 + $0xc] sm:$0xf]
  %v43 = vld [vmem:[%s1 + $0x10] sm:$0xf]
  %v44 = vld [vmem:[%s1 + $0x14] sm:$0xf]
  %v45 = vld [vmem:[%s1 + $0x18] sm:$0xf]
  %v46 = vld [vmem:[%s1 + $0x1c] sm:$0xf]
  %v47 = vld [vmem:[%s1 + $0x20] sm:$0xf]
  %v48 = vld [vmem:[%s1 + $0x24] sm:$0xf]
  %v49 = vld [vmem:[%s1 + $0x28] sm:$0xf]
  %v50 = vld [vmem:[%s1 + $0x2c] sm:$0xf]
  %v51 = vld [vmem:[%s1 + $0x30] sm:$0xf]
  %v52 = vld [vmem:[%s1 + $0x34] sm:$0xf]
  %v53 = vld [vmem:[%s1 + $0x38] sm:$0xf]
  %v54 = vld [vmem:[%s1 + $0x3c] sm:$0xf]
  %v55 = vld [vmem:[%s1 + $0x40] sm:$0xf]
  %v56 = vld [vmem:[%s1 + $0x44] sm:$0xf]
  %v57 = vld [vmem:[%s1 + $0x48] sm:$0xf]
  %v58 = vld [vmem:[%s1 + $0x4c] sm:$0xf]
  %v59 = vld [vmem:[%s1 + $0x50] sm:$0xf]
  %v60 = vld [vmem:[%s1 + $0x54] sm:$0xf]
  %v61 = vld [vmem:[%s1 + $0x58] sm:$0xf]
  %v62 = vld [vmem:[%s1 + $0x5c] sm:$0xf]
  %v63 = vld [vmem:[%s1 + $0x60] sm:$0xf]
  %v64 = vld [vmem:[%s1 + $0x64] sm:$0xf]
  %v65 = vld [vmem:[%s1 + $0x68] sm:$0xf]
  %v66 = vld [vmem:[%s1 + $0x6c] sm:$0xf]
  %v67 = vld [vmem:[%s1 + $0x70] sm:$0xf]
  %v68 = vld [vmem:[%s1 + $0x74] sm:$0xf]
  %v69 = vld [vmem:[%s1 + $0x78] sm:$0xf]
  %v70 = vld [vmem:[%s1 + $0x7c] sm:$0xf]
  %v71 = vld [vmem:[%s1 + $0x80] sm:$0xf]
  %v72 = vld [vmem:[%s1 + $0x84] sm:$0xf]
  %v73 = vld [vmem:[%s1 + $0x88] sm:$0xf]
  %v74 = vld [vmem:[%s1 + $0x8c] sm:$0xf]
  %v75 = vld [vmem:[%s1 + $0x90] sm:$0xf]
  %v76 = vld [vmem:[%s1 + $0x94] sm:$0xf]
  %v77 = vld [vmem:[%s1 + $0x98] sm:$0xf]
  %v78 = vld [vmem:[%s1 + $0x9c] sm:$0xf]
  %v79 = vld [vmem:[%s1 + $0xa0] sm:$0xf]
  %v80 = vld [vmem:[%s1 + $0xa4] sm:$0xf]
  %v81 = vld [vmem:[%s1 + $0xa8] sm:$0xf]
  %v82 = vld [vmem:[%s1 + $0xac] sm:$0xf]
  %v83 = vld [vmem:[%s1 + $0xb0] sm:$0xf]
  %v84 = vld [vmem:[%s1 + $0xb4] sm:$0xf]
  %v85 = vld [vmem:[%s1 + $0xb8] sm:$0xf]
  %v86 = vld [vmem:[%s1 + $0xbc] sm:$0xf]
  %v87 = vld [vmem:[%s1 + $0xc0] sm:$0xf]
  %v88 = vld [vmem:[%s1 + $0xc4] sm:$0xf]
  %v89 = vld [vmem:[%s1 + $0xc8] sm:$0xf]
  %v90 = vld [vmem:[%s1 + $0xcc] sm:$0xf]
  %v91 = vld [vmem:[%s1 + $0xd0] sm:$0xf]
  %v92 = vld [vmem:[%s1 + $0xd4] sm:$0xf]
  %v93 = vld [vmem:[%s1 + $0xd8] sm:$0xf]
  %v94 = vld [vmem:[%s1 + $0xdc] sm:$0xf]
  %v95 = vld [vmem:[%s1 + $0xe0] sm:$0xf]
  %v96 = vld [vmem:[%s1 + $0xe4] sm:$0xf]
  %v97 = vld [vmem:[%s1 + $0xe8] sm:$0xf]
  %v98 = vld [vmem:[%s1 + $0xec] sm:$0xf]
  %v99 = vld [vmem:[%s1 + $0xf0] sm:$0xf]
  %v100 = vld [vmem:[%s1 + $0xf4] sm:$0xf]
  %v101 = vld [vmem:[%s1 + $0xf8] sm:$0xf]
  %v102 = vld [vmem:[%s1 + $0xfc] sm:$0xf]
  %v103 = vld [vmem:[%s1 + $0x100] sm:$0xf]
  %v104 = vld [vmem:[%s1 + $0x104] sm:$0xf]
  %v105 = vld [vmem:[%s1 + $0x108] sm:$0xf]
  %v106 = vld [vmem:[%s1 + $0x10c] sm:$0xf]
  %v107 = vld [vmem:[%s1 + $0x110] sm:$0xf]
  %v108 = vld [vmem:[%s1 + $0x114] sm:$0xf]
  %v109 = vld [vmem:[%s1 + $0x118] sm:$0xf]
  %v110 = vld [vmem:[%s1 + $0x11c] sm:$0xf]
  %v111 = vld [vmem:[%s1 + $0x120] sm:$0xf]
  %v112 = vld [vmem:[%s1 + $0x124] sm:$0xf]
  %v113 = vld [vmem:[%s1 + $0x128] sm:$0xf]
  %v114 = vld [vmem:[%s1 + $0x12c] sm:$0xf]
  %v115 = vld [vmem:[%s1 + $0x130] sm:$0xf]
  %v116 = vld [vmem:[%s1 + $0x134] sm:$0xf]
  %v117 = vld [vmem:[%s1 + $0x138] sm:$0xf]
  %v118 = vld [vmem:[%s1 + $0x13c] sm:$0xf]
  %v119 = vld [vmem:[%s1 + $0x140] sm:$0xf]
  %v120 = vld [vmem:[%s1 + $0x144] sm:$0xf]
  %v121 = vld [vmem:[%s1 + $0x148] sm:$0xf]
  %v122 = vld [vmem:[%s1 + $0x14c] sm:$0xf]
  %v123 = vld [vmem:[%s1 + $0x150] sm:$0xf]
  %v124 = vld [vmem:[%s1 + $0x154] sm:$0xf]
  %v125 = vld [vmem:[%s1 + $0x158] sm:$0xf]
  %v126 = vld [vmem:[%s1 + $0x15c] sm:$0xf]
  %v127 = vld [vmem:[%s1 + $0x160] sm:$0xf]
  %v128 = vld [vmem:[%s1 + $0x164] sm:$0xf]
  %v129 = vld [vmem:[%s1 + $0x168] sm:$0xf]
  %v130 = vld [vmem:[%s1 + $0x16c] sm:$0xf]
  %v131 = vld [vmem:[%s1 + $0x170] sm:$0xf]
  %v132 = vld [vmem:[%s1 + $0x174] sm:$0xf]
  %v133 = vld [vmem:[%s1 + $0x178] sm:$0xf]
  %v134 = vld [vmem:[%s1 + $0x17c] sm:$0xf]
  %v135 = vld [vmem:[%s1 + $0x180] sm:$0xf]
  %v136 = vld [vmem:[%s1 + $0x184] sm:$0xf]
  %v137 = vld [vmem:[%s1 + $0x188] sm:$0xf]
  %v138 = vld [vmem:[%s1 + $0x18c] sm:$0xf]
  %v139 = vld [vmem:[%s1 + $0x190] sm:$0xf]
  %v140 = vld [vmem:[%s1 + $0x194] sm:$0xf]
  %v141 = vld [vmem:[%s1 + $0x198] sm:$0xf]
  %v142 = vld [vmem:[%s1 + $0x19c] sm:$0xf]
  %v143 = vld [vmem:[%s1 + $0x1a0] sm:$0xf]
  %v144 = vld [vmem:[%s1 + $0x1a4] sm:$0xf]
  %v145 = vld [vmem:[%s1 + $0x1a8] sm:$0xf]
  %v146 = vld [vmem:[%s1 + $0x1ac] sm:$0xf]
  %v147 = vld [vmem:[%s1 + $0x1b0] sm:$0xf]
  %v148 = vld [vmem:[%s1 + $0x1b4] sm:$0xf]
  %v149 = vld [vmem:[%s1 + $0x1b8] sm:$0xf]
  %v150 = vld [vmem:[%s1 + $0x1bc] sm:$0xf]
  %v151 = vld [vmem:[%s1 + $0x1c0] sm:$0xf]
  %v152 = vld [vmem:[%s1 + $0x1c4] sm:$0xf]
  %v153 = vld [vmem:[%s1 + $0x1c8] sm:$0xf]
  %v154 = vld [vmem:[%s1 + $0x1cc] sm:$0xf]
  %v155 = vld [vmem:[%s1 + $0x1d0] sm:$0xf]
  %v156 = vld [vmem:[%s1 + $0x1d4] sm:$0xf]
  %v157 = vld [vmem:[%s1 + $0x1d8] sm:$0xf]
  %v158 = vld [vmem:[%s1 + $0x1dc] sm:$0xf]
  %v159 = vld [vmem:[%s1 + $0x1e0] sm:$0xf]
  %v160 = vld [vmem:[%s1 + $0x1e4] sm:$0xf]
  %v161 = vld [vmem:[%s1 + $0x1e8] sm:$0xf]
  %v162 = vld [vmem:[%s1 + $0x1ec] sm:$0xf]
  %v163 = vld [vmem:[%s1 + $0x1f0] sm:$0xf]
  %v164 = vld [vmem:[%s1 + $0x1f4] sm:$0xf]
  %v165 = vld [vmem:[%s1 + $0x1f8] sm:$0xf]
  %v166 = vld [vmem:[%s1 + $0x1fc] sm:$0xf]
  %v167 = vld [vmem:[%s1 + $0x200] sm:$0xf]
  %v168 = vld [vmem:[%s1 + $0x204] sm:$0xf]
  %v169 = vld [vmem:[%s1 + $0x208] sm:$0xf]
  %v170 = vld [vmem:[%s1 + $0x20c] sm:$0xf]
  %v171 = vld [vmem:[%s1 + $0x210] sm:$0xf]
  %v172 = vld [vmem:[%s1 + $0x214] sm:$0xf]
  %v173 = vld [vmem:[%s1 + $0x218] sm:$0xf]
  %v174 = vld [vmem:[%s1 + $0x21c] sm:$0xf]
  %v175 = vld [vmem:[%s1 + $0x220] sm:$0xf]
  %v176 = vld [vmem:[%s1 + $0x224] sm:$0xf]
  %v177 = vld [vmem:[%s1 + $0x228] sm:$0xf]
  %v178 = vld [vmem:[%s1 + $0x22c] sm:$0xf]
  %v179 = vld [vmem:[%s1 + $0x230] sm:$0xf]
  %v180 = vld [vmem:[%s1 + $0x234] sm:$0xf]
  %v181 = vld [vmem:[%s1 + $0x238] sm:$0xf]
  %v182 = vld [vmem:[%s1 + $0x23c] sm:$0xf]
  %v183 = vld [vmem:[%s1 + $0x240] sm:$0xf]
  %v184 = vld [vmem:[%s1 + $0x244] sm:$0xf]
  %v185 = vld [vmem:[%s1 + $0x248] sm:$0xf]
  %v186 = vld [vmem:[%s1 + $0x24c] sm:$0xf]
  %v187 = vld [vmem:[%s1 + $0x250] sm:$0xf]
  %v188 = vld [vmem:[%s1 + $0x254] sm:$0xf]
  %v189 = vld [vmem:[%s1 + $0x258] sm:$0xf]
  %v190 = vld [vmem:[%s1 + $0x25c] sm:$0xf]
  %v191 = vld [vmem:[%s1 + $0x260] sm:$0xf]
  %v192 = vld [vmem:[%s1 + $0x264] sm:$0xf]
  %v193 = vld [vmem:[%s1 + $0x268] sm:$0xf]
  %v194 = vld [vmem:[%s1 + $0x26c] sm:$0xf]
  %v195 = vld [vmem:[%s1 + $0x270] sm:$0xf]
  %v196 = vld [vmem:[%s1 + $0x274] sm:$0xf]
  %v197 = vld [vmem:[%s1 + $0x278] sm:$0xf]
  %v198 = vld [vmem:[%s1 + $0x27c] sm:$0xf]
  %v199 = vld [vmem:[%s1 + $0x280] sm:$0xf]
  %v200 = vld [vmem:[%s1 + $0x284] sm:$0xf]
  %v201 = vld [vmem:[%s1 + $0x288] sm:$0xf]
  %v202 = vld [vmem:[%s1 + $0x28c] sm:$0xf]
  %v203 = vld [vmem:[%s1 + $0x290] sm:$0xf]
  %v204 = vld [vmem:[%s1 + $0x294] sm:$0xf]
  %v205 = vld [vmem:[%s1 + $0x298] sm:$0xf]
  %v206 = vld [vmem:[%s1 + $0x29c] sm:$0xf]
  %v207 = vld [vmem:[%s1 + $0x2a0] sm:$0xf]
  %v208 = vld [vmem:[%s1 + $0x2a4] sm:$0xf]
  %v209 = vld [vmem:[%s1 + $0x2a8] sm:$0xf]
  %v210 = vld [vmem:[%s1 + $0x2ac] sm:$0xf]
  %v211 = vld [vmem:[%s1 + $0x2b0] sm:$0xf]
  %v212 = vld [vmem:[%s1 + $0x2b4] sm:$0xf]
  %v213 = vld [vmem:[%s1 + $0x2b8] sm:$0xf]
  %v214 = vld [vmem:[%s1 + $0x2bc] sm:$0xf]
  %v215 = vld [vmem:[%s1 + $0x2c0] sm:$0xf]
  %v216 = vld [vmem:[%s1 + $0x2c4] sm:$0xf]
  %v217 = vld [vmem:[%s1 + $0x2c8] sm:$0xf]
  %v218 = vld [vmem:[%s1 + $0x2cc] sm:$0xf]
  %v219 = vld [vmem:[%s1 + $0x2d0] sm:$0xf]
  %v220 = vld [vmem:[%s1 + $0x2d4] sm:$0xf]
  %v221 = vld [vmem:[%s1 + $0x2d8] sm:$0xf]
  %v222 = vld [vmem:[%s1 + $0x2dc] sm:$0xf]
  %v223 = vld [vmem:[%s1 + $0x2e0] sm:$0xf]
  %v224 = vld [vmem:[%s1 + $0x2e4] sm:$0xf]
  %v225 = vld [vmem:[%s1 + $0x2e8] sm:$0xf]
  %v226 = vld [vmem:[%s1 + $0x2ec] sm:$0xf]
  %v227 = vld [vmem:[%s1 + $0x2f0] sm:$0xf]
  %v228 = vld [vmem:[%s1 + $0x2f4] sm:$0xf]
  %v229 = vld [vmem:[%s1 + $0x2f8] sm:$0xf]
  %v230 = vld [vmem:[%s1 + $0x2fc] sm:$0xf]
  %v231 = vld [vmem:[%s1 + $0x300] sm:$0xf]
  %v232 = vld [vmem:[%s1 + $0x304] sm:$0xf]
  %v233 = vld [vmem:[%s1 + $0x308] sm:$0xf]
  %v234 = vld [vmem:[%s1 + $0x30c] sm:$0xf]
  %v235 = vld [vmem:[%s1 + $0x310] sm:$0xf]
  %v236 = vld [vmem:[%s1 + $0x314] sm:$0xf]
  %v237 = vld [vmem:[%s1 + $0x318] sm:$0xf]
  %v238 = vld [vmem:[%s1 + $0x31c] sm:$0xf]
  %v239 = vld [vmem:[%s1 + $0x320] sm:$0xf]
  %v240 = vld [vmem:[%s1 + $0x324] sm:$0xf]
  %v241 = vld [vmem:[%s1 + $0x328] sm:$0xf]
  %v242 = vld [vmem:[%s1 + $0x32c] sm:$0xf]
  %v243 = vld [vmem:[%s1 + $0x330] sm:$0xf]
  %v244 = vld [vmem:[%s1 + $0x334] sm:$0xf]
  %v245 = vld [vmem:[%s1 + $0x338] sm:$0xf]
  %v246 = vld [vmem:[%s1 + $0x33c] sm:$0xf]
  %v247 = vld [vmem:[%s1 + $0x340] sm:$0xf]
  %v248 = vld [vmem:[%s1 + $0x344] sm:$0xf]
  %v249 = vld [vmem:[%s1 + $0x348] sm:$0xf]
  %v250 = vld [vmem:[%s1 + $0x34c] sm:$0xf]
  %v251 = vld [vmem:[%s1 + $0x350] sm:$0xf]
  %v252 = vld [vmem:[%s1 + $0x354] sm:$0xf]
  %v253 = vld [vmem:[%s1 + $0x358] sm:$0xf]
  %v254 = vld [vmem:[%s1 + $0x35c] sm:$0xf]
  %v255 = vld [vmem:[%s1 + $0x360] sm:$0xf]
  %v256 = vld [vmem:[%s1 + $0x364] sm:$0xf]
  %v257 = vld [vmem:[%s1 + $0x368] sm:$0xf]
  %v258 = vld [vmem:[%s1 + $0x36c] sm:$0xf]
  %v259 = vld [vmem:[%s1 + $0x370] sm:$0xf]
  %v260 = vld [vmem:[%s1 + $0x374] sm:$0xf]
  %v261 = vld [vmem:[%s1 + $0x378] sm:$0xf]
  %v262 = vld [vmem:[%s1 + $0x37c] sm:$0xf]
  %v263 = vld [vmem:[%s1 + $0x380] sm:$0xf]
  %v264 = vld [vmem:[%s1 + $0x384] sm:$0xf]
  %v265 = vld [vmem:[%s1 + $0x388] sm:$0xf]
  %v266 = vld [vmem:[%s1 + $0x38c] sm:$0xf]
  %v267 = vld [vmem:[%s1 + $0x390] sm:$0xf]
  %v268 = vld [vmem:[%s1 + $0x394] sm:$0xf]
  %v269 = vld [vmem:[%s1 + $0x398] sm:$0xf]
  %v270 = vld [vmem:[%s1 + $0x39c] sm:$0xf]
  %v271 = vld [vmem:[%s1 + $0x3a0] sm:$0xf]
  %v272 = vld [vmem:[%s1 + $0x3a4] sm:$0xf]
  %v273 = vld [vmem:[%s1 + $0x3a8] sm:$0xf]
  %v274 = vld [vmem:[%s1 + $0x3ac] sm:$0xf]
  %v275 = vld [vmem:[%s1 + $0x3b0] sm:$0xf]
  %v276 = vld [vmem:[%s1 + $0x3b4] sm:$0xf]
  %v277 = vld [vmem:[%s1 + $0x3b8] sm:$0xf]
  %v278 = vld [vmem:[%s1 + $0x3bc] sm:$0xf]
  %v279 = vld [vmem:[%s1 + $0x3c0] sm:$0xf]
  %v280 = vld [vmem:[%s1 + $0x3c4] sm:$0xf]
  %v281 = vld [vmem:[%s1 + $0x3c8] sm:$0xf]
  %v282 = vld [vmem:[%s1 + $0x3cc] sm:$0xf]
  %v283 = vld [vmem:[%s1 + $0x3d0] sm:$0xf]
  %v284 = vld [vmem:[%s1 + $0x3d4] sm:$0xf]
  %v285 = vld [vmem:[%s1 + $0x3d8] sm:$0xf]
  %v286 = vld [vmem:[%s1 + $0x3dc] sm:$0xf]
  %v287 = vld [vmem:[%s1 + $0x3e0] sm:$0xf]
  %v288 = vld [vmem:[%s1 + $0x3e4] sm:$0xf]
  %v289 = vld [vmem:[%s1 + $0x3e8] sm:$0xf]
  %v290 = vld [vmem:[%s1 + $0x3ec] sm:$0xf]
  %v291 = vld [vmem:[%s1 + $0x3f0] sm:$0xf]
  %v292 = vld [vmem:[%s1 + $0x3f4] sm:$0xf]
  %v293 = vld [vmem:[%s1 + $0x3f8] sm:$0xf]
  %v294 = vld [vmem:[%s1 + $0x3fc] sm:$0xf]
  %v295 = vld [vmem:[%s2] sm:$0x1]
  %v297 = vlaneseq
  %v298 = vshrl.u32 %v297, 7
  %v299 = vsub.s32 0, %v298
  %v300 = vrot.slane %v295, %v299
  %v326 = vunpack.c.l.b16 %v15
  %v327 = vunpack.c.h.b16 %v15
  %v328 = vunpack.c.l.b16 %v16
  %v329 = vunpack.c.h.b16 %v16
  %v330 = vunpack.c.l.b16 %v17
  %v331 = vunpack.c.h.b16 %v17
  %v332 = vunpack.c.l.b16 %v18
  %v333 = vunpack.c.h.b16 %v18
  %v334 = vunpack.c.l.b16 %v19
  %v335 = vunpack.c.h.b16 %v19
  %v336 = vunpack.c.l.b16 %v20
  %v337 = vunpack.c.h.b16 %v20
  %v338 = vunpack.c.l.b16 %v21
  %v339 = vunpack.c.h.b16 %v21
  %v340 = vunpack.c.l.b16 %v22
  %v341 = vunpack.c.h.b16 %v22
  %v342 = vunpack.c.l.b16 %v23
  %v343 = vunpack.c.h.b16 %v23
  %v344 = vunpack.c.l.b16 %v24
  %v345 = vunpack.c.h.b16 %v24
  %v346 = vunpack.c.l.b16 %v25
  %v347 = vunpack.c.h.b16 %v25
  %v348 = vunpack.c.l.b16 %v26
  %v349 = vunpack.c.h.b16 %v26
  %v350 = vunpack.c.l.b16 %v27
  %v351 = vunpack.c.h.b16 %v27
  %v352 = vunpack.c.l.b16 %v28
  %v353 = vunpack.c.h.b16 %v28
  %v354 = vunpack.c.l.b16 %v29
  %v355 = vunpack.c.h.b16 %v29
  %v356 = vunpack.c.l.b16 %v30
  %v357 = vunpack.c.h.b16 %v30
  %v358 = vunpack.c.l.b16 %v31
  %v359 = vunpack.c.h.b16 %v31
  %v360 = vunpack.c.l.b16 %v32
  %v361 = vunpack.c.h.b16 %v32
  %v362 = vunpack.c.l.b16 %v33
  %v363 = vunpack.c.h.b16 %v33
  %v364 = vunpack.c.l.b16 %v34
  %v365 = vunpack.c.h.b16 %v34
  %v366 = vunpack.c.l.b16 %v35
  %v367 = vunpack.c.h.b16 %v35
  %v368 = vunpack.c.l.b16 %v36
  %v369 = vunpack.c.h.b16 %v36
  %v370 = vunpack.c.l.b16 %v37
  %v371 = vunpack.c.h.b16 %v37
  %v372 = vunpack.c.l.b16 %v38
  %v373 = vunpack.c.h.b16 %v38
  %v374 = vpack.c.b16 %v342, %v326
  %v375 = vpack.c.b16 %v343, %v327
  %v376 = vpack.c.b16 %v344, %v328
  %v377 = vpack.c.b16 %v345, %v329
  %v378 = vpack.c.b16 %v346, %v330
  %v379 = vpack.c.b16 %v347, %v331
  %v380 = vpack.c.b16 %v348, %v332
  %v381 = vpack.c.b16 %v349, %v333
  %v382 = vpack.c.b16 %v350, %v334
  %v383 = vpack.c.b16 %v351, %v335
  %v384 = vpack.c.b16 %v352, %v336
  %v385 = vpack.c.b16 %v353, %v337
  %v386 = vpack.c.b16 %v354, %v338
  %v387 = vpack.c.b16 %v355, %v339
  %v388 = vpack.c.b16 %v356, %v340
  %v389 = vpack.c.b16 %v357, %v341
  %v390 = vpack.c.b16 %v358, %v358
  %v391 = vpack.c.b16 %v359, %v359
  %v392 = vpack.c.b16 %v360, %v360
  %v393 = vpack.c.b16 %v361, %v361
  %v394 = vpack.c.b16 %v362, %v362
  %v395 = vpack.c.b16 %v363, %v363
  %v396 = vpack.c.b16 %v364, %v364
  %v397 = vpack.c.b16 %v365, %v365
  %v398 = vpack.c.b16 %v366, %v366
  %v399 = vpack.c.b16 %v367, %v367
  %v400 = vpack.c.b16 %v368, %v368
  %v401 = vpack.c.b16 %v369, %v369
  %v402 = vpack.c.b16 %v370, %v370
  %v403 = vpack.c.b16 %v371, %v371
  %v404 = vpack.c.b16 %v372, %v372
  %v405 = vpack.c.b16 %v373, %v373
  %v694 = vunpack.c.l.b16 %v39
  %v695 = vunpack.c.l.b16 %v40
  %v696 = vunpack.c.l.b16 %v41
  %v697 = vunpack.c.l.b16 %v42
  %v698 = vunpack.c.l.b16 %v43
  %v699 = vunpack.c.l.b16 %v44
  %v700 = vunpack.c.l.b16 %v45
  %v701 = vunpack.c.l.b16 %v46
  %v702 = vunpack.c.l.b16 %v47
  %v703 = vunpack.c.l.b16 %v48
  %v704 = vunpack.c.l.b16 %v49
  %v705 = vunpack.c.l.b16 %v50
  %v706 = vunpack.c.l.b16 %v51
  %v707 = vunpack.c.l.b16 %v52
  %v708 = vunpack.c.l.b16 %v53
  %v709 = vunpack.c.l.b16 %v54
  %v710 = vunpack.c.l.b16 %v55
  %v711 = vunpack.c.l.b16 %v56
  %v712 = vunpack.c.l.b16 %v57
  %v713 = vunpack.c.l.b16 %v58
  %v714 = vunpack.c.l.b16 %v59
  %v715 = vunpack.c.l.b16 %v60
  %v716 = vunpack.c.l.b16 %v61
  %v717 = vunpack.c.l.b16 %v62
  %v718 = vunpack.c.l.b16 %v63
  %v719 = vunpack.c.l.b16 %v64
  %v720 = vunpack.c.l.b16 %v65
  %v721 = vunpack.c.l.b16 %v66
  %v722 = vunpack.c.l.b16 %v67
  %v723 = vunpack.c.l.b16 %v68
  %v724 = vunpack.c.l.b16 %v69
  %v725 = vunpack.c.l.b16 %v70
  %v726 = vunpack.c.l.b16 %v71
  %v727 = vunpack.c.l.b16 %v72
  %v728 = vunpack.c.l.b16 %v73
  %v729 = vunpack.c.l.b16 %v74
  %v730 = vunpack.c.l.b16 %v75
  %v731 = vunpack.c.l.b16 %v76
  %v732 = vunpack.c.l.b16 %v77
  %v733 = vunpack.c.l.b16 %v78
  %v734 = vunpack.c.l.b16 %v79
  %v735 = vunpack.c.l.b16 %v80
  %v736 = vunpack.c.l.b16 %v81
  %v737 = vunpack.c.l.b16 %v82
  %v738 = vunpack.c.l.b16 %v83
  %v739 = vunpack.c.l.b16 %v84
  %v740 = vunpack.c.l.b16 %v85
  %v741 = vunpack.c.l.b16 %v86
  %v742 = vunpack.c.l.b16 %v87
  %v743 = vunpack.c.l.b16 %v88
  %v744 = vunpack.c.l.b16 %v89
  %v745 = vunpack.c.l.b16 %v90
  %v746 = vunpack.c.l.b16 %v91
  %v747 = vunpack.c.l.b16 %v92
  %v748 = vunpack.c.l.b16 %v93
  %v749 = vunpack.c.l.b16 %v94
  %v750 = vunpack.c.l.b16 %v95
  %v751 = vunpack.c.l.b16 %v96
  %v752 = vunpack.c.l.b16 %v97
  %v753 = vunpack.c.l.b16 %v98
  %v754 = vunpack.c.l.b16 %v99
  %v755 = vunpack.c.l.b16 %v100
  %v756 = vunpack.c.l.b16 %v101
  %v757 = vunpack.c.l.b16 %v102
  %v758 = vunpack.c.l.b16 %v103
  %v759 = vunpack.c.l.b16 %v104
  %v760 = vunpack.c.l.b16 %v105
  %v761 = vunpack.c.l.b16 %v106
  %v762 = vunpack.c.l.b16 %v107
  %v763 = vunpack.c.l.b16 %v108
  %v764 = vunpack.c.l.b16 %v109
  %v765 = vunpack.c.l.b16 %v110
  %v766 = vunpack.c.l.b16 %v111
  %v767 = vunpack.c.l.b16 %v112
  %v768 = vunpack.c.l.b16 %v113
  %v769 = vunpack.c.l.b16 %v114
  %v770 = vunpack.c.l.b16 %v115
  %v771 = vunpack.c.l.b16 %v116
  %v772 = vunpack.c.l.b16 %v117
  %v773 = vunpack.c.l.b16 %v118
  %v774 = vunpack.c.l.b16 %v119
  %v775 = vunpack.c.l.b16 %v120
  %v776 = vunpack.c.l.b16 %v121
  %v777 = vunpack.c.l.b16 %v122
  %v778 = vunpack.c.l.b16 %v123
  %v779 = vunpack.c.l.b16 %v124
  %v780 = vunpack.c.l.b16 %v125
  %v781 = vunpack.c.l.b16 %v126
  %v782 = vunpack.c.l.b16 %v127
  %v783 = vunpack.c.l.b16 %v128
  %v784 = vunpack.c.l.b16 %v129
  %v785 = vunpack.c.l.b16 %v130
  %v786 = vunpack.c.l.b16 %v131
  %v787 = vunpack.c.l.b16 %v132
  %v788 = vunpack.c.l.b16 %v133
  %v789 = vunpack.c.l.b16 %v134
  %v790 = vunpack.c.l.b16 %v135
  %v791 = vunpack.c.l.b16 %v136
  %v792 = vunpack.c.l.b16 %v137
  %v793 = vunpack.c.l.b16 %v138
  %v794 = vunpack.c.l.b16 %v139
  %v795 = vunpack.c.l.b16 %v140
  %v796 = vunpack.c.l.b16 %v141
  %v797 = vunpack.c.l.b16 %v142
  %v798 = vunpack.c.l.b16 %v143
  %v799 = vunpack.c.l.b16 %v144
  %v800 = vunpack.c.l.b16 %v145
  %v801 = vunpack.c.l.b16 %v146
  %v802 = vunpack.c.l.b16 %v147
  %v803 = vunpack.c.l.b16 %v148
  %v804 = vunpack.c.l.b16 %v149
  %v805 = vunpack.c.l.b16 %v150
  %v806 = vunpack.c.l.b16 %v151
  %v807 = vunpack.c.l.b16 %v152
  %v808 = vunpack.c.l.b16 %v153
  %v809 = vunpack.c.l.b16 %v154
  %v810 = vunpack.c.l.b16 %v155
  %v811 = vunpack.c.l.b16 %v156
  %v812 = vunpack.c.l.b16 %v157
  %v813 = vunpack.c.l.b16 %v158
  %v814 = vunpack.c.l.b16 %v159
  %v815 = vunpack.c.l.b16 %v160
  %v816 = vunpack.c.l.b16 %v161
  %v817 = vunpack.c.l.b16 %v162
  %v818 = vunpack.c.l.b16 %v163
  %v819 = vunpack.c.l.b16 %v164
  %v820 = vunpack.c.l.b16 %v165
  %v821 = vunpack.c.l.b16 %v166
  %v822 = vunpack.c.l.b16 %v167
  %v823 = vunpack.c.l.b16 %v168
  %v824 = vunpack.c.l.b16 %v169
  %v825 = vunpack.c.l.b16 %v170
  %v826 = vunpack.c.l.b16 %v171
  %v827 = vunpack.c.l.b16 %v172
  %v828 = vunpack.c.l.b16 %v173
  %v829 = vunpack.c.l.b16 %v174
  %v830 = vunpack.c.l.b16 %v175
  %v831 = vunpack.c.l.b16 %v176
  %v832 = vunpack.c.l.b16 %v177
  %v833 = vunpack.c.l.b16 %v178
  %v834 = vunpack.c.l.b16 %v179
  %v835 = vunpack.c.l.b16 %v180
  %v836 = vunpack.c.l.b16 %v181
  %v837 = vunpack.c.l.b16 %v182
  %v838 = vunpack.c.l.b16 %v183
  %v839 = vunpack.c.l.b16 %v184
  %v840 = vunpack.c.l.b16 %v185
  %v841 = vunpack.c.l.b16 %v186
  %v842 = vunpack.c.l.b16 %v187
  %v843 = vunpack.c.l.b16 %v188
  %v844 = vunpack.c.l.b16 %v189
  %v845 = vunpack.c.l.b16 %v190
  %v846 = vunpack.c.l.b16 %v191
  %v847 = vunpack.c.l.b16 %v192
  %v848 = vunpack.c.l.b16 %v193
  %v849 = vunpack.c.l.b16 %v194
  %v850 = vunpack.c.l.b16 %v195
  %v851 = vunpack.c.l.b16 %v196
  %v852 = vunpack.c.l.b16 %v197
  %v853 = vunpack.c.l.b16 %v198
  %v854 = vunpack.c.l.b16 %v199
  %v855 = vunpack.c.l.b16 %v200
  %v856 = vunpack.c.l.b16 %v201
  %v857 = vunpack.c.l.b16 %v202
  %v858 = vunpack.c.l.b16 %v203
  %v859 = vunpack.c.l.b16 %v204
  %v860 = vunpack.c.l.b16 %v205
  %v861 = vunpack.c.l.b16 %v206
  %v862 = vunpack.c.l.b16 %v207
  %v863 = vunpack.c.l.b16 %v208
  %v864 = vunpack.c.l.b16 %v209
  %v865 = vunpack.c.l.b16 %v210
  %v866 = vunpack.c.l.b16 %v211
  %v867 = vunpack.c.l.b16 %v212
  %v868 = vunpack.c.l.b16 %v213
  %v869 = vunpack.c.l.b16 %v214
  %v870 = vunpack.c.l.b16 %v215
  %v871 = vunpack.c.l.b16 %v216
  %v872 = vunpack.c.l.b16 %v217
  %v873 = vunpack.c.l.b16 %v218
  %v874 = vunpack.c.l.b16 %v219
  %v875 = vunpack.c.l.b16 %v220
  %v876 = vunpack.c.l.b16 %v221
  %v877 = vunpack.c.l.b16 %v222
  %v878 = vunpack.c.l.b16 %v223
  %v879 = vunpack.c.l.b16 %v224
  %v880 = vunpack.c.l.b16 %v225
  %v881 = vunpack.c.l.b16 %v226
  %v882 = vunpack.c.l.b16 %v227
  %v883 = vunpack.c.l.b16 %v228
  %v884 = vunpack.c.l.b16 %v229
  %v885 = vunpack.c.l.b16 %v230
  %v886 = vunpack.c.l.b16 %v231
  %v887 = vunpack.c.l.b16 %v232
  %v888 = vunpack.c.l.b16 %v233
  %v889 = vunpack.c.l.b16 %v234
  %v890 = vunpack.c.l.b16 %v235
  %v891 = vunpack.c.l.b16 %v236
  %v892 = vunpack.c.l.b16 %v237
  %v893 = vunpack.c.l.b16 %v238
  %v894 = vunpack.c.l.b16 %v239
  %v895 = vunpack.c.l.b16 %v240
  %v896 = vunpack.c.l.b16 %v241
  %v897 = vunpack.c.l.b16 %v242
  %v898 = vunpack.c.l.b16 %v243
  %v899 = vunpack.c.l.b16 %v244
  %v900 = vunpack.c.l.b16 %v245
  %v901 = vunpack.c.l.b16 %v246
  %v902 = vunpack.c.l.b16 %v247
  %v903 = vunpack.c.l.b16 %v248
  %v904 = vunpack.c.l.b16 %v249
  %v905 = vunpack.c.l.b16 %v250
  %v906 = vunpack.c.l.b16 %v251
  %v907 = vunpack.c.l.b16 %v252
  %v908 = vunpack.c.l.b16 %v253
  %v909 = vunpack.c.l.b16 %v254
  %v910 = vunpack.c.l.b16 %v255
  %v911 = vunpack.c.l.b16 %v256
  %v912 = vunpack.c.l.b16 %v257
  %v913 = vunpack.c.l.b16 %v258
  %v914 = vunpack.c.l.b16 %v259
  %v915 = vunpack.c.l.b16 %v260
  %v916 = vunpack.c.l.b16 %v261
  %v917 = vunpack.c.l.b16 %v262
  %v918 = vunpack.c.l.b16 %v263
  %v919 = vunpack.c.l.b16 %v264
  %v920 = vunpack.c.l.b16 %v265
  %v921 = vunpack.c.l.b16 %v266
  %v922 = vunpack.c.l.b16 %v267
  %v923 = vunpack.c.l.b16 %v268
  %v924 = vunpack.c.l.b16 %v269
  %v925 = vunpack.c.l.b16 %v270
  %v926 = vunpack.c.l.b16 %v271
  %v927 = vunpack.c.l.b16 %v272
  %v928 = vunpack.c.l.b16 %v273
  %v929 = vunpack.c.l.b16 %v274
  %v930 = vunpack.c.l.b16 %v275
  %v931 = vunpack.c.l.b16 %v276
  %v932 = vunpack.c.l.b16 %v277
  %v933 = vunpack.c.l.b16 %v278
  %v934 = vunpack.c.l.b16 %v279
  %v935 = vunpack.c.l.b16 %v280
  %v936 = vunpack.c.l.b16 %v281
  %v937 = vunpack.c.l.b16 %v282
  %v938 = vunpack.c.l.b16 %v283
  %v939 = vunpack.c.l.b16 %v284
  %v940 = vunpack.c.l.b16 %v285
  %v941 = vunpack.c.l.b16 %v286
  %v942 = vunpack.c.l.b16 %v287
  %v943 = vunpack.c.l.b16 %v288
  %v944 = vunpack.c.l.b16 %v289
  %v945 = vunpack.c.l.b16 %v290
  %v946 = vunpack.c.l.b16 %v291
  %v947 = vunpack.c.l.b16 %v292
  %v948 = vunpack.c.l.b16 %v293
  %v949 = vunpack.c.l.b16 %v294
  %v950 = vpack.c.b16 %v695, %v694
  %v951 = vpack.c.b16 %v697, %v696
  %v952 = vpack.c.b16 %v699, %v698
  %v953 = vpack.c.b16 %v701, %v700
  %v954 = vpack.c.b16 %v703, %v702
  %v955 = vpack.c.b16 %v705, %v704
  %v956 = vpack.c.b16 %v707, %v706
  %v957 = vpack.c.b16 %v709, %v708
  %v958 = vpack.c.b16 %v711, %v710
  %v959 = vpack.c.b16 %v713, %v712
  %v960 = vpack.c.b16 %v715, %v714
  %v961 = vpack.c.b16 %v717, %v716
  %v962 = vpack.c.b16 %v719, %v718
  %v963 = vpack.c.b16 %v721, %v720
  %v964 = vpack.c.b16 %v723, %v722
  %v965 = vpack.c.b16 %v725, %v724
  %v966 = vpack.c.b16 %v727, %v726
  %v967 = vpack.c.b16 %v729, %v728
  %v968 = vpack.c.b16 %v731, %v730
  %v969 = vpack.c.b16 %v733, %v732
  %v970 = vpack.c.b16 %v735, %v734
  %v971 = vpack.c.b16 %v737, %v736
  %v972 = vpack.c.b16 %v739, %v738
  %v973 = vpack.c.b16 %v741, %v740
  %v974 = vpack.c.b16 %v743, %v742
  %v975 = vpack.c.b16 %v745, %v744
  %v976 = vpack.c.b16 %v747, %v746
  %v977 = vpack.c.b16 %v749, %v748
  %v978 = vpack.c.b16 %v751, %v750
  %v979 = vpack.c.b16 %v753, %v752
  %v980 = vpack.c.b16 %v755, %v754
  %v981 = vpack.c.b16 %v757, %v756
  %v982 = vpack.c.b16 %v759, %v758
  %v983 = vpack.c.b16 %v761, %v760
  %v984 = vpack.c.b16 %v763, %v762
  %v985 = vpack.c.b16 %v765, %v764
  %v986 = vpack.c.b16 %v767, %v766
  %v987 = vpack.c.b16 %v769, %v768
  %v988 = vpack.c.b16 %v771, %v770
  %v989 = vpack.c.b16 %v773, %v772
  %v990 = vpack.c.b16 %v775, %v774
  %v991 = vpack.c.b16 %v777, %v776
  %v992 = vpack.c.b16 %v779, %v778
  %v993 = vpack.c.b16 %v781, %v780
  %v994 = vpack.c.b16 %v783, %v782
  %v995 = vpack.c.b16 %v785, %v784
  %v996 = vpack.c.b16 %v787, %v786
  %v997 = vpack.c.b16 %v789, %v788
  %v998 = vpack.c.b16 %v791, %v790
  %v999 = vpack.c.b16 %v793, %v792
  %v1000 = vpack.c.b16 %v795, %v794
  %v1001 = vpack.c.b16 %v797, %v796
  %v1002 = vpack.c.b16 %v799, %v798
  %v1003 = vpack.c.b16 %v801, %v800
  %v1004 = vpack.c.b16 %v803, %v802
  %v1005 = vpack.c.b16 %v805, %v804
  %v1006 = vpack.c.b16 %v807, %v806
  %v1007 = vpack.c.b16 %v809, %v808
  %v1008 = vpack.c.b16 %v811, %v810
  %v1009 = vpack.c.b16 %v813, %v812
  %v1010 = vpack.c.b16 %v815, %v814
  %v1011 = vpack.c.b16 %v817, %v816
  %v1012 = vpack.c.b16 %v819, %v818
  %v1013 = vpack.c.b16 %v821, %v820
  %v1014 = vpack.c.b16 %v823, %v822
  %v1015 = vpack.c.b16 %v825, %v824
  %v1016 = vpack.c.b16 %v827, %v826
  %v1017 = vpack.c.b16 %v829, %v828
  %v1018 = vpack.c.b16 %v831, %v830
  %v1019 = vpack.c.b16 %v833, %v832
  %v1020 = vpack.c.b16 %v835, %v834
  %v1021 = vpack.c.b16 %v837, %v836
  %v1022 = vpack.c.b16 %v839, %v838
  %v1023 = vpack.c.b16 %v841, %v840
  %v1024 = vpack.c.b16 %v843, %v842
  %v1025 = vpack.c.b16 %v845, %v844
  %v1026 = vpack.c.b16 %v847, %v846
  %v1027 = vpack.c.b16 %v849, %v848
  %v1028 = vpack.c.b16 %v851, %v850
  %v1029 = vpack.c.b16 %v853, %v852
  %v1030 = vpack.c.b16 %v855, %v854
  %v1031 = vpack.c.b16 %v857, %v856
  %v1032 = vpack.c.b16 %v859, %v858
  %v1033 = vpack.c.b16 %v861, %v860
  %v1034 = vpack.c.b16 %v863, %v862
  %v1035 = vpack.c.b16 %v865, %v864
  %v1036 = vpack.c.b16 %v867, %v866
  %v1037 = vpack.c.b16 %v869, %v868
  %v1038 = vpack.c.b16 %v871, %v870
  %v1039 = vpack.c.b16 %v873, %v872
  %v1040 = vpack.c.b16 %v875, %v874
  %v1041 = vpack.c.b16 %v877, %v876
  %v1042 = vpack.c.b16 %v879, %v878
  %v1043 = vpack.c.b16 %v881, %v880
  %v1044 = vpack.c.b16 %v883, %v882
  %v1045 = vpack.c.b16 %v885, %v884
  %v1046 = vpack.c.b16 %v887, %v886
  %v1047 = vpack.c.b16 %v889, %v888
  %v1048 = vpack.c.b16 %v891, %v890
  %v1049 = vpack.c.b16 %v893, %v892
  %v1050 = vpack.c.b16 %v895, %v894
  %v1051 = vpack.c.b16 %v897, %v896
  %v1052 = vpack.c.b16 %v899, %v898
  %v1053 = vpack.c.b16 %v901, %v900
  %v1054 = vpack.c.b16 %v903, %v902
  %v1055 = vpack.c.b16 %v905, %v904
  %v1056 = vpack.c.b16 %v907, %v906
  %v1057 = vpack.c.b16 %v909, %v908
  %v1058 = vpack.c.b16 %v911, %v910
  %v1059 = vpack.c.b16 %v913, %v912
  %v1060 = vpack.c.b16 %v915, %v914
  %v1061 = vpack.c.b16 %v917, %v916
  %v1062 = vpack.c.b16 %v919, %v918
  %v1063 = vpack.c.b16 %v921, %v920
  %v1064 = vpack.c.b16 %v923, %v922
  %v1065 = vpack.c.b16 %v925, %v924
  %v1066 = vpack.c.b16 %v927, %v926
  %v1067 = vpack.c.b16 %v929, %v928
  %v1068 = vpack.c.b16 %v931, %v930
  %v1069 = vpack.c.b16 %v933, %v932
  %v1070 = vpack.c.b16 %v935, %v934
  %v1071 = vpack.c.b16 %v937, %v936
  %v1072 = vpack.c.b16 %v939, %v938
  %v1073 = vpack.c.b16 %v941, %v940
  %v1074 = vpack.c.b16 %v943, %v942
  %v1075 = vpack.c.b16 %v945, %v944
  %v1076 = vpack.c.b16 %v947, %v946
  %v1077 = vpack.c.b16 %v949, %v948
  %1206 = vmatprep.subr.bf16.mxu0 0
  %1207 = vmatpush1.bf16.msra.mxu0 %v957
  %1208 = vmatprep.subr.bf16.mxu0 0
  %1209 = vmatpush1.bf16.msra.mxu0 %v956
  %1210 = vmatprep.subr.bf16.mxu0 0
  %1211 = vmatpush1.bf16.msra.mxu0 %v955
  %1212 = vmatprep.subr.bf16.mxu0 0
  %1213 = vmatpush1.bf16.msra.mxu0 %v954
  %1214 = vmatprep.subr.bf16.mxu0 0
  %1215 = vmatpush1.bf16.msra.mxu0 %v953
  %1216 = vmatprep.subr.bf16.mxu0 0
  %1217 = vmatpush1.bf16.msra.mxu0 %v952
  %1218 = vmatprep.subr.bf16.mxu0 0
  %1219 = vmatpush1.bf16.msra.mxu0 %v951
  %1220 = vmatprep.subr.bf16.mxu0 0
  %1221 = vmatpush1.bf16.msra.mxu0 %v950
  %1222 = vmatprep.subr.bf16.mxu0 0
  %1223 = vmatpush2.bf16.msra.mxu0 %v965
  %1224 = vmatprep.subr.bf16.mxu0 0
  %1225 = vmatpush2.bf16.msra.mxu0 %v964
  %1226 = vmatprep.subr.bf16.mxu0 0
  %1227 = vmatpush2.bf16.msra.mxu0 %v963
  %1228 = vmatprep.subr.bf16.mxu0 0
  %1229 = vmatpush2.bf16.msra.mxu0 %v962
  %1230 = vmatprep.subr.bf16.mxu0 0
  %1231 = vmatpush2.bf16.msra.mxu0 %v961
  %1232 = vmatprep.subr.bf16.mxu0 0
  %1233 = vmatpush2.bf16.msra.mxu0 %v960
  %1234 = vmatprep.subr.bf16.mxu0 0
  %1235 = vmatpush2.bf16.msra.mxu0 %v959
  %1236 = vmatprep.subr.bf16.mxu0 0
  %1237 = vmatpush2.bf16.msra.mxu0 %v958
  %1238 = vmatprep.mubr.bf16.mxu0 %v375
  %1239 = vmatmul.mubr.bf16.gmra.mxu0 %v374
  %v1240 = vpop.f32.mrf.mxu0
  %v1241 = vadd.f32 %v300, %v1240
  %v1242 = vpop.f32.mrf.mxu0
  %v1243 = vpop.f32.mrf.mxu0
  %v1244 = vadd.f32 %v300, %v1243
  %v1245 = vpop.f32.mrf.mxu0
  %1246 = vmatprep.mubr.bf16.mxu0 %v391
  %1247 = vmatmul.mubr.bf16.gmra.mxu0 %v390
  %v1248 = vpop.f32.mrf.mxu0
  %v1249 = vadd.f32 %v300, %v1248
  %v1250 = vpop.f32.mrf.mxu0
  %v1251 = vpop.f32.mrf.mxu0
  %v1252 = vpop.f32.mrf.mxu0
  %1253 = vdwg.mxu0
  %1254 = vmatprep.subr.bf16.mxu0 0
  %1255 = vmatpush1.bf16.msra.mxu0 %v973
  %1256 = vmatprep.subr.bf16.mxu0 0
  %1257 = vmatpush1.bf16.msra.mxu0 %v972
  %1258 = vmatprep.subr.bf16.mxu0 0
  %1259 = vmatpush1.bf16.msra.mxu0 %v971
  %1260 = vmatprep.subr.bf16.mxu0 0
  %1261 = vmatpush1.bf16.msra.mxu0 %v970
  %1262 = vmatprep.subr.bf16.mxu0 0
  %1263 = vmatpush1.bf16.msra.mxu0 %v969
  %1264 = vmatprep.subr.bf16.mxu0 0
  %1265 = vmatpush1.bf16.msra.mxu0 %v968
  %1266 = vmatprep.subr.bf16.mxu0 0
  %1267 = vmatpush1.bf16.msra.mxu0 %v967
  %1268 = vmatprep.subr.bf16.mxu0 0
  %1269 = vmatpush1.bf16.msra.mxu0 %v966
  %1270 = vmatprep.subr.bf16.mxu0 0
  %1271 = vmatpush2.bf16.msra.mxu0 %v981
  %1272 = vmatprep.subr.bf16.mxu0 0
  %1273 = vmatpush2.bf16.msra.mxu0 %v980
  %1274 = vmatprep.subr.bf16.mxu0 0
  %1275 = vmatpush2.bf16.msra.mxu0 %v979
  %1276 = vmatprep.subr.bf16.mxu0 0
  %1277 = vmatpush2.bf16.msra.mxu0 %v978
  %1278 = vmatprep.subr.bf16.mxu0 0
  %1279 = vmatpush2.bf16.msra.mxu0 %v977
  %1280 = vmatprep.subr.bf16.mxu0 0
  %1281 = vmatpush2.bf16.msra.mxu0 %v976
  %1282 = vmatprep.subr.bf16.mxu0 0
  %1283 = vmatpush2.bf16.msra.mxu0 %v975
  %1284 = vmatprep.subr.bf16.mxu0 0
  %1285 = vmatpush2.bf16.msra.mxu0 %v974
  %1286 = vmatprep.mubr.bf16.mxu0 %v377
  %1287 = vmatmul.mubr.bf16.gmra.mxu0 %v376
  %v1288 = vpop.f32.mrf.mxu0
  %v1289 = vadd.f32 %v1241, %v1288
  %v1290 = vpop.f32.mrf.mxu0
  %v1291 = vpop.f32.mrf.mxu0
  %v1292 = vadd.f32 %v1244, %v1291
  %v1293 = vpop.f32.mrf.mxu0
  %1294 = vmatprep.mubr.bf16.mxu0 %v393
  %1295 = vmatmul.mubr.bf16.gmra.mxu0 %v392
  %v1296 = vpop.f32.mrf.mxu0
  %v1297 = vadd.f32 %v1249, %v1296
  %v1298 = vpop.f32.mrf.mxu0
  %v1299 = vpop.f32.mrf.mxu0
  %v1300 = vpop.f32.mrf.mxu0
  %1301 = vdwg.mxu0
  %1302 = vmatprep.subr.bf16.mxu0 0
  %1303 = vmatpush1.bf16.msra.mxu0 %v989
  %1304 = vmatprep.subr.bf16.mxu0 0
  %1305 = vmatpush1.bf16.msra.mxu0 %v988
  %1306 = vmatprep.subr.bf16.mxu0 0
  %1307 = vmatpush1.bf16.msra.mxu0 %v987
  %1308 = vmatprep.subr.bf16.mxu0 0
  %1309 = vmatpush1.bf16.msra.mxu0 %v986
  %1310 = vmatprep.subr.bf16.mxu0 0
  %1311 = vmatpush1.bf16.msra.mxu0 %v985
  %1312 = vmatprep.subr.bf16.mxu0 0
  %1313 = vmatpush1.bf16.msra.mxu0 %v984
  %1314 = vmatprep.subr.bf16.mxu0 0
  %1315 = vmatpush1.bf16.msra.mxu0 %v983
  %1316 = vmatprep.subr.bf16.mxu0 0
  %1317 = vmatpush1.bf16.msra.mxu0 %v982
  %1318 = vmatprep.subr.bf16.mxu0 0
  %1319 = vmatpush2.bf16.msra.mxu0 %v997
  %1320 = vmatprep.subr.bf16.mxu0 0
  %1321 = vmatpush2.bf16.msra.mxu0 %v996
  %1322 = vmatprep.subr.bf16.mxu0 0
  %1323 = vmatpush2.bf16.msra.mxu0 %v995
  %1324 = vmatprep.subr.bf16.mxu0 0
  %1325 = vmatpush2.bf16.msra.mxu0 %v994
  %1326 = vmatprep.subr.bf16.mxu0 0
  %1327 = vmatpush2.bf16.msra.mxu0 %v993
  %1328 = vmatprep.subr.bf16.mxu0 0
  %1329 = vmatpush2.bf16.msra.mxu0 %v992
  %1330 = vmatprep.subr.bf16.mxu0 0
  %1331 = vmatpush2.bf16.msra.mxu0 %v991
  %1332 = vmatprep.subr.bf16.mxu0 0
  %1333 = vmatpush2.bf16.msra.mxu0 %v990
  %1334 = vmatprep.mubr.bf16.mxu0 %v379
  %1335 = vmatmul.mubr.bf16.gmra.mxu0 %v378
  %v1336 = vpop.f32.mrf.mxu0
  %v1337 = vadd.f32 %v1289, %v1336
  %v1338 = vpop.f32.mrf.mxu0
  %v1339 = vpop.f32.mrf.mxu0
  %v1340 = vadd.f32 %v1292, %v1339
  %v1341 = vpop.f32.mrf.mxu0
  %1342 = vmatprep.mubr.bf16.mxu0 %v395
  %1343 = vmatmul.mubr.bf16.gmra.mxu0 %v394
  %v1344 = vpop.f32.mrf.mxu0
  %v1345 = vadd.f32 %v1297, %v1344
  %v1346 = vpop.f32.mrf.mxu0
  %v1347 = vpop.f32.mrf.mxu0
  %v1348 = vpop.f32.mrf.mxu0
  %1349 = vdwg.mxu0
  %1350 = vmatprep.subr.bf16.mxu0 0
  %1351 = vmatpush1.bf16.msra.mxu0 %v1005
  %1352 = vmatprep.subr.bf16.mxu0 0
  %1353 = vmatpush1.bf16.msra.mxu0 %v1004
  %1354 = vmatprep.subr.bf16.mxu0 0
  %1355 = vmatpush1.bf16.msra.mxu0 %v1003
  %1356 = vmatprep.subr.bf16.mxu0 0
  %1357 = vmatpush1.bf16.msra.mxu0 %v1002
  %1358 = vmatprep.subr.bf16.mxu0 0
  %1359 = vmatpush1.bf16.msra.mxu0 %v1001
  %1360 = vmatprep.subr.bf16.mxu0 0
  %1361 = vmatpush1.bf16.msra.mxu0 %v1000
  %1362 = vmatprep.subr.bf16.mxu0 0
  %1363 = vmatpush1.bf16.msra.mxu0 %v999
  %1364 = vmatprep.subr.bf16.mxu0 0
  %1365 = vmatpush1.bf16.msra.mxu0 %v998
  %1366 = vmatprep.subr.bf16.mxu0 0
  %1367 = vmatpush2.bf16.msra.mxu0 %v1013
  %1368 = vmatprep.subr.bf16.mxu0 0
  %1369 = vmatpush2.bf16.msra.mxu0 %v1012
  %1370 = vmatprep.subr.bf16.mxu0 0
  %1371 = vmatpush2.bf16.msra.mxu0 %v1011
  %1372 = vmatprep.subr.bf16.mxu0 0
  %1373 = vmatpush2.bf16.msra.mxu0 %v1010
  %1374 = vmatprep.subr.bf16.mxu0 0
  %1375 = vmatpush2.bf16.msra.mxu0 %v1009
  %1376 = vmatprep.subr.bf16.mxu0 0
  %1377 = vmatpush2.bf16.msra.mxu0 %v1008
  %1378 = vmatprep.subr.bf16.mxu0 0
  %1379 = vmatpush2.bf16.msra.mxu0 %v1007
  %1380 = vmatprep.subr.bf16.mxu0 0
  %1381 = vmatpush2.bf16.msra.mxu0 %v1006
  %1382 = vmatprep.mubr.bf16.mxu0 %v381
  %1383 = vmatmul.mubr.bf16.gmra.mxu0 %v380
  %v1384 = vpop.f32.mrf.mxu0
  %v1385 = vadd.f32 %v1337, %v1384
  %v1386 = vpop.f32.mrf.mxu0
  %v1387 = vpop.f32.mrf.mxu0
  %v1388 = vadd.f32 %v1340, %v1387
  %v1389 = vpop.f32.mrf.mxu0
  %1390 = vmatprep.mubr.bf16.mxu0 %v397
  %1391 = vmatmul.mubr.bf16.gmra.mxu0 %v396
  %v1392 = vpop.f32.mrf.mxu0
  %v1393 = vadd.f32 %v1345, %v1392
  %v1394 = vpop.f32.mrf.mxu0
  %v1395 = vpop.f32.mrf.mxu0
  %v1396 = vpop.f32.mrf.mxu0
  %1397 = vdwg.mxu0
  %1398 = vmatprep.subr.bf16.mxu0 0
  %1399 = vmatpush1.bf16.msra.mxu0 %v1021
  %1400 = vmatprep.subr.bf16.mxu0 0
  %1401 = vmatpush1.bf16.msra.mxu0 %v1020
  %1402 = vmatprep.subr.bf16.mxu0 0
  %1403 = vmatpush1.bf16.msra.mxu0 %v1019
  %1404 = vmatprep.subr.bf16.mxu0 0
  %1405 = vmatpush1.bf16.msra.mxu0 %v1018
  %1406 = vmatprep.subr.bf16.mxu0 0
  %1407 = vmatpush1.bf16.msra.mxu0 %v1017
  %1408 = vmatprep.subr.bf16.mxu0 0
  %1409 = vmatpush1.bf16.msra.mxu0 %v1016
  %1410 = vmatprep.subr.bf16.mxu0 0
  %1411 = vmatpush1.bf16.msra.mxu0 %v1015
  %1412 = vmatprep.subr.bf16.mxu0 0
  %1413 = vmatpush1.bf16.msra.mxu0 %v1014
  %1414 = vmatprep.subr.bf16.mxu0 0
  %1415 = vmatpush2.bf16.msra.mxu0 %v1029
  %1416 = vmatprep.subr.bf16.mxu0 0
  %1417 = vmatpush2.bf16.msra.mxu0 %v1028
  %1418 = vmatprep.subr.bf16.mxu0 0
  %1419 = vmatpush2.bf16.msra.mxu0 %v1027
  %1420 = vmatprep.subr.bf16.mxu0 0
  %1421 = vmatpush2.bf16.msra.mxu0 %v1026
  %1422 = vmatprep.subr.bf16.mxu0 0
  %1423 = vmatpush2.bf16.msra.mxu0 %v1025
  %1424 = vmatprep.subr.bf16.mxu0 0
  %1425 = vmatpush2.bf16.msra.mxu0 %v1024
  %1426 = vmatprep.subr.bf16.mxu0 0
  %1427 = vmatpush2.bf16.msra.mxu0 %v1023
  %1428 = vmatprep.subr.bf16.mxu0 0
  %1429 = vmatpush2.bf16.msra.mxu0 %v1022
  %1430 = vmatprep.mubr.bf16.mxu0 %v383
  %1431 = vmatmul.mubr.bf16.gmra.mxu0 %v382
  %v1432 = vpop.f32.mrf.mxu0
  %v1433 = vadd.f32 %v1385, %v1432
  %v1434 = vpop.f32.mrf.mxu0
  %v1435 = vpop.f32.mrf.mxu0
  %v1436 = vadd.f32 %v1388, %v1435
  %v1437 = vpop.f32.mrf.mxu0
  %1438 = vmatprep.mubr.bf16.mxu0 %v399
  %1439 = vmatmul.mubr.bf16.gmra.mxu0 %v398
  %v1440 = vpop.f32.mrf.mxu0
  %v1441 = vadd.f32 %v1393, %v1440
  %v1442 = vpop.f32.mrf.mxu0
  %v1443 = vpop.f32.mrf.mxu0
  %v1444 = vpop.f32.mrf.mxu0
  %1445 = vdwg.mxu0
  %1446 = vmatprep.subr.bf16.mxu0 0
  %1447 = vmatpush1.bf16.msra.mxu0 %v1037
  %1448 = vmatprep.subr.bf16.mxu0 0
  %1449 = vmatpush1.bf16.msra.mxu0 %v1036
  %1450 = vmatprep.subr.bf16.mxu0 0
  %1451 = vmatpush1.bf16.msra.mxu0 %v1035
  %1452 = vmatprep.subr.bf16.mxu0 0
  %1453 = vmatpush1.bf16.msra.mxu0 %v1034
  %1454 = vmatprep.subr.bf16.mxu0 0
  %1455 = vmatpush1.bf16.msra.mxu0 %v1033
  %1456 = vmatprep.subr.bf16.mxu0 0
  %1457 = vmatpush1.bf16.msra.mxu0 %v1032
  %1458 = vmatprep.subr.bf16.mxu0 0
  %1459 = vmatpush1.bf16.msra.mxu0 %v1031
  %1460 = vmatprep.subr.bf16.mxu0 0
  %1461 = vmatpush1.bf16.msra.mxu0 %v1030
  %1462 = vmatprep.subr.bf16.mxu0 0
  %1463 = vmatpush2.bf16.msra.mxu0 %v1045
  %1464 = vmatprep.subr.bf16.mxu0 0
  %1465 = vmatpush2.bf16.msra.mxu0 %v1044
  %1466 = vmatprep.subr.bf16.mxu0 0
  %1467 = vmatpush2.bf16.msra.mxu0 %v1043
  %1468 = vmatprep.subr.bf16.mxu0 0
  %1469 = vmatpush2.bf16.msra.mxu0 %v1042
  %1470 = vmatprep.subr.bf16.mxu0 0
  %1471 = vmatpush2.bf16.msra.mxu0 %v1041
  %1472 = vmatprep.subr.bf16.mxu0 0
  %1473 = vmatpush2.bf16.msra.mxu0 %v1040
  %1474 = vmatprep.subr.bf16.mxu0 0
  %1475 = vmatpush2.bf16.msra.mxu0 %v1039
  %1476 = vmatprep.subr.bf16.mxu0 0
  %1477 = vmatpush2.bf16.msra.mxu0 %v1038
  %1478 = vmatprep.mubr.bf16.mxu0 %v385
  %1479 = vmatmul.mubr.bf16.gmra.mxu0 %v384
  %v1480 = vpop.f32.mrf.mxu0
  %v1481 = vadd.f32 %v1433, %v1480
  %v1482 = vpop.f32.mrf.mxu0
  %v1483 = vpop.f32.mrf.mxu0
  %v1484 = vadd.f32 %v1436, %v1483
  %v1485 = vpop.f32.mrf.mxu0
  %1486 = vmatprep.mubr.bf16.mxu0 %v401
  %1487 = vmatmul.mubr.bf16.gmra.mxu0 %v400
  %v1488 = vpop.f32.mrf.mxu0
  %v1489 = vadd.f32 %v1441, %v1488
  %v1490 = vpop.f32.mrf.mxu0
  %v1491 = vpop.f32.mrf.mxu0
  %v1492 = vpop.f32.mrf.mxu0
  %1493 = vdwg.mxu0
  %1494 = vmatprep.subr.bf16.mxu0 0
  %1495 = vmatpush1.bf16.msra.mxu0 %v1053
  %1496 = vmatprep.subr.bf16.mxu0 0
  %1497 = vmatpush1.bf16.msra.mxu0 %v1052
  %1498 = vmatprep.subr.bf16.mxu0 0
  %1499 = vmatpush1.bf16.msra.mxu0 %v1051
  %1500 = vmatprep.subr.bf16.mxu0 0
  %1501 = vmatpush1.bf16.msra.mxu0 %v1050
  %1502 = vmatprep.subr.bf16.mxu0 0
  %1503 = vmatpush1.bf16.msra.mxu0 %v1049
  %1504 = vmatprep.subr.bf16.mxu0 0
  %1505 = vmatpush1.bf16.msra.mxu0 %v1048
  %1506 = vmatprep.subr.bf16.mxu0 0
  %1507 = vmatpush1.bf16.msra.mxu0 %v1047
  %1508 = vmatprep.subr.bf16.mxu0 0
  %1509 = vmatpush1.bf16.msra.mxu0 %v1046
  %1510 = vmatprep.subr.bf16.mxu0 0
  %1511 = vmatpush2.bf16.msra.mxu0 %v1061
  %1512 = vmatprep.subr.bf16.mxu0 0
  %1513 = vmatpush2.bf16.msra.mxu0 %v1060
  %1514 = vmatprep.subr.bf16.mxu0 0
  %1515 = vmatpush2.bf16.msra.mxu0 %v1059
  %1516 = vmatprep.subr.bf16.mxu0 0
  %1517 = vmatpush2.bf16.msra.mxu0 %v1058
  %1518 = vmatprep.subr.bf16.mxu0 0
  %1519 = vmatpush2.bf16.msra.mxu0 %v1057
  %1520 = vmatprep.subr.bf16.mxu0 0
  %1521 = vmatpush2.bf16.msra.mxu0 %v1056
  %1522 = vmatprep.subr.bf16.mxu0 0
  %1523 = vmatpush2.bf16.msra.mxu0 %v1055
  %1524 = vmatprep.subr.bf16.mxu0 0
  %1525 = vmatpush2.bf16.msra.mxu0 %v1054
  %1526 = vmatprep.mubr.bf16.mxu0 %v387
  %1527 = vmatmul.mubr.bf16.gmra.mxu0 %v386
  %v1528 = vpop.f32.mrf.mxu0
  %v1529 = vadd.f32 %v1481, %v1528
  %v1530 = vpop.f32.mrf.mxu0
  %v1531 = vpop.f32.mrf.mxu0
  %v1532 = vadd.f32 %v1484, %v1531
  %v1533 = vpop.f32.mrf.mxu0
  %1534 = vmatprep.mubr.bf16.mxu0 %v403
  %1535 = vmatmul.mubr.bf16.gmra.mxu0 %v402
  %v1536 = vpop.f32.mrf.mxu0
  %v1537 = vadd.f32 %v1489, %v1536
  %v1538 = vpop.f32.mrf.mxu0
  %v1539 = vpop.f32.mrf.mxu0
  %v1540 = vpop.f32.mrf.mxu0
  %1541 = vdwg.mxu0
  %1542 = vmatprep.subr.bf16.mxu0 0
  %1543 = vmatpush1.bf16.msra.mxu0 %v1069
  %1544 = vmatprep.subr.bf16.mxu0 0
  %1545 = vmatpush1.bf16.msra.mxu0 %v1068
  %1546 = vmatprep.subr.bf16.mxu0 0
  %1547 = vmatpush1.bf16.msra.mxu0 %v1067
  %1548 = vmatprep.subr.bf16.mxu0 0
  %1549 = vmatpush1.bf16.msra.mxu0 %v1066
  %1550 = vmatprep.subr.bf16.mxu0 0
  %1551 = vmatpush1.bf16.msra.mxu0 %v1065
  %1552 = vmatprep.subr.bf16.mxu0 0
  %1553 = vmatpush1.bf16.msra.mxu0 %v1064
  %1554 = vmatprep.subr.bf16.mxu0 0
  %1555 = vmatpush1.bf16.msra.mxu0 %v1063
  %1556 = vmatprep.subr.bf16.mxu0 0
  %1557 = vmatpush1.bf16.msra.mxu0 %v1062
  %1558 = vmatprep.subr.bf16.mxu0 0
  %1559 = vmatpush2.bf16.msra.mxu0 %v1077
  %1560 = vmatprep.subr.bf16.mxu0 0
  %1561 = vmatpush2.bf16.msra.mxu0 %v1076
  %1562 = vmatprep.subr.bf16.mxu0 0
  %1563 = vmatpush2.bf16.msra.mxu0 %v1075
  %1564 = vmatprep.subr.bf16.mxu0 0
  %1565 = vmatpush2.bf16.msra.mxu0 %v1074
  %1566 = vmatprep.subr.bf16.mxu0 0
  %1567 = vmatpush2.bf16.msra.mxu0 %v1073
  %1568 = vmatprep.subr.bf16.mxu0 0
  %1569 = vmatpush2.bf16.msra.mxu0 %v1072
  %1570 = vmatprep.subr.bf16.mxu0 0
  %1571 = vmatpush2.bf16.msra.mxu0 %v1071
  %1572 = vmatprep.subr.bf16.mxu0 0
  %1573 = vmatpush2.bf16.msra.mxu0 %v1070
  %1574 = vmatprep.mubr.bf16.mxu0 %v389
  %1575 = vmatmul.mubr.bf16.gmra.mxu0 %v388
  %v1576 = vpop.f32.mrf.mxu0
  %v1577 = vadd.f32 %v1529, %v1576
  %v1578 = vpop.f32.mrf.mxu0
  %v1579 = vpop.f32.mrf.mxu0
  %v1580 = vadd.f32 %v1532, %v1579
  %v1581 = vpop.f32.mrf.mxu0
  %1582 = vmatprep.mubr.bf16.mxu0 %v405
  %1583 = vmatmul.mubr.bf16.gmra.mxu0 %v404
  %v1584 = vpop.f32.mrf.mxu0
  %v1585 = vadd.f32 %v1537, %v1584
  %v1586 = vpop.f32.mrf.mxu0
  %v1587 = vpop.f32.mrf.mxu0
  %v1588 = vpop.f32.mrf.mxu0
  %1589 = vdwg.mxu0
  %v1590 = vmul.f32 %v1577, 0.01
  %v1591 = vmul.f32 %v1580, 0.01
  %v1592 = vmul.f32 %v1585, 0.01
  %v1593 = vmax.f32 %v1577, %v1590
  %v1594 = vmax.f32 %v1580, %v1591
  %v1595 = vmax.f32 %v1585, %v1592
  %v1596 = vpack.c.bf16 %v1594, %v1593
  %v1597 = vpack.c.bf16 %v1595, %v1595
  %v1600 = vunpack.c.l.b16 %v1596
  %v1601 = vunpack.c.h.b16 %v1596
  %v1602 = vunpack.c.l.b16 %v1597
  %v1603 = vpack.c.b16 %v1600, %v1600
  %v1604 = vpack.c.b16 %v1601, %v1601
  %v1605 = vpack.c.b16 %v1602, %v1602
  %1609 = vst [vmem:[%s3] sm:$0xf] %v1603
  %1610 = vst [vmem:[%s3 + $0x4] sm:$0xf] %v1604
  %1611 = vst [vmem:[%s3 + $0x8] sm:$0x1] %v1605
  // Predicated region
  $region14: #{a2c_forward.6} parent=0 // pred_check
    _
  $region15: #{a2c_forward.6} parent=0 // pred_check_branch
    %1613 = sbr.rel (0) target = $region17
  $region16: #{a2c_forward.6} parent=0 // pred_region
    _
  $region17: #{a2c_forward.6} parent=0 // pred_fallthru
    _
  // Predicated region
  $region18: #{a2c_forward.6} parent=0 // pred_check
    _
  $region19: #{a2c_forward.6} parent=0 // pred_check_branch
    %1615 = sbr.rel (0) target = $region21
  $region20: #{a2c_forward.6} parent=0 // pred_region
    _
  $region21: #{a2c_forward.6} parent=0 // pred_fallthru
    _

// kernel: a2c_forward.7
$region0: #{a2c_forward.7}
  #allocation0 [shape = 'u32[]', space=smem, size = 0x4, offset = 0x4, fixed_abs, tag = 'smem constant byte address 0x4 - core index']
  #allocation1 [shape = 'u32[144,128]{1,0:T(1,128)}', space=vmem, size = 0x12000, scoped, tag = 'internal scratch']
  %s0 = inlined_call_operand.vmem [shape: bf16[2,1152], index: 0, kind: input, shape index: {}]
  %s1 = inlined_call_operand.vmem [shape: bf16[1152,128], index: 1, kind: input, shape index: {}]
  %s2 = inlined_call_operand.vmem [shape: f32[1,128], index: 2, kind: input, shape index: {}]
  %s3 = inlined_call_operand.vmem [shape: bf16[2,128], index: 3, kind: output, shape index: {}]
  %s4 = sld [smem:[#allocation0]]
  $region22: #{a2c_forward.7} parent=0
    _
  %s6 = ssub.s32 1, %s4
  %s7 = scalar_select 0, %s6, %s4
  // Predicated region
  $region2: #{a2c_forward.7} parent=0 // pred_check
    _
  $region3: #{a2c_forward.7} parent=0 // pred_check_branch
    %9 = sbr.rel (0) target = $region5
  $region4: #{a2c_forward.7} parent=0 // pred_region
    _
  $region5: #{a2c_forward.7} parent=0 // pred_fallthru
    _
  // Predicated region
  $region6: #{a2c_forward.7} parent=0 // pred_check
    _
  $region7: #{a2c_forward.7} parent=0 // pred_check_branch
    %11 = sbr.rel (0) target = $region9
  $region8: #{a2c_forward.7} parent=0 // pred_region
    _
  $region9: #{a2c_forward.7} parent=0 // pred_fallthru
    _
  // Predicated region
  $region10: #{a2c_forward.7} parent=0 // pred_check
    _
  $region11: #{a2c_forward.7} parent=0 // pred_check_branch
    %13 = sbr.rel (0) target = $region13
  $region12: #{a2c_forward.7} parent=0 // pred_region
    _
  $region13: #{a2c_forward.7} parent=0 // pred_fallthru
    _
  %v15 = vld [vmem:[%s0] sm:$0xff]
  %v16 = vld [vmem:[%s0 + $0x8] sm:$0x1]
  %v17 = vld [vmem:[%s1] sm:$0xf]
  %v18 = vld [vmem:[%s1 + $0x4] sm:$0xf]
  %v19 = vld [vmem:[%s1 + $0x8] sm:$0xf]
  %v20 = vld [vmem:[%s1 + $0xc] sm:$0xf]
  %v21 = vld [vmem:[%s1 + $0x10] sm:$0xf]
  %v22 = vld [vmem:[%s1 + $0x14] sm:$0xf]
  %v23 = vld [vmem:[%s1 + $0x18] sm:$0xf]
  %v24 = vld [vmem:[%s1 + $0x1c] sm:$0xf]
  %v25 = vld [vmem:[%s1 + $0x20] sm:$0xf]
  %v26 = vld [vmem:[%s1 + $0x24] sm:$0xf]
  %v27 = vld [vmem:[%s1 + $0x28] sm:$0xf]
  %v28 = vld [vmem:[%s1 + $0x2c] sm:$0xf]
  %v29 = vld [vmem:[%s1 + $0x30] sm:$0xf]
  %v30 = vld [vmem:[%s1 + $0x34] sm:$0xf]
  %v31 = vld [vmem:[%s1 + $0x38] sm:$0xf]
  %v32 = vld [vmem:[%s1 + $0x3c] sm:$0xf]
  %v33 = vld [vmem:[%s1 + $0x40] sm:$0xf]
  %v34 = vld [vmem:[%s1 + $0x44] sm:$0xf]
  %v35 = vld [vmem:[%s1 + $0x48] sm:$0xf]
  %v36 = vld [vmem:[%s1 + $0x4c] sm:$0xf]
  %v37 = vld [vmem:[%s1 + $0x50] sm:$0xf]
  %v38 = vld [vmem:[%s1 + $0x54] sm:$0xf]
  %v39 = vld [vmem:[%s1 + $0x58] sm:$0xf]
  %v40 = vld [vmem:[%s1 + $0x5c] sm:$0xf]
  %v41 = vld [vmem:[%s1 + $0x60] sm:$0xf]
  %v42 = vld [vmem:[%s1 + $0x64] sm:$0xf]
  %v43 = vld [vmem:[%s1 + $0x68] sm:$0xf]
  %v44 = vld [vmem:[%s1 + $0x6c] sm:$0xf]
  %v45 = vld [vmem:[%s1 + $0x70] sm:$0xf]
  %v46 = vld [vmem:[%s1 + $0x74] sm:$0xf]
  %v47 = vld [vmem:[%s1 + $0x78] sm:$0xf]
  %v48 = vld [vmem:[%s1 + $0x7c] sm:$0xf]
  %v49 = vld [vmem:[%s1 + $0x80] sm:$0xf]
  %v50 = vld [vmem:[%s1 + $0x84] sm:$0xf]
  %v51 = vld [vmem:[%s1 + $0x88] sm:$0xf]
  %v52 = vld [vmem:[%s1 + $0x8c] sm:$0xf]
  %v53 = vld [vmem:[%s1 + $0x90] sm:$0xf]
  %v54 = vld [vmem:[%s1 + $0x94] sm:$0xf]
  %v55 = vld [vmem:[%s1 + $0x98] sm:$0xf]
  %v56 = vld [vmem:[%s1 + $0x9c] sm:$0xf]
  %v57 = vld [vmem:[%s1 + $0xa0] sm:$0xf]
  %v58 = vld [vmem:[%s1 + $0xa4] sm:$0xf]
  %v59 = vld [vmem:[%s1 + $0xa8] sm:$0xf]
  %v60 = vld [vmem:[%s1 + $0xac] sm:$0xf]
  %v61 = vld [vmem:[%s1 + $0xb0] sm:$0xf]
  %v62 = vld [vmem:[%s1 + $0xb4] sm:$0xf]
  %v63 = vld [vmem:[%s1 + $0xb8] sm:$0xf]
  %v64 = vld [vmem:[%s1 + $0xbc] sm:$0xf]
  %v65 = vld [vmem:[%s1 + $0xc0] sm:$0xf]
  %v66 = vld [vmem:[%s1 + $0xc4] sm:$0xf]
  %v67 = vld [vmem:[%s1 + $0xc8] sm:$0xf]
  %v68 = vld [vmem:[%s1 + $0xcc] sm:$0xf]
  %v69 = vld [vmem:[%s1 + $0xd0] sm:$0xf]
  %v70 = vld [vmem:[%s1 + $0xd4] sm:$0xf]
  %v71 = vld [vmem:[%s1 + $0xd8] sm:$0xf]
  %v72 = vld [vmem:[%s1 + $0xdc] sm:$0xf]
  %v73 = vld [vmem:[%s1 + $0xe0] sm:$0xf]
  %v74 = vld [vmem:[%s1 + $0xe4] sm:$0xf]
  %v75 = vld [vmem:[%s1 + $0xe8] sm:$0xf]
  %v76 = vld [vmem:[%s1 + $0xec] sm:$0xf]
  %v77 = vld [vmem:[%s1 + $0xf0] sm:$0xf]
  %v78 = vld [vmem:[%s1 + $0xf4] sm:$0xf]
  %v79 = vld [vmem:[%s1 + $0xf8] sm:$0xf]
  %v80 = vld [vmem:[%s1 + $0xfc] sm:$0xf]
  %v81 = vld [vmem:[%s1 + $0x100] sm:$0xf]
  %v82 = vld [vmem:[%s1 + $0x104] sm:$0xf]
  %v83 = vld [vmem:[%s1 + $0x108] sm:$0xf]
  %v84 = vld [vmem:[%s1 + $0x10c] sm:$0xf]
  %v85 = vld [vmem:[%s1 + $0x110] sm:$0xf]
  %v86 = vld [vmem:[%s1 + $0x114] sm:$0xf]
  %v87 = vld [vmem:[%s1 + $0x118] sm:$0xf]
  %v88 = vld [vmem:[%s1 + $0x11c] sm:$0xf]
  %v89 = vld [vmem:[%s1 + $0x120] sm:$0xf]
  %v90 = vld [vmem:[%s1 + $0x124] sm:$0xf]
  %v91 = vld [vmem:[%s1 + $0x128] sm:$0xf]
  %v92 = vld [vmem:[%s1 + $0x12c] sm:$0xf]
  %v93 = vld [vmem:[%s1 + $0x130] sm:$0xf]
  %v94 = vld [vmem:[%s1 + $0x134] sm:$0xf]
  %v95 = vld [vmem:[%s1 + $0x138] sm:$0xf]
  %v96 = vld [vmem:[%s1 + $0x13c] sm:$0xf]
  %v97 = vld [vmem:[%s1 + $0x140] sm:$0xf]
  %v98 = vld [vmem:[%s1 + $0x144] sm:$0xf]
  %v99 = vld [vmem:[%s1 + $0x148] sm:$0xf]
  %v100 = vld [vmem:[%s1 + $0x14c] sm:$0xf]
  %v101 = vld [vmem:[%s1 + $0x150] sm:$0xf]
  %v102 = vld [vmem:[%s1 + $0x154] sm:$0xf]
  %v103 = vld [vmem:[%s1 + $0x158] sm:$0xf]
  %v104 = vld [vmem:[%s1 + $0x15c] sm:$0xf]
  %v105 = vld [vmem:[%s1 + $0x160] sm:$0xf]
  %v106 = vld [vmem:[%s1 + $0x164] sm:$0xf]
  %v107 = vld [vmem:[%s1 + $0x168] sm:$0xf]
  %v108 = vld [vmem:[%s1 + $0x16c] sm:$0xf]
  %v109 = vld [vmem:[%s1 + $0x170] sm:$0xf]
  %v110 = vld [vmem:[%s1 + $0x174] sm:$0xf]
  %v111 = vld [vmem:[%s1 + $0x178] sm:$0xf]
  %v112 = vld [vmem:[%s1 + $0x17c] sm:$0xf]
  %v113 = vld [vmem:[%s1 + $0x180] sm:$0xf]
  %v114 = vld [vmem:[%s1 + $0x184] sm:$0xf]
  %v115 = vld [vmem:[%s1 + $0x188] sm:$0xf]
  %v116 = vld [vmem:[%s1 + $0x18c] sm:$0xf]
  %v117 = vld [vmem:[%s1 + $0x190] sm:$0xf]
  %v118 = vld [vmem:[%s1 + $0x194] sm:$0xf]
  %v119 = vld [vmem:[%s1 + $0x198] sm:$0xf]
  %v120 = vld [vmem:[%s1 + $0x19c] sm:$0xf]
  %v121 = vld [vmem:[%s1 + $0x1a0] sm:$0xf]
  %v122 = vld [vmem:[%s1 + $0x1a4] sm:$0xf]
  %v123 = vld [vmem:[%s1 + $0x1a8] sm:$0xf]
  %v124 = vld [vmem:[%s1 + $0x1ac] sm:$0xf]
  %v125 = vld [vmem:[%s1 + $0x1b0] sm:$0xf]
  %v126 = vld [vmem:[%s1 + $0x1b4] sm:$0xf]
  %v127 = vld [vmem:[%s1 + $0x1b8] sm:$0xf]
  %v128 = vld [vmem:[%s1 + $0x1bc] sm:$0xf]
  %v129 = vld [vmem:[%s1 + $0x1c0] sm:$0xf]
  %v130 = vld [vmem:[%s1 + $0x1c4] sm:$0xf]
  %v131 = vld [vmem:[%s1 + $0x1c8] sm:$0xf]
  %v132 = vld [vmem:[%s1 + $0x1cc] sm:$0xf]
  %v133 = vld [vmem:[%s1 + $0x1d0] sm:$0xf]
  %v134 = vld [vmem:[%s1 + $0x1d4] sm:$0xf]
  %v135 = vld [vmem:[%s1 + $0x1d8] sm:$0xf]
  %v136 = vld [vmem:[%s1 + $0x1dc] sm:$0xf]
  %v137 = vld [vmem:[%s1 + $0x1e0] sm:$0xf]
  %v138 = vld [vmem:[%s1 + $0x1e4] sm:$0xf]
  %v139 = vld [vmem:[%s1 + $0x1e8] sm:$0xf]
  %v140 = vld [vmem:[%s1 + $0x1ec] sm:$0xf]
  %v141 = vld [vmem:[%s1 + $0x1f0] sm:$0xf]
  %v142 = vld [vmem:[%s1 + $0x1f4] sm:$0xf]
  %v143 = vld [vmem:[%s1 + $0x1f8] sm:$0xf]
  %v144 = vld [vmem:[%s1 + $0x1fc] sm:$0xf]
  %v145 = vld [vmem:[%s1 + $0x200] sm:$0xf]
  %v146 = vld [vmem:[%s1 + $0x204] sm:$0xf]
  %v147 = vld [vmem:[%s1 + $0x208] sm:$0xf]
  %v148 = vld [vmem:[%s1 + $0x20c] sm:$0xf]
  %v149 = vld [vmem:[%s1 + $0x210] sm:$0xf]
  %v150 = vld [vmem:[%s1 + $0x214] sm:$0xf]
  %v151 = vld [vmem:[%s1 + $0x218] sm:$0xf]
  %v152 = vld [vmem:[%s1 + $0x21c] sm:$0xf]
  %v153 = vld [vmem:[%s1 + $0x220] sm:$0xf]
  %v154 = vld [vmem:[%s1 + $0x224] sm:$0xf]
  %v155 = vld [vmem:[%s1 + $0x228] sm:$0xf]
  %v156 = vld [vmem:[%s1 + $0x22c] sm:$0xf]
  %v157 = vld [vmem:[%s1 + $0x230] sm:$0xf]
  %v158 = vld [vmem:[%s1 + $0x234] sm:$0xf]
  %v159 = vld [vmem:[%s1 + $0x238] sm:$0xf]
  %v160 = vld [vmem:[%s1 + $0x23c] sm:$0xf]
  %v161 = vld [vmem:[%s2] sm:$0x1]
  %v163 = vlaneseq
  %v164 = vshrl.u32 %v163, 7
  %v165 = vsub.s32 0, %v164
  %v166 = vrot.slane %v161, %v165
  %v170 = vcombine.high %v15, %v15
  %v172 = vunpack.c.l.s4 1966171168
  %v173 = vunpack.c.0.s8 %v172
  %v174 = vlaneseq
  %v175 = vshrl.u32 %v174, 7
  %v176 = vsub.s32 %v173, %v175
  %v177 = vrot.slane %v15, %v176
  %v179 = vunpack.c.l.s4 1966171168
  %v180 = vunpack.c.0.s8 %v179
  %v181 = vlaneseq
  %v182 = vshrl.u32 %v181, 7
  %v183 = vsub.s32 %v180, %v182
  %v184 = vrot.slane %v170, %v183
  %v185 = vcombine.high %v177, %v177
  %v186 = vcombine.high %v184, %v184
  %v188 = vunpack.c.l.s4 1966171168
  %v189 = vunpack.c.0.s8 %v188
  %v190 = vlaneseq
  %v191 = vshrl.u32 %v190, 7
  %v192 = vsub.s32 %v189, %v191
  %v193 = vrot.slane %v177, %v192
  %v195 = vunpack.c.l.s4 1966171168
  %v196 = vunpack.c.0.s8 %v195
  %v197 = vlaneseq
  %v198 = vshrl.u32 %v197, 7
  %v199 = vsub.s32 %v196, %v198
  %v200 = vrot.slane %v184, %v199
  %v202 = vunpack.c.l.s4 1966171168
  %v203 = vunpack.c.0.s8 %v202
  %v204 = vlaneseq
  %v205 = vshrl.u32 %v204, 7
  %v206 = vsub.s32 %v203, %v205
  %v207 = vrot.slane %v185, %v206
  %v209 = vunpack.c.l.s4 1966171168
  %v210 = vunpack.c.0.s8 %v209
  %v211 = vlaneseq
  %v212 = vshrl.u32 %v211, 7
  %v213 = vsub.s32 %v210, %v212
  %v214 = vrot.slane %v186, %v213
  %v215 = vcombine.high %v193, %v193
  %v216 = vcombine.high %v200, %v200
  %v217 = vcombine.high %v207, %v207
  %v218 = vcombine.high %v214, %v214
  %v220 = vunpack.c.l.s4 1966171168
  %v221 = vunpack.c.0.s8 %v220
  %v222 = vlaneseq
  %v223 = vshrl.u32 %v222, 7
  %v224 = vsub.s32 %v221, %v223
  %v225 = vrot.slane %v16, %v224
  %v227 = vunpack.c.l.s4 1966171168
  %v228 = vunpack.c.0.s8 %v227
  %v229 = vlaneseq
  %v230 = vshrl.u32 %v229, 7
  %v231 = vsub.s32 %v228, %v230
  %v232 = vrot.slane %v225, %v231
  %v386 = vunpack.c.l.b16 %v17
  %v387 = vunpack.c.l.b16 %v18
  %v388 = vunpack.c.l.b16 %v19
  %v389 = vunpack.c.l.b16 %v20
  %v390 = vunpack.c.l.b16 %v21
  %v391 = vunpack.c.l.b16 %v22
  %v392 = vunpack.c.l.b16 %v23
  %v393 = vunpack.c.l.b16 %v24
  %v394 = vunpack.c.l.b16 %v25
  %v395 = vunpack.c.l.b16 %v26
  %v396 = vunpack.c.l.b16 %v27
  %v397 = vunpack.c.l.b16 %v28
  %v398 = vunpack.c.l.b16 %v29
  %v399 = vunpack.c.l.b16 %v30
  %v400 = vunpack.c.l.b16 %v31
  %v401 = vunpack.c.l.b16 %v32
  %v402 = vunpack.c.l.b16 %v33
  %v403 = vunpack.c.l.b16 %v34
  %v404 = vunpack.c.l.b16 %v35
  %v405 = vunpack.c.l.b16 %v36
  %v406 = vunpack.c.l.b16 %v37
  %v407 = vunpack.c.l.b16 %v38
  %v408 = vunpack.c.l.b16 %v39
  %v409 = vunpack.c.l.b16 %v40
  %v410 = vunpack.c.l.b16 %v41
  %v411 = vunpack.c.l.b16 %v42
  %v412 = vunpack.c.l.b16 %v43
  %v413 = vunpack.c.l.b16 %v44
  %v414 = vunpack.c.l.b16 %v45
  %v415 = vunpack.c.l.b16 %v46
  %v416 = vunpack.c.l.b16 %v47
  %v417 = vunpack.c.l.b16 %v48
  %v418 = vunpack.c.l.b16 %v49
  %v419 = vunpack.c.l.b16 %v50
  %v420 = vunpack.c.l.b16 %v51
  %v421 = vunpack.c.l.b16 %v52
  %v422 = vunpack.c.l.b16 %v53
  %v423 = vunpack.c.l.b16 %v54
  %v424 = vunpack.c.l.b16 %v55
  %v425 = vunpack.c.l.b16 %v56
  %v426 = vunpack.c.l.b16 %v57
  %v427 = vunpack.c.l.b16 %v58
  %v428 = vunpack.c.l.b16 %v59
  %v429 = vunpack.c.l.b16 %v60
  %v430 = vunpack.c.l.b16 %v61
  %v431 = vunpack.c.l.b16 %v62
  %v432 = vunpack.c.l.b16 %v63
  %v433 = vunpack.c.l.b16 %v64
  %v434 = vunpack.c.l.b16 %v65
  %v435 = vunpack.c.l.b16 %v66
  %v436 = vunpack.c.l.b16 %v67
  %v437 = vunpack.c.l.b16 %v68
  %v438 = vunpack.c.l.b16 %v69
  %v439 = vunpack.c.l.b16 %v70
  %v440 = vunpack.c.l.b16 %v71
  %v441 = vunpack.c.l.b16 %v72
  %v442 = vunpack.c.l.b16 %v73
  %v443 = vunpack.c.l.b16 %v74
  %v444 = vunpack.c.l.b16 %v75
  %v445 = vunpack.c.l.b16 %v76
  %v446 = vunpack.c.l.b16 %v77
  %v447 = vunpack.c.l.b16 %v78
  %v448 = vunpack.c.l.b16 %v79
  %v449 = vunpack.c.l.b16 %v80
  %v450 = vunpack.c.l.b16 %v81
  %v451 = vunpack.c.l.b16 %v82
  %v452 = vunpack.c.l.b16 %v83
  %v453 = vunpack.c.l.b16 %v84
  %v454 = vunpack.c.l.b16 %v85
  %v455 = vunpack.c.l.b16 %v86
  %v456 = vunpack.c.l.b16 %v87
  %v457 = vunpack.c.l.b16 %v88
  %v458 = vunpack.c.l.b16 %v89
  %v459 = vunpack.c.l.b16 %v90
  %v460 = vunpack.c.l.b16 %v91
  %v461 = vunpack.c.l.b16 %v92
  %v462 = vunpack.c.l.b16 %v93
  %v463 = vunpack.c.l.b16 %v94
  %v464 = vunpack.c.l.b16 %v95
  %v465 = vunpack.c.l.b16 %v96
  %v466 = vunpack.c.l.b16 %v97
  %v467 = vunpack.c.l.b16 %v98
  %v468 = vunpack.c.l.b16 %v99
  %v469 = vunpack.c.l.b16 %v100
  %v470 = vunpack.c.l.b16 %v101
  %v471 = vunpack.c.l.b16 %v102
  %v472 = vunpack.c.l.b16 %v103
  %v473 = vunpack.c.l.b16 %v104
  %v474 = vunpack.c.l.b16 %v105
  %v475 = vunpack.c.l.b16 %v106
  %v476 = vunpack.c.l.b16 %v107
  %v477 = vunpack.c.l.b16 %v108
  %v478 = vunpack.c.l.b16 %v109
  %v479 = vunpack.c.l.b16 %v110
  %v480 = vunpack.c.l.b16 %v111
  %v481 = vunpack.c.l.b16 %v112
  %v482 = vunpack.c.l.b16 %v113
  %v483 = vunpack.c.l.b16 %v114
  %v484 = vunpack.c.l.b16 %v115
  %v485 = vunpack.c.l.b16 %v116
  %v486 = vunpack.c.l.b16 %v117
  %v487 = vunpack.c.l.b16 %v118
  %v488 = vunpack.c.l.b16 %v119
  %v489 = vunpack.c.l.b16 %v120
  %v490 = vunpack.c.l.b16 %v121
  %v491 = vunpack.c.l.b16 %v122
  %v492 = vunpack.c.l.b16 %v123
  %v493 = vunpack.c.l.b16 %v124
  %v494 = vunpack.c.l.b16 %v125
  %v495 = vunpack.c.l.b16 %v126
  %v496 = vunpack.c.l.b16 %v127
  %v497 = vunpack.c.l.b16 %v128
  %v498 = vunpack.c.l.b16 %v129
  %v499 = vunpack.c.l.b16 %v130
  %v500 = vunpack.c.l.b16 %v131
  %v501 = vunpack.c.l.b16 %v132
  %v502 = vunpack.c.l.b16 %v133
  %v503 = vunpack.c.l.b16 %v134
  %v504 = vunpack.c.l.b16 %v135
  %v505 = vunpack.c.l.b16 %v136
  %v506 = vunpack.c.l.b16 %v137
  %v507 = vunpack.c.l.b16 %v138
  %v508 = vunpack.c.l.b16 %v139
  %v509 = vunpack.c.l.b16 %v140
  %v510 = vunpack.c.l.b16 %v141
  %v511 = vunpack.c.l.b16 %v142
  %v512 = vunpack.c.l.b16 %v143
  %v513 = vunpack.c.l.b16 %v144
  %v514 = vunpack.c.l.b16 %v145
  %v515 = vunpack.c.l.b16 %v146
  %v516 = vunpack.c.l.b16 %v147
  %v517 = vunpack.c.l.b16 %v148
  %v518 = vunpack.c.l.b16 %v149
  %v519 = vunpack.c.l.b16 %v150
  %v520 = vunpack.c.l.b16 %v151
  %v521 = vunpack.c.l.b16 %v152
  %v522 = vunpack.c.l.b16 %v153
  %v523 = vunpack.c.l.b16 %v154
  %v524 = vunpack.c.l.b16 %v155
  %v525 = vunpack.c.l.b16 %v156
  %v526 = vunpack.c.l.b16 %v157
  %v527 = vunpack.c.l.b16 %v158
  %v528 = vunpack.c.l.b16 %v159
  %v529 = vunpack.c.l.b16 %v160
  %v530 = vpack.c.b16 %v387, %v386
  %v531 = vpack.c.b16 %v389, %v388
  %v532 = vpack.c.b16 %v391, %v390
  %v533 = vpack.c.b16 %v393, %v392
  %v534 = vpack.c.b16 %v395, %v394
  %v535 = vpack.c.b16 %v397, %v396
  %v536 = vpack.c.b16 %v399, %v398
  %v537 = vpack.c.b16 %v401, %v400
  %v538 = vpack.c.b16 %v403, %v402
  %v539 = vpack.c.b16 %v405, %v404
  %v540 = vpack.c.b16 %v407, %v406
  %v541 = vpack.c.b16 %v409, %v408
  %v542 = vpack.c.b16 %v411, %v410
  %v543 = vpack.c.b16 %v413, %v412
  %v544 = vpack.c.b16 %v415, %v414
  %v545 = vpack.c.b16 %v417, %v416
  %v546 = vpack.c.b16 %v419, %v418
  %v547 = vpack.c.b16 %v421, %v420
  %v548 = vpack.c.b16 %v423, %v422
  %v549 = vpack.c.b16 %v425, %v424
  %v550 = vpack.c.b16 %v427, %v426
  %v551 = vpack.c.b16 %v429, %v428
  %v552 = vpack.c.b16 %v431, %v430
  %v553 = vpack.c.b16 %v433, %v432
  %v554 = vpack.c.b16 %v435, %v434
  %v555 = vpack.c.b16 %v437, %v436
  %v556 = vpack.c.b16 %v439, %v438
  %v557 = vpack.c.b16 %v441, %v440
  %v558 = vpack.c.b16 %v443, %v442
  %v559 = vpack.c.b16 %v445, %v444
  %v560 = vpack.c.b16 %v447, %v446
  %v561 = vpack.c.b16 %v449, %v448
  %v562 = vpack.c.b16 %v451, %v450
  %v563 = vpack.c.b16 %v453, %v452
  %v564 = vpack.c.b16 %v455, %v454
  %v565 = vpack.c.b16 %v457, %v456
  %v566 = vpack.c.b16 %v459, %v458
  %v567 = vpack.c.b16 %v461, %v460
  %v568 = vpack.c.b16 %v463, %v462
  %v569 = vpack.c.b16 %v465, %v464
  %v570 = vpack.c.b16 %v467, %v466
  %v571 = vpack.c.b16 %v469, %v468
  %v572 = vpack.c.b16 %v471, %v470
  %v573 = vpack.c.b16 %v473, %v472
  %v574 = vpack.c.b16 %v475, %v474
  %v575 = vpack.c.b16 %v477, %v476
  %v576 = vpack.c.b16 %v479, %v478
  %v577 = vpack.c.b16 %v481, %v480
  %v578 = vpack.c.b16 %v483, %v482
  %v579 = vpack.c.b16 %v485, %v484
  %v580 = vpack.c.b16 %v487, %v486
  %v581 = vpack.c.b16 %v489, %v488
  %v582 = vpack.c.b16 %v491, %v490
  %v583 = vpack.c.b16 %v493, %v492
  %v584 = vpack.c.b16 %v495, %v494
  %v585 = vpack.c.b16 %v497, %v496
  %v586 = vpack.c.b16 %v499, %v498
  %v587 = vpack.c.b16 %v501, %v500
  %v588 = vpack.c.b16 %v503, %v502
  %v589 = vpack.c.b16 %v505, %v504
  %v590 = vpack.c.b16 %v507, %v506
  %v591 = vpack.c.b16 %v509, %v508
  %v592 = vpack.c.b16 %v511, %v510
  %v593 = vpack.c.b16 %v513, %v512
  %v594 = vpack.c.b16 %v515, %v514
  %v595 = vpack.c.b16 %v517, %v516
  %v596 = vpack.c.b16 %v519, %v518
  %v597 = vpack.c.b16 %v521, %v520
  %v598 = vpack.c.b16 %v523, %v522
  %v599 = vpack.c.b16 %v525, %v524
  %v600 = vpack.c.b16 %v527, %v526
  %v601 = vpack.c.b16 %v529, %v528
  %674 = vmatprep.subr.bf16.mxu0 0
  %675 = vmatpush1.bf16.msra.mxu0 %v537
  %676 = vmatprep.subr.bf16.mxu0 0
  %677 = vmatpush1.bf16.msra.mxu0 %v536
  %678 = vmatprep.subr.bf16.mxu0 0
  %679 = vmatpush1.bf16.msra.mxu0 %v535
  %680 = vmatprep.subr.bf16.mxu0 0
  %681 = vmatpush1.bf16.msra.mxu0 %v534
  %682 = vmatprep.subr.bf16.mxu0 0
  %683 = vmatpush1.bf16.msra.mxu0 %v533
  %684 = vmatprep.subr.bf16.mxu0 0
  %685 = vmatpush1.bf16.msra.mxu0 %v532
  %686 = vmatprep.subr.bf16.mxu0 0
  %687 = vmatpush1.bf16.msra.mxu0 %v531
  %688 = vmatprep.subr.bf16.mxu0 0
  %689 = vmatpush1.bf16.msra.mxu0 %v530
  %690 = vmatprep.subr.bf16.mxu0 0
  %691 = vmatpush2.bf16.msra.mxu0 %v545
  %692 = vmatprep.subr.bf16.mxu0 0
  %693 = vmatpush2.bf16.msra.mxu0 %v544
  %694 = vmatprep.subr.bf16.mxu0 0
  %695 = vmatpush2.bf16.msra.mxu0 %v543
  %696 = vmatprep.subr.bf16.mxu0 0
  %697 = vmatpush2.bf16.msra.mxu0 %v542
  %698 = vmatprep.subr.bf16.mxu0 0
  %699 = vmatpush2.bf16.msra.mxu0 %v541
  %700 = vmatprep.subr.bf16.mxu0 0
  %701 = vmatpush2.bf16.msra.mxu0 %v540
  %702 = vmatprep.subr.bf16.mxu0 0
  %703 = vmatpush2.bf16.msra.mxu0 %v539
  %704 = vmatprep.subr.bf16.mxu0 0
  %705 = vmatpush2.bf16.msra.mxu0 %v538
  %706 = vmatprep.mubr.bf16.mxu0 %v207
  %707 = vmatmul.mubr.bf16.gmra.mxu0 %v193
  %v708 = vpop.f32.mrf.mxu0
  %v709 = vadd.f32 %v166, %v708
  %v710 = vpop.f32.mrf.mxu0
  %v711 = vpop.f32.mrf.mxu0
  %v712 = vpop.f32.mrf.mxu0
  %713 = vdwg.mxu0
  %714 = vmatprep.subr.bf16.mxu0 0
  %715 = vmatpush1.bf16.msra.mxu0 %v553
  %716 = vmatprep.subr.bf16.mxu0 0
  %717 = vmatpush1.bf16.msra.mxu0 %v552
  %718 = vmatprep.subr.bf16.mxu0 0
  %719 = vmatpush1.bf16.msra.mxu0 %v551
  %720 = vmatprep.subr.bf16.mxu0 0
  %721 = vmatpush1.bf16.msra.mxu0 %v550
  %722 = vmatprep.subr.bf16.mxu0 0
  %723 = vmatpush1.bf16.msra.mxu0 %v549
  %724 = vmatprep.subr.bf16.mxu0 0
  %725 = vmatpush1.bf16.msra.mxu0 %v548
  %726 = vmatprep.subr.bf16.mxu0 0
  %727 = vmatpush1.bf16.msra.mxu0 %v547
  %728 = vmatprep.subr.bf16.mxu0 0
  %729 = vmatpush1.bf16.msra.mxu0 %v546
  %730 = vmatprep.subr.bf16.mxu0 0
  %731 = vmatpush2.bf16.msra.mxu0 %v561
  %732 = vmatprep.subr.bf16.mxu0 0
  %733 = vmatpush2.bf16.msra.mxu0 %v560
  %734 = vmatprep.subr.bf16.mxu0 0
  %735 = vmatpush2.bf16.msra.mxu0 %v559
  %736 = vmatprep.subr.bf16.mxu0 0
  %737 = vmatpush2.bf16.msra.mxu0 %v558
  %738 = vmatprep.subr.bf16.mxu0 0
  %739 = vmatpush2.bf16.msra.mxu0 %v557
  %740 = vmatprep.subr.bf16.mxu0 0
  %741 = vmatpush2.bf16.msra.mxu0 %v556
  %742 = vmatprep.subr.bf16.mxu0 0
  %743 = vmatpush2.bf16.msra.mxu0 %v555
  %744 = vmatprep.subr.bf16.mxu0 0
  %745 = vmatpush2.bf16.msra.mxu0 %v554
  %746 = vmatprep.mubr.bf16.mxu0 %v217
  %747 = vmatmul.mubr.bf16.gmra.mxu0 %v215
  %v748 = vpop.f32.mrf.mxu0
  %v749 = vadd.f32 %v709, %v748
  %v750 = vpop.f32.mrf.mxu0
  %v751 = vpop.f32.mrf.mxu0
  %v752 = vpop.f32.mrf.mxu0
  %753 = vdwg.mxu0
  %754 = vmatprep.subr.bf16.mxu0 0
  %755 = vmatpush1.bf16.msra.mxu0 %v569
  %756 = vmatprep.subr.bf16.mxu0 0
  %757 = vmatpush1.bf16.msra.mxu0 %v568
  %758 = vmatprep.subr.bf16.mxu0 0
  %759 = vmatpush1.bf16.msra.mxu0 %v567
  %760 = vmatprep.subr.bf16.mxu0 0
  %761 = vmatpush1.bf16.msra.mxu0 %v566
  %762 = vmatprep.subr.bf16.mxu0 0
  %763 = vmatpush1.bf16.msra.mxu0 %v565
  %764 = vmatprep.subr.bf16.mxu0 0
  %765 = vmatpush1.bf16.msra.mxu0 %v564
  %766 = vmatprep.subr.bf16.mxu0 0
  %767 = vmatpush1.bf16.msra.mxu0 %v563
  %768 = vmatprep.subr.bf16.mxu0 0
  %769 = vmatpush1.bf16.msra.mxu0 %v562
  %770 = vmatprep.subr.bf16.mxu0 0
  %771 = vmatpush2.bf16.msra.mxu0 %v577
  %772 = vmatprep.subr.bf16.mxu0 0
  %773 = vmatpush2.bf16.msra.mxu0 %v576
  %774 = vmatprep.subr.bf16.mxu0 0
  %775 = vmatpush2.bf16.msra.mxu0 %v575
  %776 = vmatprep.subr.bf16.mxu0 0
  %777 = vmatpush2.bf16.msra.mxu0 %v574
  %778 = vmatprep.subr.bf16.mxu0 0
  %779 = vmatpush2.bf16.msra.mxu0 %v573
  %780 = vmatprep.subr.bf16.mxu0 0
  %781 = vmatpush2.bf16.msra.mxu0 %v572
  %782 = vmatprep.subr.bf16.mxu0 0
  %783 = vmatpush2.bf16.msra.mxu0 %v571
  %784 = vmatprep.subr.bf16.mxu0 0
  %785 = vmatpush2.bf16.msra.mxu0 %v570
  %786 = vmatprep.mubr.bf16.mxu0 %v214
  %787 = vmatmul.mubr.bf16.gmra.mxu0 %v200
  %v788 = vpop.f32.mrf.mxu0
  %v789 = vadd.f32 %v749, %v788
  %v790 = vpop.f32.mrf.mxu0
  %v791 = vpop.f32.mrf.mxu0
  %v792 = vpop.f32.mrf.mxu0
  %793 = vdwg.mxu0
  %794 = vmatprep.subr.bf16.mxu0 0
  %795 = vmatpush1.bf16.msra.mxu0 %v585
  %796 = vmatprep.subr.bf16.mxu0 0
  %797 = vmatpush1.bf16.msra.mxu0 %v584
  %798 = vmatprep.subr.bf16.mxu0 0
  %799 = vmatpush1.bf16.msra.mxu0 %v583
  %800 = vmatprep.subr.bf16.mxu0 0
  %801 = vmatpush1.bf16.msra.mxu0 %v582
  %802 = vmatprep.subr.bf16.mxu0 0
  %803 = vmatpush1.bf16.msra.mxu0 %v581
  %804 = vmatprep.subr.bf16.mxu0 0
  %805 = vmatpush1.bf16.msra.mxu0 %v580
  %806 = vmatprep.subr.bf16.mxu0 0
  %807 = vmatpush1.bf16.msra.mxu0 %v579
  %808 = vmatprep.subr.bf16.mxu0 0
  %809 = vmatpush1.bf16.msra.mxu0 %v578
  %810 = vmatprep.subr.bf16.mxu0 0
  %811 = vmatpush2.bf16.msra.mxu0 %v593
  %812 = vmatprep.subr.bf16.mxu0 0
  %813 = vmatpush2.bf16.msra.mxu0 %v592
  %814 = vmatprep.subr.bf16.mxu0 0
  %815 = vmatpush2.bf16.msra.mxu0 %v591
  %816 = vmatprep.subr.bf16.mxu0 0
  %817 = vmatpush2.bf16.msra.mxu0 %v590
  %818 = vmatprep.subr.bf16.mxu0 0
  %819 = vmatpush2.bf16.msra.mxu0 %v589
  %820 = vmatprep.subr.bf16.mxu0 0
  %821 = vmatpush2.bf16.msra.mxu0 %v588
  %822 = vmatprep.subr.bf16.mxu0 0
  %823 = vmatpush2.bf16.msra.mxu0 %v587
  %824 = vmatprep.subr.bf16.mxu0 0
  %825 = vmatpush2.bf16.msra.mxu0 %v586
  %826 = vmatprep.mubr.bf16.mxu0 %v218
  %827 = vmatmul.mubr.bf16.gmra.mxu0 %v216
  %v828 = vpop.f32.mrf.mxu0
  %v829 = vadd.f32 %v789, %v828
  %v830 = vpop.f32.mrf.mxu0
  %v831 = vpop.f32.mrf.mxu0
  %v832 = vpop.f32.mrf.mxu0
  %833 = vdwg.mxu0
  %834 = vmatprep.subr.bf16.mxu0 0
  %835 = vmatpush1.bf16.msra.mxu0 %v601
  %836 = vmatprep.subr.bf16.mxu0 0
  %837 = vmatpush1.bf16.msra.mxu0 %v600
  %838 = vmatprep.subr.bf16.mxu0 0
  %839 = vmatpush1.bf16.msra.mxu0 %v599
  %840 = vmatprep.subr.bf16.mxu0 0
  %841 = vmatpush1.bf16.msra.mxu0 %v598
  %842 = vmatprep.subr.bf16.mxu0 0
  %843 = vmatpush1.bf16.msra.mxu0 %v597
  %844 = vmatprep.subr.bf16.mxu0 0
  %845 = vmatpush1.bf16.msra.mxu0 %v596
  %846 = vmatprep.subr.bf16.mxu0 0
  %847 = vmatpush1.bf16.msra.mxu0 %v595
  %848 = vmatprep.subr.bf16.mxu0 0
  %849 = vmatpush1.bf16.msra.mxu0 %v594
  %850 = vmatprep.subr.bf16.mxu0 0
  %851 = vmatpush2.bf16.msra.mxu0 0
  %852 = vmatprep.subr.bf16.mxu0 0
  %853 = vmatpush2.bf16.msra.mxu0 0
  %854 = vmatprep.subr.bf16.mxu0 0
  %855 = vmatpush2.bf16.msra.mxu0 0
  %856 = vmatprep.subr.bf16.mxu0 0
  %857 = vmatpush2.bf16.msra.mxu0 0
  %858 = vmatprep.subr.bf16.mxu0 0
  %859 = vmatpush2.bf16.msra.mxu0 0
  %860 = vmatprep.subr.bf16.mxu0 0
  %861 = vmatpush2.bf16.msra.mxu0 0
  %862 = vmatprep.subr.bf16.mxu0 0
  %863 = vmatpush2.bf16.msra.mxu0 0
  %864 = vmatprep.subr.bf16.mxu0 0
  %865 = vmatpush2.bf16.msra.mxu0 0
  %866 = vmatprep.mubr.bf16.mxu0 0
  %867 = vmatmul.mubr.bf16.gmra.mxu0 %v232
  %v868 = vpop.f32.mrf.mxu0
  %v869 = vadd.f32 %v829, %v868
  %v870 = vpop.f32.mrf.mxu0
  %v871 = vpop.f32.mrf.mxu0
  %v872 = vpop.f32.mrf.mxu0
  %873 = vdwg.mxu0
  %v874 = vmul.f32 %v869, 0.01
  %v875 = vmax.f32 %v869, %v874
  %v876 = vpack.c.bf16 %v875, %v875
  %877 = vst [vmem:[%s3] sm:$0x1] %v876
  // Predicated region
  $region14: #{a2c_forward.7} parent=0 // pred_check
    _
  $region15: #{a2c_forward.7} parent=0 // pred_check_branch
    %879 = sbr.rel (0) target = $region17
  $region16: #{a2c_forward.7} parent=0 // pred_region
    _
  $region17: #{a2c_forward.7} parent=0 // pred_fallthru
    _
  // Predicated region
  $region18: #{a2c_forward.7} parent=0 // pred_check
    _
  $region19: #{a2c_forward.7} parent=0 // pred_check_branch
    %881 = sbr.rel (0) target = $region21
  $region20: #{a2c_forward.7} parent=0 // pred_region
    _
  $region21: #{a2c_forward.7} parent=0 // pred_fallthru
    _

// kernel: a2c_forward.9
$region0: #{a2c_forward.9}
  #allocation0 [shape = 'u32[]', space=smem, size = 0x4, offset = 0x4, fixed_abs, tag = 'smem constant byte address 0x4 - core index']
  #allocation1 [shape = 'u32[144,128]{1,0:T(1,128)}', space=vmem, size = 0x12000, scoped, tag = 'internal scratch']
  %s0 = inlined_call_operand.vmem [shape: bf16[2,1024], index: 0, kind: input, shape index: {}]
  %s1 = inlined_call_operand.vmem [shape: bf16[1024,128], index: 1, kind: input, shape index: {}]
  %s2 = inlined_call_operand.vmem [shape: f32[1,128], index: 2, kind: input, shape index: {}]
  %s3 = inlined_call_operand.vmem [shape: f32[2,128], index: 3, kind: output, shape index: {}]
  %s4 = sld [smem:[#allocation0]]
  $region22: #{a2c_forward.9} parent=0
    _
  %s6 = ssub.s32 1, %s4
  %s7 = scalar_select 0, %s6, %s4
  // Predicated region
  $region2: #{a2c_forward.9} parent=0 // pred_check
    _
  $region3: #{a2c_forward.9} parent=0 // pred_check_branch
    %9 = sbr.rel (0) target = $region5
  $region4: #{a2c_forward.9} parent=0 // pred_region
    _
  $region5: #{a2c_forward.9} parent=0 // pred_fallthru
    _
  // Predicated region
  $region6: #{a2c_forward.9} parent=0 // pred_check
    _
  $region7: #{a2c_forward.9} parent=0 // pred_check_branch
    %11 = sbr.rel (0) target = $region9
  $region8: #{a2c_forward.9} parent=0 // pred_region
    _
  $region9: #{a2c_forward.9} parent=0 // pred_fallthru
    _
  // Predicated region
  $region10: #{a2c_forward.9} parent=0 // pred_check
    _
  $region11: #{a2c_forward.9} parent=0 // pred_check_branch
    %13 = sbr.rel (0) target = $region13
  $region12: #{a2c_forward.9} parent=0 // pred_region
    _
  $region13: #{a2c_forward.9} parent=0 // pred_fallthru
    _
  %v15 = vld [vmem:[%s0] sm:$0xff]
  %v16 = vld [vmem:[%s1] sm:$0xf]
  %v17 = vld [vmem:[%s1 + $0x4] sm:$0xf]
  %v18 = vld [vmem:[%s1 + $0x8] sm:$0xf]
  %v19 = vld [vmem:[%s1 + $0xc] sm:$0xf]
  %v20 = vld [vmem:[%s1 + $0x10] sm:$0xf]
  %v21 = vld [vmem:[%s1 + $0x14] sm:$0xf]
  %v22 = vld [vmem:[%s1 + $0x18] sm:$0xf]
  %v23 = vld [vmem:[%s1 + $0x1c] sm:$0xf]
  %v24 = vld [vmem:[%s1 + $0x20] sm:$0xf]
  %v25 = vld [vmem:[%s1 + $0x24] sm:$0xf]
  %v26 = vld [vmem:[%s1 + $0x28] sm:$0xf]
  %v27 = vld [vmem:[%s1 + $0x2c] sm:$0xf]
  %v28 = vld [vmem:[%s1 + $0x30] sm:$0xf]
  %v29 = vld [vmem:[%s1 + $0x34] sm:$0xf]
  %v30 = vld [vmem:[%s1 + $0x38] sm:$0xf]
  %v31 = vld [vmem:[%s1 + $0x3c] sm:$0xf]
  %v32 = vld [vmem:[%s1 + $0x40] sm:$0xf]
  %v33 = vld [vmem:[%s1 + $0x44] sm:$0xf]
  %v34 = vld [vmem:[%s1 + $0x48] sm:$0xf]
  %v35 = vld [vmem:[%s1 + $0x4c] sm:$0xf]
  %v36 = vld [vmem:[%s1 + $0x50] sm:$0xf]
  %v37 = vld [vmem:[%s1 + $0x54] sm:$0xf]
  %v38 = vld [vmem:[%s1 + $0x58] sm:$0xf]
  %v39 = vld [vmem:[%s1 + $0x5c] sm:$0xf]
  %v40 = vld [vmem:[%s1 + $0x60] sm:$0xf]
  %v41 = vld [vmem:[%s1 + $0x64] sm:$0xf]
  %v42 = vld [vmem:[%s1 + $0x68] sm:$0xf]
  %v43 = vld [vmem:[%s1 + $0x6c] sm:$0xf]
  %v44 = vld [vmem:[%s1 + $0x70] sm:$0xf]
  %v45 = vld [vmem:[%s1 + $0x74] sm:$0xf]
  %v46 = vld [vmem:[%s1 + $0x78] sm:$0xf]
  %v47 = vld [vmem:[%s1 + $0x7c] sm:$0xf]
  %v48 = vld [vmem:[%s1 + $0x80] sm:$0xf]
  %v49 = vld [vmem:[%s1 + $0x84] sm:$0xf]
  %v50 = vld [vmem:[%s1 + $0x88] sm:$0xf]
  %v51 = vld [vmem:[%s1 + $0x8c] sm:$0xf]
  %v52 = vld [vmem:[%s1 + $0x90] sm:$0xf]
  %v53 = vld [vmem:[%s1 + $0x94] sm:$0xf]
  %v54 = vld [vmem:[%s1 + $0x98] sm:$0xf]
  %v55 = vld [vmem:[%s1 + $0x9c] sm:$0xf]
  %v56 = vld [vmem:[%s1 + $0xa0] sm:$0xf]
  %v57 = vld [vmem:[%s1 + $0xa4] sm:$0xf]
  %v58 = vld [vmem:[%s1 + $0xa8] sm:$0xf]
  %v59 = vld [vmem:[%s1 + $0xac] sm:$0xf]
  %v60 = vld [vmem:[%s1 + $0xb0] sm:$0xf]
  %v61 = vld [vmem:[%s1 + $0xb4] sm:$0xf]
  %v62 = vld [vmem:[%s1 + $0xb8] sm:$0xf]
  %v63 = vld [vmem:[%s1 + $0xbc] sm:$0xf]
  %v64 = vld [vmem:[%s1 + $0xc0] sm:$0xf]
  %v65 = vld [vmem:[%s1 + $0xc4] sm:$0xf]
  %v66 = vld [vmem:[%s1 + $0xc8] sm:$0xf]
  %v67 = vld [vmem:[%s1 + $0xcc] sm:$0xf]
  %v68 = vld [vmem:[%s1 + $0xd0] sm:$0xf]
  %v69 = vld [vmem:[%s1 + $0xd4] sm:$0xf]
  %v70 = vld [vmem:[%s1 + $0xd8] sm:$0xf]
  %v71 = vld [vmem:[%s1 + $0xdc] sm:$0xf]
  %v72 = vld [vmem:[%s1 + $0xe0] sm:$0xf]
  %v73 = vld [vmem:[%s1 + $0xe4] sm:$0xf]
  %v74 = vld [vmem:[%s1 + $0xe8] sm:$0xf]
  %v75 = vld [vmem:[%s1 + $0xec] sm:$0xf]
  %v76 = vld [vmem:[%s1 + $0xf0] sm:$0xf]
  %v77 = vld [vmem:[%s1 + $0xf4] sm:$0xf]
  %v78 = vld [vmem:[%s1 + $0xf8] sm:$0xf]
  %v79 = vld [vmem:[%s1 + $0xfc] sm:$0xf]
  %v80 = vld [vmem:[%s1 + $0x100] sm:$0xf]
  %v81 = vld [vmem:[%s1 + $0x104] sm:$0xf]
  %v82 = vld [vmem:[%s1 + $0x108] sm:$0xf]
  %v83 = vld [vmem:[%s1 + $0x10c] sm:$0xf]
  %v84 = vld [vmem:[%s1 + $0x110] sm:$0xf]
  %v85 = vld [vmem:[%s1 + $0x114] sm:$0xf]
  %v86 = vld [vmem:[%s1 + $0x118] sm:$0xf]
  %v87 = vld [vmem:[%s1 + $0x11c] sm:$0xf]
  %v88 = vld [vmem:[%s1 + $0x120] sm:$0xf]
  %v89 = vld [vmem:[%s1 + $0x124] sm:$0xf]
  %v90 = vld [vmem:[%s1 + $0x128] sm:$0xf]
  %v91 = vld [vmem:[%s1 + $0x12c] sm:$0xf]
  %v92 = vld [vmem:[%s1 + $0x130] sm:$0xf]
  %v93 = vld [vmem:[%s1 + $0x134] sm:$0xf]
  %v94 = vld [vmem:[%s1 + $0x138] sm:$0xf]
  %v95 = vld [vmem:[%s1 + $0x13c] sm:$0xf]
  %v96 = vld [vmem:[%s1 + $0x140] sm:$0xf]
  %v97 = vld [vmem:[%s1 + $0x144] sm:$0xf]
  %v98 = vld [vmem:[%s1 + $0x148] sm:$0xf]
  %v99 = vld [vmem:[%s1 + $0x14c] sm:$0xf]
  %v100 = vld [vmem:[%s1 + $0x150] sm:$0xf]
  %v101 = vld [vmem:[%s1 + $0x154] sm:$0xf]
  %v102 = vld [vmem:[%s1 + $0x158] sm:$0xf]
  %v103 = vld [vmem:[%s1 + $0x15c] sm:$0xf]
  %v104 = vld [vmem:[%s1 + $0x160] sm:$0xf]
  %v105 = vld [vmem:[%s1 + $0x164] sm:$0xf]
  %v106 = vld [vmem:[%s1 + $0x168] sm:$0xf]
  %v107 = vld [vmem:[%s1 + $0x16c] sm:$0xf]
  %v108 = vld [vmem:[%s1 + $0x170] sm:$0xf]
  %v109 = vld [vmem:[%s1 + $0x174] sm:$0xf]
  %v110 = vld [vmem:[%s1 + $0x178] sm:$0xf]
  %v111 = vld [vmem:[%s1 + $0x17c] sm:$0xf]
  %v112 = vld [vmem:[%s1 + $0x180] sm:$0xf]
  %v113 = vld [vmem:[%s1 + $0x184] sm:$0xf]
  %v114 = vld [vmem:[%s1 + $0x188] sm:$0xf]
  %v115 = vld [vmem:[%s1 + $0x18c] sm:$0xf]
  %v116 = vld [vmem:[%s1 + $0x190] sm:$0xf]
  %v117 = vld [vmem:[%s1 + $0x194] sm:$0xf]
  %v118 = vld [vmem:[%s1 + $0x198] sm:$0xf]
  %v119 = vld [vmem:[%s1 + $0x19c] sm:$0xf]
  %v120 = vld [vmem:[%s1 + $0x1a0] sm:$0xf]
  %v121 = vld [vmem:[%s1 + $0x1a4] sm:$0xf]
  %v122 = vld [vmem:[%s1 + $0x1a8] sm:$0xf]
  %v123 = vld [vmem:[%s1 + $0x1ac] sm:$0xf]
  %v124 = vld [vmem:[%s1 + $0x1b0] sm:$0xf]
  %v125 = vld [vmem:[%s1 + $0x1b4] sm:$0xf]
  %v126 = vld [vmem:[%s1 + $0x1b8] sm:$0xf]
  %v127 = vld [vmem:[%s1 + $0x1bc] sm:$0xf]
  %v128 = vld [vmem:[%s1 + $0x1c0] sm:$0xf]
  %v129 = vld [vmem:[%s1 + $0x1c4] sm:$0xf]
  %v130 = vld [vmem:[%s1 + $0x1c8] sm:$0xf]
  %v131 = vld [vmem:[%s1 + $0x1cc] sm:$0xf]
  %v132 = vld [vmem:[%s1 + $0x1d0] sm:$0xf]
  %v133 = vld [vmem:[%s1 + $0x1d4] sm:$0xf]
  %v134 = vld [vmem:[%s1 + $0x1d8] sm:$0xf]
  %v135 = vld [vmem:[%s1 + $0x1dc] sm:$0xf]
  %v136 = vld [vmem:[%s1 + $0x1e0] sm:$0xf]
  %v137 = vld [vmem:[%s1 + $0x1e4] sm:$0xf]
  %v138 = vld [vmem:[%s1 + $0x1e8] sm:$0xf]
  %v139 = vld [vmem:[%s1 + $0x1ec] sm:$0xf]
  %v140 = vld [vmem:[%s1 + $0x1f0] sm:$0xf]
  %v141 = vld [vmem:[%s1 + $0x1f4] sm:$0xf]
  %v142 = vld [vmem:[%s1 + $0x1f8] sm:$0xf]
  %v143 = vld [vmem:[%s1 + $0x1fc] sm:$0xf]
  %v144 = vld [vmem:[%s2] sm:$0x1]
  %v146 = vlaneseq
  %v147 = vshrl.u32 %v146, 7
  %v148 = vsub.s32 0, %v147
  %v149 = vrot.slane %v144, %v148
  %v152 = vcombine.high %v15, %v15
  %v154 = vunpack.c.l.s4 1966171168
  %v155 = vunpack.c.0.s8 %v154
  %v156 = vlaneseq
  %v157 = vshrl.u32 %v156, 7
  %v158 = vsub.s32 %v155, %v157
  %v159 = vrot.slane %v15, %v158
  %v161 = vunpack.c.l.s4 1966171168
  %v162 = vunpack.c.0.s8 %v161
  %v163 = vlaneseq
  %v164 = vshrl.u32 %v163, 7
  %v165 = vsub.s32 %v162, %v164
  %v166 = vrot.slane %v152, %v165
  %v167 = vcombine.high %v159, %v159
  %v168 = vcombine.high %v166, %v166
  %v170 = vunpack.c.l.s4 1966171168
  %v171 = vunpack.c.0.s8 %v170
  %v172 = vlaneseq
  %v173 = vshrl.u32 %v172, 7
  %v174 = vsub.s32 %v171, %v173
  %v175 = vrot.slane %v159, %v174
  %v177 = vunpack.c.l.s4 1966171168
  %v178 = vunpack.c.0.s8 %v177
  %v179 = vlaneseq
  %v180 = vshrl.u32 %v179, 7
  %v181 = vsub.s32 %v178, %v180
  %v182 = vrot.slane %v166, %v181
  %v184 = vunpack.c.l.s4 1966171168
  %v185 = vunpack.c.0.s8 %v184
  %v186 = vlaneseq
  %v187 = vshrl.u32 %v186, 7
  %v188 = vsub.s32 %v185, %v187
  %v189 = vrot.slane %v167, %v188
  %v191 = vunpack.c.l.s4 1966171168
  %v192 = vunpack.c.0.s8 %v191
  %v193 = vlaneseq
  %v194 = vshrl.u32 %v193, 7
  %v195 = vsub.s32 %v192, %v194
  %v196 = vrot.slane %v168, %v195
  %v197 = vcombine.high %v175, %v175
  %v198 = vcombine.high %v182, %v182
  %v199 = vcombine.high %v189, %v189
  %v200 = vcombine.high %v196, %v196
  %v337 = vunpack.c.l.b16 %v16
  %v338 = vunpack.c.l.b16 %v17
  %v339 = vunpack.c.l.b16 %v18
  %v340 = vunpack.c.l.b16 %v19
  %v341 = vunpack.c.l.b16 %v20
  %v342 = vunpack.c.l.b16 %v21
  %v343 = vunpack.c.l.b16 %v22
  %v344 = vunpack.c.l.b16 %v23
  %v345 = vunpack.c.l.b16 %v24
  %v346 = vunpack.c.l.b16 %v25
  %v347 = vunpack.c.l.b16 %v26
  %v348 = vunpack.c.l.b16 %v27
  %v349 = vunpack.c.l.b16 %v28
  %v350 = vunpack.c.l.b16 %v29
  %v351 = vunpack.c.l.b16 %v30
  %v352 = vunpack.c.l.b16 %v31
  %v353 = vunpack.c.l.b16 %v32
  %v354 = vunpack.c.l.b16 %v33
  %v355 = vunpack.c.l.b16 %v34
  %v356 = vunpack.c.l.b16 %v35
  %v357 = vunpack.c.l.b16 %v36
  %v358 = vunpack.c.l.b16 %v37
  %v359 = vunpack.c.l.b16 %v38
  %v360 = vunpack.c.l.b16 %v39
  %v361 = vunpack.c.l.b16 %v40
  %v362 = vunpack.c.l.b16 %v41
  %v363 = vunpack.c.l.b16 %v42
  %v364 = vunpack.c.l.b16 %v43
  %v365 = vunpack.c.l.b16 %v44
  %v366 = vunpack.c.l.b16 %v45
  %v367 = vunpack.c.l.b16 %v46
  %v368 = vunpack.c.l.b16 %v47
  %v369 = vunpack.c.l.b16 %v48
  %v370 = vunpack.c.l.b16 %v49
  %v371 = vunpack.c.l.b16 %v50
  %v372 = vunpack.c.l.b16 %v51
  %v373 = vunpack.c.l.b16 %v52
  %v374 = vunpack.c.l.b16 %v53
  %v375 = vunpack.c.l.b16 %v54
  %v376 = vunpack.c.l.b16 %v55
  %v377 = vunpack.c.l.b16 %v56
  %v378 = vunpack.c.l.b16 %v57
  %v379 = vunpack.c.l.b16 %v58
  %v380 = vunpack.c.l.b16 %v59
  %v381 = vunpack.c.l.b16 %v60
  %v382 = vunpack.c.l.b16 %v61
  %v383 = vunpack.c.l.b16 %v62
  %v384 = vunpack.c.l.b16 %v63
  %v385 = vunpack.c.l.b16 %v64
  %v386 = vunpack.c.l.b16 %v65
  %v387 = vunpack.c.l.b16 %v66
  %v388 = vunpack.c.l.b16 %v67
  %v389 = vunpack.c.l.b16 %v68
  %v390 = vunpack.c.l.b16 %v69
  %v391 = vunpack.c.l.b16 %v70
  %v392 = vunpack.c.l.b16 %v71
  %v393 = vunpack.c.l.b16 %v72
  %v394 = vunpack.c.l.b16 %v73
  %v395 = vunpack.c.l.b16 %v74
  %v396 = vunpack.c.l.b16 %v75
  %v397 = vunpack.c.l.b16 %v76
  %v398 = vunpack.c.l.b16 %v77
  %v399 = vunpack.c.l.b16 %v78
  %v400 = vunpack.c.l.b16 %v79
  %v401 = vunpack.c.l.b16 %v80
  %v402 = vunpack.c.l.b16 %v81
  %v403 = vunpack.c.l.b16 %v82
  %v404 = vunpack.c.l.b16 %v83
  %v405 = vunpack.c.l.b16 %v84
  %v406 = vunpack.c.l.b16 %v85
  %v407 = vunpack.c.l.b16 %v86
  %v408 = vunpack.c.l.b16 %v87
  %v409 = vunpack.c.l.b16 %v88
  %v410 = vunpack.c.l.b16 %v89
  %v411 = vunpack.c.l.b16 %v90
  %v412 = vunpack.c.l.b16 %v91
  %v413 = vunpack.c.l.b16 %v92
  %v414 = vunpack.c.l.b16 %v93
  %v415 = vunpack.c.l.b16 %v94
  %v416 = vunpack.c.l.b16 %v95
  %v417 = vunpack.c.l.b16 %v96
  %v418 = vunpack.c.l.b16 %v97
  %v419 = vunpack.c.l.b16 %v98
  %v420 = vunpack.c.l.b16 %v99
  %v421 = vunpack.c.l.b16 %v100
  %v422 = vunpack.c.l.b16 %v101
  %v423 = vunpack.c.l.b16 %v102
  %v424 = vunpack.c.l.b16 %v103
  %v425 = vunpack.c.l.b16 %v104
  %v426 = vunpack.c.l.b16 %v105
  %v427 = vunpack.c.l.b16 %v106
  %v428 = vunpack.c.l.b16 %v107
  %v429 = vunpack.c.l.b16 %v108
  %v430 = vunpack.c.l.b16 %v109
  %v431 = vunpack.c.l.b16 %v110
  %v432 = vunpack.c.l.b16 %v111
  %v433 = vunpack.c.l.b16 %v112
  %v434 = vunpack.c.l.b16 %v113
  %v435 = vunpack.c.l.b16 %v114
  %v436 = vunpack.c.l.b16 %v115
  %v437 = vunpack.c.l.b16 %v116
  %v438 = vunpack.c.l.b16 %v117
  %v439 = vunpack.c.l.b16 %v118
  %v440 = vunpack.c.l.b16 %v119
  %v441 = vunpack.c.l.b16 %v120
  %v442 = vunpack.c.l.b16 %v121
  %v443 = vunpack.c.l.b16 %v122
  %v444 = vunpack.c.l.b16 %v123
  %v445 = vunpack.c.l.b16 %v124
  %v446 = vunpack.c.l.b16 %v125
  %v447 = vunpack.c.l.b16 %v126
  %v448 = vunpack.c.l.b16 %v127
  %v449 = vunpack.c.l.b16 %v128
  %v450 = vunpack.c.l.b16 %v129
  %v451 = vunpack.c.l.b16 %v130
  %v452 = vunpack.c.l.b16 %v131
  %v453 = vunpack.c.l.b16 %v132
  %v454 = vunpack.c.l.b16 %v133
  %v455 = vunpack.c.l.b16 %v134
  %v456 = vunpack.c.l.b16 %v135
  %v457 = vunpack.c.l.b16 %v136
  %v458 = vunpack.c.l.b16 %v137
  %v459 = vunpack.c.l.b16 %v138
  %v460 = vunpack.c.l.b16 %v139
  %v461 = vunpack.c.l.b16 %v140
  %v462 = vunpack.c.l.b16 %v141
  %v463 = vunpack.c.l.b16 %v142
  %v464 = vunpack.c.l.b16 %v143
  %v465 = vpack.c.b16 %v338, %v337
  %v466 = vpack.c.b16 %v340, %v339
  %v467 = vpack.c.b16 %v342, %v341
  %v468 = vpack.c.b16 %v344, %v343
  %v469 = vpack.c.b16 %v346, %v345
  %v470 = vpack.c.b16 %v348, %v347
  %v471 = vpack.c.b16 %v350, %v349
  %v472 = vpack.c.b16 %v352, %v351
  %v473 = vpack.c.b16 %v354, %v353
  %v474 = vpack.c.b16 %v356, %v355
  %v475 = vpack.c.b16 %v358, %v357
  %v476 = vpack.c.b16 %v360, %v359
  %v477 = vpack.c.b16 %v362, %v361
  %v478 = vpack.c.b16 %v364, %v363
  %v479 = vpack.c.b16 %v366, %v365
  %v480 = vpack.c.b16 %v368, %v367
  %v481 = vpack.c.b16 %v370, %v369
  %v482 = vpack.c.b16 %v372, %v371
  %v483 = vpack.c.b16 %v374, %v373
  %v484 = vpack.c.b16 %v376, %v375
  %v485 = vpack.c.b16 %v378, %v377
  %v486 = vpack.c.b16 %v380, %v379
  %v487 = vpack.c.b16 %v382, %v381
  %v488 = vpack.c.b16 %v384, %v383
  %v489 = vpack.c.b16 %v386, %v385
  %v490 = vpack.c.b16 %v388, %v387
  %v491 = vpack.c.b16 %v390, %v389
  %v492 = vpack.c.b16 %v392, %v391
  %v493 = vpack.c.b16 %v394, %v393
  %v494 = vpack.c.b16 %v396, %v395
  %v495 = vpack.c.b16 %v398, %v397
  %v496 = vpack.c.b16 %v400, %v399
  %v497 = vpack.c.b16 %v402, %v401
  %v498 = vpack.c.b16 %v404, %v403
  %v499 = vpack.c.b16 %v406, %v405
  %v500 = vpack.c.b16 %v408, %v407
  %v501 = vpack.c.b16 %v410, %v409
  %v502 = vpack.c.b16 %v412, %v411
  %v503 = vpack.c.b16 %v414, %v413
  %v504 = vpack.c.b16 %v416, %v415
  %v505 = vpack.c.b16 %v418, %v417
  %v506 = vpack.c.b16 %v420, %v419
  %v507 = vpack.c.b16 %v422, %v421
  %v508 = vpack.c.b16 %v424, %v423
  %v509 = vpack.c.b16 %v426, %v425
  %v510 = vpack.c.b16 %v428, %v427
  %v511 = vpack.c.b16 %v430, %v429
  %v512 = vpack.c.b16 %v432, %v431
  %v513 = vpack.c.b16 %v434, %v433
  %v514 = vpack.c.b16 %v436, %v435
  %v515 = vpack.c.b16 %v438, %v437
  %v516 = vpack.c.b16 %v440, %v439
  %v517 = vpack.c.b16 %v442, %v441
  %v518 = vpack.c.b16 %v444, %v443
  %v519 = vpack.c.b16 %v446, %v445
  %v520 = vpack.c.b16 %v448, %v447
  %v521 = vpack.c.b16 %v450, %v449
  %v522 = vpack.c.b16 %v452, %v451
  %v523 = vpack.c.b16 %v454, %v453
  %v524 = vpack.c.b16 %v456, %v455
  %v525 = vpack.c.b16 %v458, %v457
  %v526 = vpack.c.b16 %v460, %v459
  %v527 = vpack.c.b16 %v462, %v461
  %v528 = vpack.c.b16 %v464, %v463
  %593 = vmatprep.subr.bf16.mxu0 0
  %594 = vmatpush1.bf16.msra.mxu0 %v472
  %595 = vmatprep.subr.bf16.mxu0 0
  %596 = vmatpush1.bf16.msra.mxu0 %v471
  %597 = vmatprep.subr.bf16.mxu0 0
  %598 = vmatpush1.bf16.msra.mxu0 %v470
  %599 = vmatprep.subr.bf16.mxu0 0
  %600 = vmatpush1.bf16.msra.mxu0 %v469
  %601 = vmatprep.subr.bf16.mxu0 0
  %602 = vmatpush1.bf16.msra.mxu0 %v468
  %603 = vmatprep.subr.bf16.mxu0 0
  %604 = vmatpush1.bf16.msra.mxu0 %v467
  %605 = vmatprep.subr.bf16.mxu0 0
  %606 = vmatpush1.bf16.msra.mxu0 %v466
  %607 = vmatprep.subr.bf16.mxu0 0
  %608 = vmatpush1.bf16.msra.mxu0 %v465
  %609 = vmatprep.subr.bf16.mxu0 0
  %610 = vmatpush2.bf16.msra.mxu0 %v480
  %611 = vmatprep.subr.bf16.mxu0 0
  %612 = vmatpush2.bf16.msra.mxu0 %v479
  %613 = vmatprep.subr.bf16.mxu0 0
  %614 = vmatpush2.bf16.msra.mxu0 %v478
  %615 = vmatprep.subr.bf16.mxu0 0
  %616 = vmatpush2.bf16.msra.mxu0 %v477
  %617 = vmatprep.subr.bf16.mxu0 0
  %618 = vmatpush2.bf16.msra.mxu0 %v476
  %619 = vmatprep.subr.bf16.mxu0 0
  %620 = vmatpush2.bf16.msra.mxu0 %v475
  %621 = vmatprep.subr.bf16.mxu0 0
  %622 = vmatpush2.bf16.msra.mxu0 %v474
  %623 = vmatprep.subr.bf16.mxu0 0
  %624 = vmatpush2.bf16.msra.mxu0 %v473
  %625 = vmatprep.mubr.bf16.mxu0 %v189
  %626 = vmatmul.mubr.bf16.gmra.mxu0 %v175
  %v627 = vpop.f32.mrf.mxu0
  %v628 = vadd.f32 %v149, %v627
  %v629 = vpop.f32.mrf.mxu0
  %v630 = vpop.f32.mrf.mxu0
  %v631 = vpop.f32.mrf.mxu0
  %632 = vdwg.mxu0
  %633 = vmatprep.subr.bf16.mxu0 0
  %634 = vmatpush1.bf16.msra.mxu0 %v488
  %635 = vmatprep.subr.bf16.mxu0 0
  %636 = vmatpush1.bf16.msra.mxu0 %v487
  %637 = vmatprep.subr.bf16.mxu0 0
  %638 = vmatpush1.bf16.msra.mxu0 %v486
  %639 = vmatprep.subr.bf16.mxu0 0
  %640 = vmatpush1.bf16.msra.mxu0 %v485
  %641 = vmatprep.subr.bf16.mxu0 0
  %642 = vmatpush1.bf16.msra.mxu0 %v484
  %643 = vmatprep.subr.bf16.mxu0 0
  %644 = vmatpush1.bf16.msra.mxu0 %v483
  %645 = vmatprep.subr.bf16.mxu0 0
  %646 = vmatpush1.bf16.msra.mxu0 %v482
  %647 = vmatprep.subr.bf16.mxu0 0
  %648 = vmatpush1.bf16.msra.mxu0 %v481
  %649 = vmatprep.subr.bf16.mxu0 0
  %650 = vmatpush2.bf16.msra.mxu0 %v496
  %651 = vmatprep.subr.bf16.mxu0 0
  %652 = vmatpush2.bf16.msra.mxu0 %v495
  %653 = vmatprep.subr.bf16.mxu0 0
  %654 = vmatpush2.bf16.msra.mxu0 %v494
  %655 = vmatprep.subr.bf16.mxu0 0
  %656 = vmatpush2.bf16.msra.mxu0 %v493
  %657 = vmatprep.subr.bf16.mxu0 0
  %658 = vmatpush2.bf16.msra.mxu0 %v492
  %659 = vmatprep.subr.bf16.mxu0 0
  %660 = vmatpush2.bf16.msra.mxu0 %v491
  %661 = vmatprep.subr.bf16.mxu0 0
  %662 = vmatpush2.bf16.msra.mxu0 %v490
  %663 = vmatprep.subr.bf16.mxu0 0
  %664 = vmatpush2.bf16.msra.mxu0 %v489
  %665 = vmatprep.mubr.bf16.mxu0 %v199
  %666 = vmatmul.mubr.bf16.gmra.mxu0 %v197
  %v667 = vpop.f32.mrf.mxu0
  %v668 = vadd.f32 %v628, %v667
  %v669 = vpop.f32.mrf.mxu0
  %v670 = vpop.f32.mrf.mxu0
  %v671 = vpop.f32.mrf.mxu0
  %672 = vdwg.mxu0
  %673 = vmatprep.subr.bf16.mxu0 0
  %674 = vmatpush1.bf16.msra.mxu0 %v504
  %675 = vmatprep.subr.bf16.mxu0 0
  %676 = vmatpush1.bf16.msra.mxu0 %v503
  %677 = vmatprep.subr.bf16.mxu0 0
  %678 = vmatpush1.bf16.msra.mxu0 %v502
  %679 = vmatprep.subr.bf16.mxu0 0
  %680 = vmatpush1.bf16.msra.mxu0 %v501
  %681 = vmatprep.subr.bf16.mxu0 0
  %682 = vmatpush1.bf16.msra.mxu0 %v500
  %683 = vmatprep.subr.bf16.mxu0 0
  %684 = vmatpush1.bf16.msra.mxu0 %v499
  %685 = vmatprep.subr.bf16.mxu0 0
  %686 = vmatpush1.bf16.msra.mxu0 %v498
  %687 = vmatprep.subr.bf16.mxu0 0
  %688 = vmatpush1.bf16.msra.mxu0 %v497
  %689 = vmatprep.subr.bf16.mxu0 0
  %690 = vmatpush2.bf16.msra.mxu0 %v512
  %691 = vmatprep.subr.bf16.mxu0 0
  %692 = vmatpush2.bf16.msra.mxu0 %v511
  %693 = vmatprep.subr.bf16.mxu0 0
  %694 = vmatpush2.bf16.msra.mxu0 %v510
  %695 = vmatprep.subr.bf16.mxu0 0
  %696 = vmatpush2.bf16.msra.mxu0 %v509
  %697 = vmatprep.subr.bf16.mxu0 0
  %698 = vmatpush2.bf16.msra.mxu0 %v508
  %699 = vmatprep.subr.bf16.mxu0 0
  %700 = vmatpush2.bf16.msra.mxu0 %v507
  %701 = vmatprep.subr.bf16.mxu0 0
  %702 = vmatpush2.bf16.msra.mxu0 %v506
  %703 = vmatprep.subr.bf16.mxu0 0
  %704 = vmatpush2.bf16.msra.mxu0 %v505
  %705 = vmatprep.mubr.bf16.mxu0 %v196
  %706 = vmatmul.mubr.bf16.gmra.mxu0 %v182
  %v707 = vpop.f32.mrf.mxu0
  %v708 = vadd.f32 %v668, %v707
  %v709 = vpop.f32.mrf.mxu0
  %v710 = vpop.f32.mrf.mxu0
  %v711 = vpop.f32.mrf.mxu0
  %712 = vdwg.mxu0
  %713 = vmatprep.subr.bf16.mxu0 0
  %714 = vmatpush1.bf16.msra.mxu0 %v520
  %715 = vmatprep.subr.bf16.mxu0 0
  %716 = vmatpush1.bf16.msra.mxu0 %v519
  %717 = vmatprep.subr.bf16.mxu0 0
  %718 = vmatpush1.bf16.msra.mxu0 %v518
  %719 = vmatprep.subr.bf16.mxu0 0
  %720 = vmatpush1.bf16.msra.mxu0 %v517
  %721 = vmatprep.subr.bf16.mxu0 0
  %722 = vmatpush1.bf16.msra.mxu0 %v516
  %723 = vmatprep.subr.bf16.mxu0 0
  %724 = vmatpush1.bf16.msra.mxu0 %v515
  %725 = vmatprep.subr.bf16.mxu0 0
  %726 = vmatpush1.bf16.msra.mxu0 %v514
  %727 = vmatprep.subr.bf16.mxu0 0
  %728 = vmatpush1.bf16.msra.mxu0 %v513
  %729 = vmatprep.subr.bf16.mxu0 0
  %730 = vmatpush2.bf16.msra.mxu0 %v528
  %731 = vmatprep.subr.bf16.mxu0 0
  %732 = vmatpush2.bf16.msra.mxu0 %v527
  %733 = vmatprep.subr.bf16.mxu0 0
  %734 = vmatpush2.bf16.msra.mxu0 %v526
  %735 = vmatprep.subr.bf16.mxu0 0
  %736 = vmatpush2.bf16.msra.mxu0 %v525
  %737 = vmatprep.subr.bf16.mxu0 0
  %738 = vmatpush2.bf16.msra.mxu0 %v524
  %739 = vmatprep.subr.bf16.mxu0 0
  %740 = vmatpush2.bf16.msra.mxu0 %v523
  %741 = vmatprep.subr.bf16.mxu0 0
  %742 = vmatpush2.bf16.msra.mxu0 %v522
  %743 = vmatprep.subr.bf16.mxu0 0
  %744 = vmatpush2.bf16.msra.mxu0 %v521
  %745 = vmatprep.mubr.bf16.mxu0 %v200
  %746 = vmatmul.mubr.bf16.gmra.mxu0 %v198
  %v747 = vpop.f32.mrf.mxu0
  %v748 = vadd.f32 %v708, %v747
  %v749 = vpop.f32.mrf.mxu0
  %v750 = vpop.f32.mrf.mxu0
  %v751 = vpop.f32.mrf.mxu0
  %752 = vdwg.mxu0
  %753 = vst [vmem:[%s3] sm:$0x3] %v748
  // Predicated region
  $region14: #{a2c_forward.9} parent=0 // pred_check
    _
  $region15: #{a2c_forward.9} parent=0 // pred_check_branch
    %755 = sbr.rel (0) target = $region17
  $region16: #{a2c_forward.9} parent=0 // pred_region
    _
  $region17: #{a2c_forward.9} parent=0 // pred_fallthru
    _
  // Predicated region
  $region18: #{a2c_forward.9} parent=0 // pred_check
    _
  $region19: #{a2c_forward.9} parent=0 // pred_check_branch
    %757 = sbr.rel (0) target = $region21
  $region20: #{a2c_forward.9} parent=0 // pred_region
    _
  $region21: #{a2c_forward.9} parent=0 // pred_fallthru
    _

</llo_original>
